<compile_context>
chip_gen: v6e
topology: v6e:2x2x1
jax: 0.10.0
libtpu: 0.0.40
codegen_flags: <defaults>
</compile_context>

<pallas_src>
import functools

import jax
import jax.numpy as jnp
from jax.experimental import pallas as pl
from jax.experimental.pallas import tpu as pltpu

# ----------------------------------------------------------------------------
# Small-shape configuration (stand-ins for the full-size module hyperparams)
# ----------------------------------------------------------------------------
B = 2            # batch
CIN = 3          # input channels
IMG = 32         # input spatial (stand-in for 224)
C_STEM = 16      # conv1 output channels (stand-in for 64)
C_MID = 32       # layer1 stand-in channels
C_SHARED = 32    # shared-backbone output channels (stand-in for 1024)
SHARED_HW = IMG // 8          # conv1 /2, maxpool /2, downsample /2 -> 4
T_TOKENS = SHARED_HW * SHARED_HW
DIM = 32         # ViT dim (stand-in for 2048)
DEPTH = 2        # ViT depth (stand-in for 4)
HEADS = 4        # ViT heads (stand-in for 16)
DIM_HEAD = 8     # ViT dim_head (stand-in for 64)
MLP_DIM = 64
MGN_FEAT = 16    # per-feature MGN reduction dim (stand-in for 256)
MGN_DIM = 3 * MGN_FEAT
NUM_CLASSES = 8  # stand-in for 107

TILE_M = 256     # row tile for the fused matmul kernels
TILE_N = 512     # lane tile for the fused matmul kernels (multiple of 128 at full size)
LN_EPS = 1e-5
ACT_DTYPE = jnp.bfloat16           # inter-kernel activation storage dtype
VMEM_LIMIT = 64 * 1024 * 1024      # above the 32/16 MiB scoped defaults (v6e/v5e)


def _cparams(dims):
    return pltpu.CompilerParams(dimension_semantics=dims,
                                vmem_limit_bytes=VMEM_LIMIT)


def _apply_act(y, act):
    if act == "relu":
        return jnp.maximum(y, 0.0)
    if act == "gelu":
        # TODO(synk): torch nn.GELU defaults to exact erf; the tanh approximation is kept
        # here (portable Mosaic lowering) — small accepted numeric mismatch vs. PyTorch.
        return jax.nn.gelu(y)
    return y


def _layernorm_f32(x):
    xf = x.astype(jnp.float32)
    mu = jnp.mean(xf, axis=-1, keepdims=True)
    var = jnp.mean(jnp.square(xf - mu), axis=-1, keepdims=True)
    return (xf - mu) * jax.lax.rsqrt(var + LN_EPS)


# ----------------------------------------------------------------------------
# Fused matmul kernel:  [LN] -> bf16 matmul (f32 acc) -> +bias -> act -> [+residual]
# M and N tiled on parallel grid axes.
# ----------------------------------------------------------------------------
def _mm_kernel(*refs, act, normalize, residual):
    if residual:
        x_ref, w_ref, b_ref, r_ref, o_ref = refs
    else:
        x_ref, w_ref, b_ref, o_ref = refs
    x = x_ref[...]
    if normalize:   # LayerNorm whose gamma/beta were folded into w/b at param prep
        x = _layernorm_f32(x)
    y = jnp.dot(x.astype(jnp.bfloat16), w_ref[...],
                preferred_element_type=jnp.float32)
    y = y + b_ref[...].astype(jnp.float32)
    y = _apply_act(y, act)
    if residual:
        y = y + r_ref[...].astype(jnp.float32)
    o_ref[...] = y.astype(o_ref.dtype)


def pallas_mm(x, w, b, *, act=None, normalize=False, residual=None, pos_rows=None,
              tile_m=TILE_M, tile_n=TILE_N, out_dtype=ACT_DTYPE):
    """(M, K) @ (K, N) + b with fused LN / activation / residual; M and N tiled + parallel.

    If pos_rows is given, `residual` has pos_rows rows and is broadcast over the batch
    (positional-embedding add); requires tile_m | pos_rows.
    TODO(synk): add a K reduction grid axis + f32 VMEM accumulator (P3) for full-size K=2048.
    """
    M, K = x.shape
    N = w.shape[1]
    tm = min(tile_m, M)
    tn = min(tile_n, N)
    in_specs = [
        pl.BlockSpec((tm, K), lambda i, j: (i, 0)),
        pl.BlockSpec((K, tn), lambda i, j: (0, j)),
        pl.BlockSpec((1, tn), lambda i, j: (0, j)),
    ]
    args = [x, w, b.reshape(1, N)]
    if residual is not None:
        if pos_rows is not None:
            assert pos_rows % tm == 0
            period = pos_rows // tm
            in_specs.append(pl.BlockSpec((tm, tn), lambda i, j, p=period: (i % p, j)))
        else:
            in_specs.append(pl.BlockSpec((tm, tn), lambda i, j: (i, j)))
        args.append(residual)
    cost = pl.CostEstimate(
        flops=2 * M * K * N,
        transcendentals=M * N if act == "gelu" else 0,
        bytes_accessed=x.size * x.dtype.itemsize + w.size * w.dtype.itemsize + M * N * 2)
    return pl.pallas_call(
        functools.partial(_mm_kernel, act=act, normalize=normalize,
                          residual=residual is not None),
        out_shape=jax.ShapeDtypeStruct((M, N), out_dtype),
        grid=(pl.cdiv(M, tm), pl.cdiv(N, tn)),
        in_specs=in_specs,
        out_specs=pl.BlockSpec((tm, tn), lambda i, j: (i, j)),
        compiler_params=_cparams(("parallel", "parallel")),
        cost_estimate=cost,
    )(*args)


# ----------------------------------------------------------------------------
# Fused two-matmul kernel: [LN] -> mm1 -> act1 -> mm2 -> act2 -> [+residual]
# Used for stem stage1+stage2 and for the ViT MLP block (hidden never hits HBM).
# ----------------------------------------------------------------------------
def _mm2_kernel(*refs, act1, act2, normalize, residual):
    if residual:
        x_ref, w1_ref, b1_ref, w2_ref, b2_ref, r_ref, o_ref = refs
    else:
        x_ref, w1_ref, b1_ref, w2_ref, b2_ref, o_ref = refs
    x = x_ref[...]
    if normalize:
        x = _layernorm_f32(x)
    h = jnp.dot(x.astype(jnp.bfloat16), w1_ref[...],
                preferred_element_type=jnp.float32) + b1_ref[...].astype(jnp.float32)
    h = _apply_act(h, act1)
    y = jnp.dot(h.astype(jnp.bfloat16), w2_ref[...],
                preferred_element_type=jnp.float32) + b2_ref[...].astype(jnp.float32)
    y = _apply_act(y, act2)
    if residual:
        y = y + r_ref[...].astype(jnp.float32)
    o_ref[...] = y.astype(o_ref.dtype)


def pallas_mm2(x, w1, b1, w2, b2, *, act1=None, act2=None, normalize=False,
               residual=None, tile_m=TILE_M, out_dtype=ACT_DTYPE):
    # TODO(synk): at full size (K=2048, MLP hidden) tile the hidden/N dims and K-reduce with
    # an accumulator; whole-weight blocks are fine at the stand-in shapes.
    M, K = x.shape
    H = w1.shape[1]
    N = w2.shape[1]
    tm = min(tile_m, M)
    in_specs = [
        pl.BlockSpec((tm, K), lambda i: (i, 0)),
        pl.BlockSpec((K, H), lambda i: (0, 0)),
        pl.BlockSpec((1, H), lambda i: (0, 0)),
        pl.BlockSpec((H, N), lambda i: (0, 0)),
        pl.BlockSpec((1, N), lambda i: (0, 0)),
    ]
    args = [x, w1, b1.reshape(1, H), w2, b2.reshape(1, N)]
    if residual is not None:
        in_specs.append(pl.BlockSpec((tm, N), lambda i: (i, 0)))
        args.append(residual)
    cost = pl.CostEstimate(
        flops=2 * M * K * H + 2 * M * H * N,
        transcendentals=M * H if act1 == "gelu" else 0,
        bytes_accessed=x.size * x.dtype.itemsize + w1.size * 2 + w2.size * 2 + M * N * 2)
    return pl.pallas_call(
        functools.partial(_mm2_kernel, act1=act1, act2=act2, normalize=normalize,
                          residual=residual is not None),
        out_shape=jax.ShapeDtypeStruct((M, N), out_dtype),
        grid=(pl.cdiv(M, tm),),
        in_specs=in_specs,
        out_specs=pl.BlockSpec((tm, N), lambda i: (i, 0)),
        compiler_params=_cparams(("parallel",)),
        cost_estimate=cost,
    )(*args)


# ----------------------------------------------------------------------------
# Attention block: LN1 + qkv projection + multi-head attention + out-projection + residual,
# fused per image (no (B,T,3HD)/(B,T,HD) HBM round trips per layer).
# ----------------------------------------------------------------------------
def _attn_block_kernel(x_ref, qkv_w_ref, qkv_b_ref, pw_ref, pb_ref, o_ref,
                       *, heads, dh, scale):
    x = x_ref[0].astype(jnp.float32)                             # (T, D)
    xn = _layernorm_f32(x)                                       # LN1 affine folded into qkv_w/b
    qkv = jnp.dot(xn.astype(jnp.bfloat16), qkv_w_ref[...],
                  preferred_element_type=jnp.float32) + qkv_b_ref[...].astype(jnp.float32)
    hd = heads * dh
    outs = []
    # TODO(synk): at full size (heads=16, dh=64, T=784) replace this static head unroll with a
    # KV-tiled online-softmax (flash) loop gridded over head pairs to bound vreg/VMEM pressure.
    for h in range(heads):
        q = qkv[:, h * dh:(h + 1) * dh].astype(jnp.bfloat16)
        k = qkv[:, hd + h * dh:hd + (h + 1) * dh].astype(jnp.bfloat16)
        v = qkv[:, 2 * hd + h * dh:2 * hd + (h + 1) * dh].astype(jnp.bfloat16)
        s = jax.lax.dot_general(q, k, (((1,), (1,)), ((), ())),
                                preferred_element_type=jnp.float32) * scale
        s = s - jnp.max(s, axis=-1, keepdims=True)
        p = jnp.exp(s)
        p = p * pl.reciprocal(jnp.sum(p, axis=-1, keepdims=True), approx=True)
        outs.append(jnp.dot(p.astype(jnp.bfloat16), v,
                            preferred_element_type=jnp.float32))
    attn = jnp.concatenate(outs, axis=-1)                        # (T, heads*dh), 'b n (h d)'
    y = jnp.dot(attn.astype(jnp.bfloat16), pw_ref[...],
                preferred_element_type=jnp.float32) + pb_ref[...].astype(jnp.float32)
    o_ref[0] = (y + x).astype(o_ref.dtype)                       # attention residual


def pallas_attn_block(x3d, qkv_w, qkv_b, proj_w, proj_b):
    Bx, T, D = x3d.shape
    K3 = qkv_w.shape[1]
    HD = proj_w.shape[0]
    return pl.pallas_call(
        functools.partial(_attn_block_kernel, heads=HEADS, dh=DIM_HEAD,
                          scale=DIM_HEAD ** -0.5),
        out_shape=jax.ShapeDtypeStruct((Bx, T, D), ACT_DTYPE),
        grid=(Bx,),
        in_specs=[
            pl.BlockSpec((1, T, D), lambda bi: (bi, 0, 0)),
            pl.BlockSpec((D, K3), lambda bi: (0, 0)),
            pl.BlockSpec((1, K3), lambda bi: (0, 0)),
            pl.BlockSpec((HD, D), lambda bi: (0, 0)),
            pl.BlockSpec((1, D), lambda bi: (0, 0)),
        ],
        out_specs=pl.BlockSpec((1, T, D), lambda bi: (bi, 0, 0)),
        compiler_params=_cparams(("parallel",)),
    )(x3d, qkv_w, qkv_b.reshape(1, K3), proj_w, proj_b.reshape(1, D))


# ----------------------------------------------------------------------------
# Final LayerNorm + mean-over-tokens pool fused
# ----------------------------------------------------------------------------
def _ln_mean_kernel(x_ref, g_ref, b_ref, o_ref):
    x = x_ref[0].astype(jnp.float32)                             # (T, D)
    xn = _layernorm_f32(x) * g_ref[...] + b_ref[...]
    o_ref[0] = jnp.mean(xn, axis=0, keepdims=True)


def pallas_ln_mean(x3d, gamma, beta):
    Bx, T, D = x3d.shape
    out = pl.pallas_call(
        _ln_mean_kernel,
        out_shape=jax.ShapeDtypeStruct((Bx, 1, D), jnp.float32),
        grid=(Bx,),
        in_specs=[
            pl.BlockSpec((1, T, D), lambda bi: (bi, 0, 0)),
            pl.BlockSpec((1, D), lambda bi: (0, 0)),
            pl.BlockSpec((1, D), lambda bi: (0, 0)),
        ],
        out_specs=pl.BlockSpec((1, 1, D), lambda bi: (bi, 0, 0)),
        compiler_params=_cparams(("parallel",)),
    )(x3d, gamma.reshape(1, D), beta.reshape(1, D))
    return out.reshape(Bx, D)


# ----------------------------------------------------------------------------
# MaxPool(3,2,1) fused with the later ::2 downsample  ->  3x3 window max, stride 4, pad 1.
# Input is post-ReLU (nonnegative) so 0-padding is exact (no -inf padded HBM copy).
# ----------------------------------------------------------------------------
def _maxpool_kernel(x_ref, o_ref, *, k):
    # x_ref: (1, Ho, stride, Wo, stride, C) stride-groups; k <= stride so each pooling window
    # is the first k rows/cols of its group.
    x = x_ref[0][:, :k, :, :k, :].astype(jnp.float32)
    o_ref[0] = x.max(axis=3).max(axis=1).astype(o_ref.dtype)


def pallas_maxpool3x3_s4_p1(x):
    Bx, H, W, C = x.shape
    k, stride, pad = 3, 4, 1
    Ho = (H + 2 * pad - k) // stride + 1
    Wo = (W + 2 * pad - k) // stride + 1
    xp = jnp.pad(x, ((0, 0), (pad, pad), (pad, pad), (0, 0)))    # 0-pad (post-ReLU -> exact)
    xp = xp[:, :Ho * stride, :Wo * stride, :]                    # drop rows/cols past last window
    xg = xp.reshape(Bx, Ho, stride, Wo, stride, C)               # pure dim split, no data reorder
    return pl.pallas_call(
        functools.partial(_maxpool_kernel, k=k),
        out_shape=jax.ShapeDtypeStruct((Bx, Ho, Wo, C), x.dtype),
        grid=(Bx,),
        in_specs=[pl.BlockSpec((1, Ho, stride, Wo, stride, C),
                               lambda bi: (bi, 0, 0, 0, 0, 0))],
        out_specs=pl.BlockSpec((1, Ho, Wo, C), lambda bi: (bi, 0, 0, 0)),
        compiler_params=_cparams(("parallel",)),
    )(xg)


# ----------------------------------------------------------------------------
# MGN branch: global/top/bottom max pools + three reduction FCs, per image (parallel grid)
# ----------------------------------------------------------------------------
def _mgn_kernel(x_ref, w_ref, b_ref, o_ref):
    x = x_ref[0].astype(jnp.float32)                             # (H, W, C)
    H = x.shape[0]
    top = x[:H // 2].max(axis=1).max(axis=0)                     # (C,)
    bot = x[H // 2:].max(axis=1).max(axis=0)                     # (C,)
    pools = (jnp.maximum(top, bot), top, bot)                    # global max == max(top, bot)
    bias = b_ref[...]
    outs = []
    for i, pool in enumerate(pools):
        y = jnp.dot(pool[None, :].astype(jnp.bfloat16), w_ref[i],
                    preferred_element_type=jnp.float32)
        outs.append(jnp.maximum(y + bias[i:i + 1, :], 0.0))
    o_ref[0] = jnp.concatenate(outs, axis=0)                     # (3, F) lane-dense store


def pallas_mgn(feat, w3, b3):
    Bx, H, W, C = feat.shape
    F = w3.shape[-1]
    out = pl.pallas_call(
        _mgn_kernel,
        out_shape=jax.ShapeDtypeStruct((Bx, 3, F), jnp.float32),
        grid=(Bx,),
        in_specs=[
            pl.BlockSpec((1, H, W, C), lambda bi: (bi, 0, 0, 0)),
            pl.BlockSpec((3, C, F), lambda bi: (0, 0, 0)),
            pl.BlockSpec((3, F), lambda bi: (0, 0)),
        ],
        out_specs=pl.BlockSpec((1, 3, F), lambda bi: (bi, 0, 0)),
        compiler_params=_cparams(("parallel",)),
    )(feat, w3, b3)
    return out.reshape(Bx, 3 * F)


# ----------------------------------------------------------------------------
# JAX-level glue: im2col for the 7x7 stem conv
# ----------------------------------------------------------------------------
def _im2col_nhwc(x, kh, kw, stride, pad):
    # TODO(synk): im2col patch extraction stays at the XLA level (data-layout glue).
    Bx, H, W, C = x.shape
    xp = jnp.pad(x, ((0, 0), (pad, pad), (pad, pad), (0, 0)))
    Ho = (H + 2 * pad - kh) // stride + 1
    Wo = (W + 2 * pad - kw) // stride + 1
    cols = []
    for i in range(kh):
        for j in range(kw):
            cols.append(xp[:, i:i + stride * Ho:stride, j:j + stride * Wo:stride, :])
    patches = jnp.concatenate(cols, axis=-1)
    return patches.reshape(Bx * Ho * Wo, kh * kw * C), (Bx, Ho, Wo)


# ----------------------------------------------------------------------------
# Parameters (deterministic in-script init — synthetic weights, not a checkpoint).
# BN / LN affines are folded into the adjacent matmul weights; weights stored bf16.
# ----------------------------------------------------------------------------
def init_params():
    key = jax.random.PRNGKey(0)
    keys = iter(jax.random.split(key, 64))

    def dense(k_in, k_out, scale=0.02):
        w = jax.random.normal(next(keys), (k_in, k_out), jnp.float32) * scale
        b = jnp.zeros((k_out,), jnp.float32)
        return w, b

    def bn(c):
        gamma = jnp.ones((c,), jnp.float32)
        beta = jnp.zeros((c,), jnp.float32)
        mean = jax.random.normal(next(keys), (c,), jnp.float32) * 0.1
        var = jax.random.uniform(next(keys), (c,), jnp.float32, 0.5, 1.5)
        scale = gamma / jnp.sqrt(var + 1e-5)
        shift = beta - mean * scale
        return scale, shift

    def fold_bn(w, b, scale, shift):
        # (x @ w + b) * scale + shift == x @ (w * scale) + (b * scale + shift)
        return (w * scale[None, :]).astype(jnp.bfloat16), b * scale + shift

    def fold_ln(gamma, beta, w, b):
        # LN(x) @ w + b == norm(x) @ (gamma[:, None] * w) + (beta @ w + b)
        return (gamma[:, None] * w).astype(jnp.bfloat16), beta @ w + b

    p = {}
    # shared backbone (conv1 + bn1 folded; stand-in 1x1 stages with folded BN)
    w, b = dense(7 * 7 * CIN, C_STEM)
    p["conv1_w"], p["conv1_b"] = fold_bn(w, b, *bn(C_STEM))
    w, b = dense(C_STEM, C_MID)
    p["stage1_w"], p["stage1_b"] = fold_bn(w, b, *bn(C_MID))
    w, b = dense(C_MID, C_SHARED)
    p["stage2_w"], p["stage2_b"] = fold_bn(w, b, *bn(C_SHARED))
    # ViT branch
    w, b = dense(C_SHARED, DIM)
    p["patch_w"], p["patch_b"] = w.astype(jnp.bfloat16), b
    p["pos_emb"] = jax.random.normal(next(keys), (T_TOKENS, DIM), jnp.float32) * 0.02
    blocks = []
    for _ in range(DEPTH):
        blk = {}
        ln1_g, ln1_b = jnp.ones((DIM,), jnp.float32), jnp.zeros((DIM,), jnp.float32)
        ln2_g, ln2_b = jnp.ones((DIM,), jnp.float32), jnp.zeros((DIM,), jnp.float32)
        qw, qb = dense(DIM, 3 * HEADS * DIM_HEAD)
        blk["qkv_w"], blk["qkv_b"] = fold_ln(ln1_g, ln1_b, qw, qb)
        pw, pb = dense(HEADS * DIM_HEAD, DIM)
        blk["proj_w"], blk["proj_b"] = pw.astype(jnp.bfloat16), pb
        m1w, m1b = dense(DIM, MLP_DIM)
        blk["mlp1_w"], blk["mlp1_b"] = fold_ln(ln2_g, ln2_b, m1w, m1b)
        m2w, m2b = dense(MLP_DIM, DIM)
        blk["mlp2_w"], blk["mlp2_b"] = m2w.astype(jnp.bfloat16), m2b
        blocks.append(blk)
    p["blocks"] = blocks
    p["ln_f_g"] = jnp.ones((DIM,), jnp.float32)
    p["ln_f_b"] = jnp.zeros((DIM,), jnp.float32)
    # MGN branch reductions, stacked as (3, C, F) for the single fused kernel
    gw, gb = dense(C_SHARED, MGN_FEAT)
    tw, tb = dense(C_SHARED, MGN_FEAT)
    bw, bb = dense(C_SHARED, MGN_FEAT)
    p["mgn_w"] = jnp.stack([gw, tw, bw]).astype(jnp.bfloat16)
    p["mgn_b"] = jnp.stack([gb, tb, bb])
    # final classifier — its logits are discarded in the torch eval path (kept for fidelity)
    p["cls_w"], p["cls_b"] = dense(DIM + MGN_DIM, NUM_CLASSES)
    return p


# ----------------------------------------------------------------------------
# Model forward (eval mode)
# ----------------------------------------------------------------------------
def shared_backbone(x_nhwc, p):
    # conv1 7x7/s2/p3 (+ folded bn1 + relu) as an im2col matmul
    patches, (Bx, Ho, Wo) = _im2col_nhwc(x_nhwc, 7, 7, 2, 3)
    y = pallas_mm(patches, p["conv1_w"], p["conv1_b"], act="relu")
    y = y.reshape(Bx, Ho, Wo, C_STEM)
    # maxpool(3,2,1) fused with the later stride-2 downsample; the stand-in stages are
    # pointwise (1x1), so downsample-then-stage == stage-then-downsample at kept positions.
    y = pallas_maxpool3x3_s4_p1(y)
    Bx, H, W, _ = y.shape
    # TODO(synk): resnet50 layer1/layer2/layer3[0] bottleneck stacks are replaced by two
    # 1x1-conv(+folded BN)+ReLU stages with the same channel growth / downsampling factor.
    y2 = pallas_mm2(y.reshape(Bx * H * W, C_STEM),
                    p["stage1_w"], p["stage1_b"], p["stage2_w"], p["stage2_b"],
                    act1="relu", act2="relu")
    return y2.reshape(Bx, H, W, C_SHARED)


def vit_branch(feat, p):
    Bx, H, W, C = feat.shape
    T = H * W
    # patch embedding: matmul + bias + pos-emb (batch-broadcast residual) in the tiled mm path
    x2d = pallas_mm(feat.reshape(Bx * T, C), p["patch_w"], p["patch_b"],
                    residual=p["pos_emb"], pos_rows=T, tile_m=T)
    # TODO(synk): cls token / emb_dropout omitted (pool='mean', dropout=0.0, eval mode).
    for blk in p["blocks"]:
        x3d = pallas_attn_block(x2d.reshape(Bx, T, DIM),
                                blk["qkv_w"], blk["qkv_b"],
                                blk["proj_w"], blk["proj_b"])          # LN1+qkv+MHA+proj+skip
        x2d = pallas_mm2(x3d.reshape(Bx * T, DIM),
                         blk["mlp1_w"], blk["mlp1_b"],
                         blk["mlp2_w"], blk["mlp2_b"],
                         act1="gelu", normalize=True,
                         residual=x3d.reshape(Bx * T, DIM))            # LN2+mlp+skip
    return pallas_ln_mean(x2d.reshape(Bx, T, DIM), p["ln_f_g"], p["ln_f_b"])   # (B, DIM)


def mgn_branch(feat, p):
    # TODO(synk): full MGN (3 res_conv5 branches, 8 reduction heads, per-part fc logits)
    # collapsed to global + 2-part max-pool reductions; only mgn_outputs[0] is used in eval.
    predict = pallas_mgn(feat, p["mgn_w"], p["mgn_b"])
    return (predict,)


def combined_model_forward(x_nchw, p):
    x = jnp.transpose(x_nchw, (0, 2, 3, 1)).astype(ACT_DTYPE)     # NCHW -> NHWC, bf16 acts
    shared = shared_backbone(x, p)
    vit_emb = vit_branch(shared, p)              # eval: ViT returns embeddings only (f32)
    mgn_predict = mgn_branch(shared, p)[0]
    combined = jnp.concatenate([vit_emb, mgn_predict], axis=1)
    # The torch eval path computes classifier logits and discards them (dead code) -> skipped.
    return combined


# ----------------------------------------------------------------------------
if __name__ == "__main__":
    params = init_params()
    x = jax.random.normal(jax.random.PRNGKey(0), (B, CIN, IMG, IMG), jnp.float32)
    out = jax.jit(combined_model_forward)(x, params)
    jax.block_until_ready(out)
    assert out.shape == (B, DIM + MGN_DIM), out.shape
    assert out.dtype == jnp.float32
    assert bool(jnp.all(jnp.isfinite(out)))
    print("KERNEL_OK")
</pallas_src>

<mosaic_0001>
module attributes {stable_mosaic.version = 11 : i64} {
  func.func @_maxpool_kernel(%arg0: i32, %arg1: memref<1x4x4x4x4x16xbf16, #tpu.memory_space<vmem>>, %arg2: memref<1x4x4x16xbf16, #tpu.memory_space<vmem>>) attributes {dimension_semantics = [#tpu.dimension_semantics<parallel>], iteration_bounds = array<i64: 2>, scalar_prefetch = 0 : i64, scratch_operands = 0 : i64, tpu.core_type = #tpu.core_type<tc>, window_params = [{transform_indices = @transform_0, window_bounds = array<i64: 1, 4, 4, 4, 4, 16>}, {transform_indices = @transform_1, window_bounds = array<i64: 1, 4, 4, 16>}]} {
    %c0 = arith.constant 0 : index
    %c0_0 = arith.constant 0 : index
    %c0_1 = arith.constant 0 : index
    %c0_2 = arith.constant 0 : index
    %c0_3 = arith.constant 0 : index
    %c0_4 = arith.constant 0 : index
    %0 = vector.load %arg1[%c0, %c0_0, %c0_1, %c0_2, %c0_3, %c0_4] : memref<1x4x4x4x4x16xbf16, #tpu.memory_space<vmem>>, vector<1x4x4x4x4x16xbf16>
    %1 = vector.shape_cast %0 : vector<1x4x4x4x4x16xbf16> to vector<4x4x4x4x16xbf16>
    %2 = vector.extract_strided_slice %1 {offsets = [0, 0, 0, 0, 0], sizes = [4, 3, 4, 3, 16], strides = [1, 1, 1, 1, 1]} : vector<4x4x4x4x16xbf16> to vector<4x3x4x3x16xbf16>
    %3 = arith.extf %2 : vector<4x3x4x3x16xbf16> to vector<4x3x4x3x16xf32>
    %cst = arith.constant dense<0xFF800000> : vector<4x3x4x16xf32>
    %4 = vector.multi_reduction <maximumf>, %3, %cst [3] : vector<4x3x4x3x16xf32> to vector<4x3x4x16xf32>
    %cst_5 = arith.constant dense<0xFF800000> : vector<4x4x16xf32>
    %5 = vector.multi_reduction <maximumf>, %4, %cst_5 [1] : vector<4x3x4x16xf32> to vector<4x4x16xf32>
    %6 = arith.truncf %5 : vector<4x4x16xf32> to vector<4x4x16xbf16>
    %c0_6 = arith.constant 0 : index
    %c0_7 = arith.constant 0 : index
    %c0_8 = arith.constant 0 : index
    %c0_9 = arith.constant 0 : index
    %7 = vector.load %arg2[%c0_6, %c0_7, %c0_8, %c0_9] : memref<1x4x4x16xbf16, #tpu.memory_space<vmem>>, vector<1x4x4x16xbf16>
    %8 = vector.shape_cast %7 : vector<1x4x4x16xbf16> to vector<4x4x16xbf16>
    %9 = vector.shape_cast %6 : vector<4x4x16xbf16> to vector<1x4x4x16xbf16>
    tpu.vector_store %arg2[%c0_6, %c0_7, %c0_8, %c0_9], %9 {strides = array<i32>} : memref<1x4x4x16xbf16, #tpu.memory_space<vmem>>, vector<1x4x4x16xbf16>,
    return
  }
  func.func @transform_0(%arg0: i32) -> (i32, i32, i32, i32, i32, i32) {
    %c0_i32 = arith.constant 0 : i32
    %c0_i32_0 = arith.constant 0 : i32
    %c0_i32_1 = arith.constant 0 : i32
    %c0_i32_2 = arith.constant 0 : i32
    %c0_i32_3 = arith.constant 0 : i32
    %c0_i32_4 = arith.constant 0 : i32
    return %arg0, %c0_i32, %c0_i32_0, %c0_i32_1, %c0_i32_2, %c0_i32_3 : i32, i32, i32, i32, i32, i32
  }
  func.func @transform_1(%arg0: i32) -> (i32, i32, i32, i32) {
    %c0_i32 = arith.constant 0 : i32
    %c0_i32_0 = arith.constant 0 : i32
    %c0_i32_1 = arith.constant 0 : i32
    %c0_i32_2 = arith.constant 0 : i32
    return %arg0, %c0_i32, %c0_i32_0, %c0_i32_1 : i32, i32, i32, i32
  }
}

module attributes {stable_mosaic.version = 11 : i64} {
  func.func @_mm_kernel(%arg0: i32, %arg1: i32, %arg2: memref<256x147xbf16, #tpu.memory_space<vmem>>, %arg3: memref<147x16xbf16, #tpu.memory_space<vmem>>, %arg4: memref<1x16xf32, #tpu.memory_space<vmem>>, %arg5: memref<256x16xbf16, #tpu.memory_space<vmem>>) attributes {dimension_semantics = [#tpu.dimension_semantics<parallel>, #tpu.dimension_semantics<parallel>], iteration_bounds = array<i64: 2, 1>, scalar_prefetch = 0 : i64, scratch_operands = 0 : i64, tpu.core_type = #tpu.core_type<tc>, window_params = [{transform_indices = @transform_0, window_bounds = array<i64: 256, 147>}, {transform_indices = @transform_1, window_bounds = array<i64: 147, 16>}, {transform_indices = @transform_2, window_bounds = array<i64: 1, 16>}, {transform_indices = @transform_3, window_bounds = array<i64: 256, 16>}]} {
    %c0 = arith.constant 0 : index
    %c0_0 = arith.constant 0 : index
    %0 = vector.load %arg2[%c0, %c0_0] : memref<256x147xbf16, #tpu.memory_space<vmem>>, vector<256x147xbf16>
    %c0_1 = arith.constant 0 : index
    %c0_2 = arith.constant 0 : index
    %1 = vector.load %arg3[%c0_1, %c0_2] : memref<147x16xbf16, #tpu.memory_space<vmem>>, vector<147x16xbf16>
    %cst = arith.constant dense<0.000000e+00> : vector<256x16xf32>
    %2 = tpu.matmul %0, %1, %cst {dimension_numbers = #tpu.dot_dimension_numbers<[1], [0], [0], [1], [0, 0, 1, 1], [], []>} : vector<256x147xbf16>, vector<147x16xbf16>, vector<256x16xf32> -> vector<256x16xf32>
    %c0_3 = arith.constant 0 : index
    %c0_4 = arith.constant 0 : index
    %3 = vector.load %arg4[%c0_3, %c0_4] : memref<1x16xf32, #tpu.memory_space<vmem>>, vector<1x16xf32>
    %4 = vector.broadcast %3 : vector<1x16xf32> to vector<256x16xf32>
    %5 = arith.addf %2, %4 : vector<256x16xf32>
    %cst_5 = arith.constant 0.000000e+00 : f32
    %6 = vector.broadcast %cst_5 : f32 to vector<256x16xf32>
    %7 = arith.maximumf %5, %6 : vector<256x16xf32>
    %8 = arith.truncf %7 : vector<256x16xf32> to vector<256x16xbf16>
    %c0_6 = arith.constant 0 : index
    %c0_7 = arith.constant 0 : index
    %9 = vector.load %arg5[%c0_6, %c0_7] : memref<256x16xbf16, #tpu.memory_space<vmem>>, vector<256x16xbf16>
    tpu.vector_store %arg5[%c0_6, %c0_7], %8 {strides = array<i32>} : memref<256x16xbf16, #tpu.memory_space<vmem>>, vector<256x16xbf16>,
    return
  }
  func.func @transform_0(%arg0: i32, %arg1: i32) -> (i32, i32) {
    %c0_i32 = arith.constant 0 : i32
    %c0_i32_0 = arith.constant 0 : i32
    return %arg0, %c0_i32 : i32, i32
  }
  func.func @transform_1(%arg0: i32, %arg1: i32) -> (i32, i32) {
    %c0_i32 = arith.constant 0 : i32
    %c0_i32_0 = arith.constant 0 : i32
    return %c0_i32, %arg1 : i32, i32
  }
  func.func @transform_2(%arg0: i32, %arg1: i32) -> (i32, i32) {
    %c0_i32 = arith.constant 0 : i32
    %c0_i32_0 = arith.constant 0 : i32
    return %c0_i32, %arg1 : i32, i32
  }
  func.func @transform_3(%arg0: i32, %arg1: i32) -> (i32, i32) {
    %c0_i32 = arith.constant 0 : i32
    return %arg0, %arg1 : i32, i32
  }
}

module attributes {stable_mosaic.version = 11 : i64} {
  func.func @_mm2_kernel(%arg0: i32, %arg1: memref<32x16xbf16, #tpu.memory_space<vmem>>, %arg2: memref<16x32xbf16, #tpu.memory_space<vmem>>, %arg3: memref<1x32xf32, #tpu.memory_space<vmem>>, %arg4: memref<32x32xbf16, #tpu.memory_space<vmem>>, %arg5: memref<1x32xf32, #tpu.memory_space<vmem>>, %arg6: memref<32x32xbf16, #tpu.memory_space<vmem>>) attributes {dimension_semantics = [#tpu.dimension_semantics<parallel>], iteration_bounds = array<i64: 1>, scalar_prefetch = 0 : i64, scratch_operands = 0 : i64, tpu.core_type = #tpu.core_type<tc>, window_params = [{transform_indices = @transform_0, window_bounds = array<i64: 32, 16>}, {pipeline_mode = #tpu.pipeline_mode<synchronous>, transform_indices = @transform_1, window_bounds = array<i64: 16, 32>}, {pipeline_mode = #tpu.pipeline_mode<synchronous>, transform_indices = @transform_2, window_bounds = array<i64: 1, 32>}, {pipeline_mode = #tpu.pipeline_mode<synchronous>, transform_indices = @transform_3, window_bounds = array<i64: 32, 32>}, {pipeline_mode = #tpu.pipeline_mode<synchronous>, transform_indices = @transform_4, window_bounds = array<i64: 1, 32>}, {transform_indices = @transform_5, window_bounds = array<i64: 32, 32>}]} {
    %c0 = arith.constant 0 : index
    %c0_0 = arith.constant 0 : index
    %0 = vector.load %arg1[%c0, %c0_0] : memref<32x16xbf16, #tpu.memory_space<vmem>>, vector<32x16xbf16>
    %c0_1 = arith.constant 0 : index
    %c0_2 = arith.constant 0 : index
    %1 = vector.load %arg2[%c0_1, %c0_2] : memref<16x32xbf16, #tpu.memory_space<vmem>>, vector<16x32xbf16>
    %cst = arith.constant dense<0.000000e+00> : vector<32x32xf32>
    %2 = tpu.matmul %0, %1, %cst {dimension_numbers = #tpu.dot_dimension_numbers<[1], [0], [0], [1], [0, 0, 1, 1], [], []>} : vector<32x16xbf16>, vector<16x32xbf16>, vector<32x32xf32> -> vector<32x32xf32>
    %c0_3 = arith.constant 0 : index
    %c0_4 = arith.constant 0 : index
    %3 = vector.load %arg3[%c0_3, %c0_4] : memref<1x32xf32, #tpu.memory_space<vmem>>, vector<1x32xf32>
    %4 = vector.broadcast %3 : vector<1x32xf32> to vector<32x32xf32>
    %5 = arith.addf %2, %4 : vector<32x32xf32>
    %cst_5 = arith.constant 0.000000e+00 : f32
    %6 = vector.broadcast %cst_5 : f32 to vector<32x32xf32>
    %7 = arith.maximumf %5, %6 : vector<32x32xf32>
    %8 = arith.truncf %7 : vector<32x32xf32> to vector<32x32xbf16>
    %c0_6 = arith.constant 0 : index
    %c0_7 = arith.constant 0 : index
    %9 = vector.load %arg4[%c0_6, %c0_7] : memref<32x32xbf16, #tpu.memory_space<vmem>>, vector<32x32xbf16>
    %cst_8 = arith.constant dense<0.000000e+00> : vector<32x32xf32>
    %10 = tpu.matmul %8, %9, %cst_8 {dimension_numbers = #tpu.dot_dimension_numbers<[1], [0], [0], [1], [0, 0, 1, 1], [], []>} : vector<32x32xbf16>, vector<32x32xbf16>, vector<32x32xf32> -> vector<32x32xf32>
    %c0_9 = arith.constant 0 : index
    %c0_10 = arith.constant 0 : index
    %11 = vector.load %arg5[%c0_9, %c0_10] : memref<1x32xf32, #tpu.memory_space<vmem>>, vector<1x32xf32>
    %12 = vector.broadcast %11 : vector<1x32xf32> to vector<32x32xf32>
    %13 = arith.addf %10, %12 : vector<32x32xf32>
    %cst_11 = arith.constant 0.000000e+00 : f32
    %14 = vector.broadcast %cst_11 : f32 to vector<32x32xf32>
    %15 = arith.maximumf %13, %14 : vector<32x32xf32>
    %16 = arith.truncf %15 : vector<32x32xf32> to vector<32x32xbf16>
    %c0_12 = arith.constant 0 : index
    %c0_13 = arith.constant 0 : index
    %17 = vector.load %arg6[%c0_12, %c0_13] : memref<32x32xbf16, #tpu.memory_space<vmem>>, vector<32x32xbf16>
    tpu.vector_store %arg6[%c0_12, %c0_13], %16 {strides = array<i32>} : memref<32x32xbf16, #tpu.memory_space<vmem>>, vector<32x32xbf16>,
    return
  }
  func.func @transform_0(%arg0: i32) -> (i32, i32) {
    %c0_i32 = arith.constant 0 : i32
    %c0_i32_0 = arith.constant 0 : i32
    return %arg0, %c0_i32 : i32, i32
  }
  func.func @transform_1(%arg0: i32) -> (i32, i32) {
    %c0_i32 = arith.constant 0 : i32
    %c0_i32_0 = arith.constant 0 : i32
    %c0_i32_1 = arith.constant 0 : i32
    return %c0_i32, %c0_i32_0 : i32, i32
  }
  func.func @transform_2(%arg0: i32) -> (i32, i32) {
    %c0_i32 = arith.constant 0 : i32
    %c0_i32_0 = arith.constant 0 : i32
    %c0_i32_1 = arith.constant 0 : i32
    return %c0_i32, %c0_i32_0 : i32, i32
  }
  func.func @transform_3(%arg0: i32) -> (i32, i32) {
    %c0_i32 = arith.constant 0 : i32
    %c0_i32_0 = arith.constant 0 : i32
    %c0_i32_1 = arith.constant 0 : i32
    return %c0_i32, %c0_i32_0 : i32, i32
  }
  func.func @transform_4(%arg0: i32) -> (i32, i32) {
    %c0_i32 = arith.constant 0 : i32
    %c0_i32_0 = arith.constant 0 : i32
    %c0_i32_1 = arith.constant 0 : i32
    return %c0_i32, %c0_i32_0 : i32, i32
  }
  func.func @transform_5(%arg0: i32) -> (i32, i32) {
    %c0_i32 = arith.constant 0 : i32
    %c0_i32_0 = arith.constant 0 : i32
    return %arg0, %c0_i32 : i32, i32
  }
}

module attributes {stable_mosaic.version = 11 : i64} {
  func.func @_mm_kernel(%arg0: i32, %arg1: i32, %arg2: memref<16x32xbf16, #tpu.memory_space<vmem>>, %arg3: memref<32x32xbf16, #tpu.memory_space<vmem>>, %arg4: memref<1x32xf32, #tpu.memory_space<vmem>>, %arg5: memref<16x32xf32, #tpu.memory_space<vmem>>, %arg6: memref<16x32xbf16, #tpu.memory_space<vmem>>) attributes {dimension_semantics = [#tpu.dimension_semantics<parallel>, #tpu.dimension_semantics<parallel>], iteration_bounds = array<i64: 2, 1>, scalar_prefetch = 0 : i64, scratch_operands = 0 : i64, tpu.core_type = #tpu.core_type<tc>, window_params = [{transform_indices = @transform_0, window_bounds = array<i64: 16, 32>}, {transform_indices = @transform_1, window_bounds = array<i64: 32, 32>}, {transform_indices = @transform_2, window_bounds = array<i64: 1, 32>}, {transform_indices = @transform_3, window_bounds = array<i64: 16, 32>}, {transform_indices = @transform_4, window_bounds = array<i64: 16, 32>}]} {
    %c0 = arith.constant 0 : index
    %c0_0 = arith.constant 0 : index
    %0 = vector.load %arg2[%c0, %c0_0] : memref<16x32xbf16, #tpu.memory_space<vmem>>, vector<16x32xbf16>
    %c0_1 = arith.constant 0 : index
    %c0_2 = arith.constant 0 : index
    %1 = vector.load %arg3[%c0_1, %c0_2] : memref<32x32xbf16, #tpu.memory_space<vmem>>, vector<32x32xbf16>
    %cst = arith.constant dense<0.000000e+00> : vector<16x32xf32>
    %2 = tpu.matmul %0, %1, %cst {dimension_numbers = #tpu.dot_dimension_numbers<[1], [0], [0], [1], [0, 0, 1, 1], [], []>} : vector<16x32xbf16>, vector<32x32xbf16>, vector<16x32xf32> -> vector<16x32xf32>
    %c0_3 = arith.constant 0 : index
    %c0_4 = arith.constant 0 : index
    %3 = vector.load %arg4[%c0_3, %c0_4] : memref<1x32xf32, #tpu.memory_space<vmem>>, vector<1x32xf32>
    %4 = vector.broadcast %3 : vector<1x32xf32> to vector<16x32xf32>
    %5 = arith.addf %2, %4 : vector<16x32xf32>
    %c0_5 = arith.constant 0 : index
    %c0_6 = arith.constant 0 : index
    %6 = vector.load %arg5[%c0_5, %c0_6] : memref<16x32xf32, #tpu.memory_space<vmem>>, vector<16x32xf32>
    %7 = arith.addf %5, %6 : vector<16x32xf32>
    %8 = arith.truncf %7 : vector<16x32xf32> to vector<16x32xbf16>
    %c0_7 = arith.constant 0 : index
    %c0_8 = arith.constant 0 : index
    %9 = vector.load %arg6[%c0_7, %c0_8] : memref<16x32xbf16, #tpu.memory_space<vmem>>, vector<16x32xbf16>
    tpu.vector_store %arg6[%c0_7, %c0_8], %8 {strides = array<i32>} : memref<16x32xbf16, #tpu.memory_space<vmem>>, vector<16x32xbf16>,
    return
  }
  func.func @transform_0(%arg0: i32, %arg1: i32) -> (i32, i32) {
    %c0_i32 = arith.constant 0 : i32
    %c0_i32_0 = arith.constant 0 : i32
    return %arg0, %c0_i32 : i32, i32
  }
  func.func @transform_1(%arg0: i32, %arg1: i32) -> (i32, i32) {
    %c0_i32 = arith.constant 0 : i32
    %c0_i32_0 = arith.constant 0 : i32
    return %c0_i32, %arg1 : i32, i32
  }
  func.func @transform_2(%arg0: i32, %arg1: i32) -> (i32, i32) {
    %c0_i32 = arith.constant 0 : i32
    %c0_i32_0 = arith.constant 0 : i32
    return %c0_i32, %arg1 : i32, i32
  }
  func.func @transform_3(%arg0: i32, %arg1: i32) -> (i32, i32) {
    %c1_i32 = arith.constant 1 : i32
    %c0_i32 = arith.constant 0 : i32
    %0 = arith.cmpi eq, %c1_i32, %c0_i32 : i32
    %c1_i32_0 = arith.constant 1 : i32
    %1 = arith.select %0, %c1_i32_0, %c1_i32 : i32
    %2 = arith.remsi %arg0, %1 : i32
    %c0_i32_1 = arith.constant 0 : i32
    %3 = arith.cmpi ne, %2, %c0_i32_1 : i32
    %c0_i32_2 = arith.constant 0 : i32
    %4 = arith.cmpi slt, %2, %c0_i32_2 : i32
    %c0_i32_3 = arith.constant 0 : i32
    %5 = arith.cmpi slt, %1, %c0_i32_3 : i32
    %6 = arith.xori %4, %5 : i1
    %7 = arith.andi %6, %3 : i1
    %8 = arith.addi %2, %1 : i32
    %9 = arith.select %7, %8, %2 : i32
    %c0_i32_4 = arith.constant 0 : i32
    return %9, %arg1 : i32, i32
  }
  func.func @transform_4(%arg0: i32, %arg1: i32) -> (i32, i32) {
    %c0_i32 = arith.constant 0 : i32
    return %arg0, %arg1 : i32, i32
  }
}

module attributes {stable_mosaic.version = 11 : i64} {
  func.func @_mm2_kernel(%arg0: i32, %arg1: memref<32x32xbf16, #tpu.memory_space<vmem>>, %arg2: memref<32x64xbf16, #tpu.memory_space<vmem>>, %arg3: memref<1x64xf32, #tpu.memory_space<vmem>>, %arg4: memref<64x32xbf16, #tpu.memory_space<vmem>>, %arg5: memref<1x32xf32, #tpu.memory_space<vmem>>, %arg6: memref<32x32xbf16, #tpu.memory_space<vmem>>, %arg7: memref<32x32xbf16, #tpu.memory_space<vmem>>) attributes {dimension_semantics = [#tpu.dimension_semantics<parallel>], iteration_bounds = array<i64: 1>, scalar_prefetch = 0 : i64, scratch_operands = 0 : i64, tpu.core_type = #tpu.core_type<tc>, window_params = [{transform_indices = @transform_0, window_bounds = array<i64: 32, 32>}, {pipeline_mode = #tpu.pipeline_mode<synchronous>, transform_indices = @transform_1, window_bounds = array<i64: 32, 64>}, {pipeline_mode = #tpu.pipeline_mode<synchronous>, transform_indices = @transform_2, window_bounds = array<i64: 1, 64>}, {pipeline_mode = #tpu.pipeline_mode<synchronous>, transform_indices = @transform_3, window_bounds = array<i64: 64, 32>}, {pipeline_mode = #tpu.pipeline_mode<synchronous>, transform_indices = @transform_4, window_bounds = array<i64: 1, 32>}, {transform_indices = @transform_5, window_bounds = array<i64: 32, 32>}, {transform_indices = @transform_6, window_bounds = array<i64: 32, 32>}]} {
    %c0 = arith.constant 0 : index
    %c0_0 = arith.constant 0 : index
    %0 = vector.load %arg1[%c0, %c0_0] : memref<32x32xbf16, #tpu.memory_space<vmem>>, vector<32x32xbf16>
    %1 = arith.extf %0 : vector<32x32xbf16> to vector<32x32xf32>
    %cst = arith.constant dense<0.000000e+00> : vector<32xf32>
    %2 = vector.multi_reduction <add>, %1, %cst [1] : vector<32x32xf32> to vector<32xf32>
    %3 = vector.shape_cast %2 : vector<32xf32> to vector<32x1xf32>
    %cst_1 = arith.constant 3.200000e+01 : f32
    %4 = vector.broadcast %cst_1 : f32 to vector<32x1xf32>
    %5 = arith.divf %3, %4 : vector<32x1xf32>
    %6 = vector.broadcast %5 : vector<32x1xf32> to vector<32x32xf32>
    %7 = arith.subf %1, %6 : vector<32x32xf32>
    %8 = arith.mulf %7, %7 : vector<32x32xf32>
    %cst_2 = arith.constant dense<0.000000e+00> : vector<32xf32>
    %9 = vector.multi_reduction <add>, %8, %cst_2 [1] : vector<32x32xf32> to vector<32xf32>
    %10 = vector.shape_cast %9 : vector<32xf32> to vector<32x1xf32>
    %cst_3 = arith.constant 3.200000e+01 : f32
    %11 = vector.broadcast %cst_3 : f32 to vector<32x1xf32>
    %12 = arith.divf %10, %11 : vector<32x1xf32>
    %13 = vector.broadcast %5 : vector<32x1xf32> to vector<32x32xf32>
    %14 = arith.subf %1, %13 : vector<32x32xf32>
    %cst_4 = arith.constant 9.99999974E-6 : f32
    %15 = vector.broadcast %cst_4 : f32 to vector<32x1xf32>
    %16 = arith.addf %12, %15 : vector<32x1xf32>
    %17 = math.rsqrt %16 : vector<32x1xf32>
    %18 = vector.broadcast %17 : vector<32x1xf32> to vector<32x32xf32>
    %19 = arith.mulf %14, %18 : vector<32x32xf32>
    %20 = arith.truncf %19 : vector<32x32xf32> to vector<32x32xbf16>
    %c0_5 = arith.constant 0 : index
    %c0_6 = arith.constant 0 : index
    %21 = vector.load %arg2[%c0_5, %c0_6] : memref<32x64xbf16, #tpu.memory_space<vmem>>, vector<32x64xbf16>
    %cst_7 = arith.constant dense<0.000000e+00> : vector<32x64xf32>
    %22 = tpu.matmul %20, %21, %cst_7 {dimension_numbers = #tpu.dot_dimension_numbers<[1], [0], [0], [1], [0, 0, 1, 1], [], []>} : vector<32x32xbf16>, vector<32x64xbf16>, vector<32x64xf32> -> vector<32x64xf32>
    %c0_8 = arith.constant 0 : index
    %c0_9 = arith.constant 0 : index
    %23 = vector.load %arg3[%c0_8, %c0_9] : memref<1x64xf32, #tpu.memory_space<vmem>>, vector<1x64xf32>
    %24 = vector.broadcast %23 : vector<1x64xf32> to vector<32x64xf32>
    %25 = arith.addf %22, %24 : vector<32x64xf32>
    %26 = arith.mulf %25, %25 : vector<32x64xf32>
    %27 = arith.mulf %25, %26 : vector<32x64xf32>
    %cst_10 = arith.constant 4.471500e-02 : f32
    %28 = vector.broadcast %cst_10 : f32 to vector<32x64xf32>
    %29 = arith.mulf %28, %27 : vector<32x64xf32>
    %30 = arith.addf %25, %29 : vector<32x64xf32>
    %cst_11 = arith.constant 0.797884583 : f32
    %31 = vector.broadcast %cst_11 : f32 to vector<32x64xf32>
    %32 = arith.mulf %31, %30 : vector<32x64xf32>
    %33 = math.tanh %32 : vector<32x64xf32>
    %cst_12 = arith.constant 1.000000e+00 : f32
    %34 = vector.broadcast %cst_12 : f32 to vector<32x64xf32>
    %35 = arith.addf %34, %33 : vector<32x64xf32>
    %cst_13 = arith.constant 5.000000e-01 : f32
    %36 = vector.broadcast %cst_13 : f32 to vector<32x64xf32>
    %37 = arith.mulf %36, %35 : vector<32x64xf32>
    %38 = arith.mulf %25, %37 : vector<32x64xf32>
    %39 = arith.truncf %38 : vector<32x64xf32> to vector<32x64xbf16>
    %c0_14 = arith.constant 0 : index
    %c0_15 = arith.constant 0 : index
    %40 = vector.load %arg4[%c0_14, %c0_15] : memref<64x32xbf16, #tpu.memory_space<vmem>>, vector<64x32xbf16>
    %cst_16 = arith.constant dense<0.000000e+00> : vector<32x32xf32>
    %41 = tpu.matmul %39, %40, %cst_16 {dimension_numbers = #tpu.dot_dimension_numbers<[1], [0], [0], [1], [0, 0, 1, 1], [], []>} : vector<32x64xbf16>, vector<64x32xbf16>, vector<32x32xf32> -> vector<32x32xf32>
    %c0_17 = arith.constant 0 : index
    %c0_18 = arith.constant 0 : index
    %42 = vector.load %arg5[%c0_17, %c0_18] : memref<1x32xf32, #tpu.memory_space<vmem>>, vector<1x32xf32>
    %43 = vector.broadcast %42 : vector<1x32xf32> to vector<32x32xf32>
    %44 = arith.addf %41, %43 : vector<32x32xf32>
    %c0_19 = arith.constant 0 : index
    %c0_20 = arith.constant 0 : index
    %45 = vector.load %arg6[%c0_19, %c0_20] : memref<32x32xbf16, #tpu.memory_space<vmem>>, vector<32x32xbf16>
    %46 = arith.extf %45 : vector<32x32xbf16> to vector<32x32xf32>
    %47 = arith.addf %44, %46 : vector<32x32xf32>
    %48 = arith.truncf %47 : vector<32x32xf32> to vector<32x32xbf16>
    %c0_21 = arith.constant 0 : index
    %c0_22 = arith.constant 0 : index
    %49 = vector.load %arg7[%c0_21, %c0_22] : memref<32x32xbf16, #tpu.memory_space<vmem>>, vector<32x32xbf16>
    tpu.vector_store %arg7[%c0_21, %c0_22], %48 {strides = array<i32>} : memref<32x32xbf16, #tpu.memory_space<vmem>>, vector<32x32xbf16>,
    return
  }
  func.func @transform_0(%arg0: i32) -> (i32, i32) {
    %c0_i32 = arith.constant 0 : i32
    %c0_i32_0 = arith.constant 0 : i32
    return %arg0, %c0_i32 : i32, i32
  }
  func.func @transform_1(%arg0: i32) -> (i32, i32) {
    %c0_i32 = arith.constant 0 : i32
    %c0_i32_0 = arith.constant 0 : i32
    %c0_i32_1 = arith.constant 0 : i32
    return %c0_i32, %c0_i32_0 : i32, i32
  }
  func.func @transform_2(%arg0: i32) -> (i32, i32) {
    %c0_i32 = arith.constant 0 : i32
    %c0_i32_0 = arith.constant 0 : i32
    %c0_i32_1 = arith.constant 0 : i32
    return %c0_i32, %c0_i32_0 : i32, i32
  }
  func.func @transform_3(%arg0: i32) -> (i32, i32) {
    %c0_i32 = arith.constant 0 : i32
    %c0_i32_0 = arith.constant 0 : i32
    %c0_i32_1 = arith.constant 0 : i32
    return %c0_i32, %c0_i32_0 : i32, i32
  }
  func.func @transform_4(%arg0: i32) -> (i32, i32) {
    %c0_i32 = arith.constant 0 : i32
    %c0_i32_0 = arith.constant 0 : i32
    %c0_i32_1 = arith.constant 0 : i32
    return %c0_i32, %c0_i32_0 : i32, i32
  }
  func.func @transform_5(%arg0: i32) -> (i32, i32) {
    %c0_i32 = arith.constant 0 : i32
    %c0_i32_0 = arith.constant 0 : i32
    return %arg0, %c0_i32 : i32, i32
  }
  func.func @transform_6(%arg0: i32) -> (i32, i32) {
    %c0_i32 = arith.constant 0 : i32
    %c0_i32_0 = arith.constant 0 : i32
    return %arg0, %c0_i32 : i32, i32
  }
}

module attributes {stable_mosaic.version = 11 : i64} {
  func.func @_attn_block_kernel(%arg0: i32, %arg1: memref<1x16x32xbf16, #tpu.memory_space<vmem>>, %arg2: memref<32x96xbf16, #tpu.memory_space<vmem>>, %arg3: memref<1x96xf32, #tpu.memory_space<vmem>>, %arg4: memref<32x32xbf16, #tpu.memory_space<vmem>>, %arg5: memref<1x32xf32, #tpu.memory_space<vmem>>, %arg6: memref<1x16x32xbf16, #tpu.memory_space<vmem>>) attributes {dimension_semantics = [#tpu.dimension_semantics<parallel>], iteration_bounds = array<i64: 2>, scalar_prefetch = 0 : i64, scratch_operands = 0 : i64, tpu.core_type = #tpu.core_type<tc>, window_params = [{transform_indices = @transform_0, window_bounds = array<i64: 1, 16, 32>}, {pipeline_mode = #tpu.pipeline_mode<synchronous>, transform_indices = @transform_1, window_bounds = array<i64: 32, 96>}, {pipeline_mode = #tpu.pipeline_mode<synchronous>, transform_indices = @transform_2, window_bounds = array<i64: 1, 96>}, {pipeline_mode = #tpu.pipeline_mode<synchronous>, transform_indices = @transform_3, window_bounds = array<i64: 32, 32>}, {pipeline_mode = #tpu.pipeline_mode<synchronous>, transform_indices = @transform_4, window_bounds = array<i64: 1, 32>}, {transform_indices = @transform_5, window_bounds = array<i64: 1, 16, 32>}]} {
    %c0 = arith.constant 0 : index
    %c0_0 = arith.constant 0 : index
    %c0_1 = arith.constant 0 : index
    %0 = vector.load %arg1[%c0, %c0_0, %c0_1] : memref<1x16x32xbf16, #tpu.memory_space<vmem>>, vector<1x16x32xbf16>
    %1 = vector.shape_cast %0 : vector<1x16x32xbf16> to vector<16x32xbf16>
    %2 = arith.extf %1 : vector<16x32xbf16> to vector<16x32xf32>
    %cst = arith.constant dense<0.000000e+00> : vector<16xf32>
    %3 = vector.multi_reduction <add>, %2, %cst [1] : vector<16x32xf32> to vector<16xf32>
    %4 = vector.shape_cast %3 : vector<16xf32> to vector<16x1xf32>
    %cst_2 = arith.constant 3.200000e+01 : f32
    %5 = vector.broadcast %cst_2 : f32 to vector<16x1xf32>
    %6 = arith.divf %4, %5 : vector<16x1xf32>
    %7 = vector.broadcast %6 : vector<16x1xf32> to vector<16x32xf32>
    %8 = arith.subf %2, %7 : vector<16x32xf32>
    %9 = arith.mulf %8, %8 : vector<16x32xf32>
    %cst_3 = arith.constant dense<0.000000e+00> : vector<16xf32>
    %10 = vector.multi_reduction <add>, %9, %cst_3 [1] : vector<16x32xf32> to vector<16xf32>
    %11 = vector.shape_cast %10 : vector<16xf32> to vector<16x1xf32>
    %cst_4 = arith.constant 3.200000e+01 : f32
    %12 = vector.broadcast %cst_4 : f32 to vector<16x1xf32>
    %13 = arith.divf %11, %12 : vector<16x1xf32>
    %14 = vector.broadcast %6 : vector<16x1xf32> to vector<16x32xf32>
    %15 = arith.subf %2, %14 : vector<16x32xf32>
    %cst_5 = arith.constant 9.99999974E-6 : f32
    %16 = vector.broadcast %cst_5 : f32 to vector<16x1xf32>
    %17 = arith.addf %13, %16 : vector<16x1xf32>
    %18 = math.rsqrt %17 : vector<16x1xf32>
    %19 = vector.broadcast %18 : vector<16x1xf32> to vector<16x32xf32>
    %20 = arith.mulf %15, %19 : vector<16x32xf32>
    %21 = arith.truncf %20 : vector<16x32xf32> to vector<16x32xbf16>
    %c0_6 = arith.constant 0 : index
    %c0_7 = arith.constant 0 : index
    %22 = vector.load %arg2[%c0_6, %c0_7] : memref<32x96xbf16, #tpu.memory_space<vmem>>, vector<32x96xbf16>
    %cst_8 = arith.constant dense<0.000000e+00> : vector<16x96xf32>
    %23 = tpu.matmul %21, %22, %cst_8 {dimension_numbers = #tpu.dot_dimension_numbers<[1], [0], [0], [1], [0, 0, 1, 1], [], []>} : vector<16x32xbf16>, vector<32x96xbf16>, vector<16x96xf32> -> vector<16x96xf32>
    %c0_9 = arith.constant 0 : index
    %c0_10 = arith.constant 0 : index
    %24 = vector.load %arg3[%c0_9, %c0_10] : memref<1x96xf32, #tpu.memory_space<vmem>>, vector<1x96xf32>
    %25 = vector.broadcast %24 : vector<1x96xf32> to vector<16x96xf32>
    %26 = arith.addf %23, %25 : vector<16x96xf32>
    %27 = vector.extract_strided_slice %26 {offsets = [0, 0], sizes = [16, 8], strides = [1, 1]} : vector<16x96xf32> to vector<16x8xf32>
    %28 = arith.truncf %27 : vector<16x8xf32> to vector<16x8xbf16>
    %29 = vector.extract_strided_slice %26 {offsets = [0, 32], sizes = [16, 8], strides = [1, 1]} : vector<16x96xf32> to vector<16x8xf32>
    %30 = arith.truncf %29 : vector<16x8xf32> to vector<16x8xbf16>
    %31 = vector.extract_strided_slice %26 {offsets = [0, 64], sizes = [16, 8], strides = [1, 1]} : vector<16x96xf32> to vector<16x8xf32>
    %32 = arith.truncf %31 : vector<16x8xf32> to vector<16x8xbf16>
    %cst_11 = arith.constant dense<0.000000e+00> : vector<16x16xf32>
    %33 = tpu.matmul %28, %30, %cst_11 {dimension_numbers = #tpu.dot_dimension_numbers<[1], [1], [0], [0], [0, 0, 1, 0], [], []>} : vector<16x8xbf16>, vector<16x8xbf16>, vector<16x16xf32> -> vector<16x16xf32>
    %cst_12 = arith.constant 0.353553385 : f32
    %34 = vector.broadcast %cst_12 : f32 to vector<16x16xf32>
    %35 = arith.mulf %33, %34 : vector<16x16xf32>
    %cst_13 = arith.constant dense<0xFF800000> : vector<16xf32>
    %36 = vector.multi_reduction <maximumf>, %35, %cst_13 [1] : vector<16x16xf32> to vector<16xf32>
    %37 = vector.shape_cast %36 : vector<16xf32> to vector<16x1xf32>
    %38 = vector.broadcast %37 : vector<16x1xf32> to vector<16x16xf32>
    %39 = arith.subf %35, %38 : vector<16x16xf32>
    %40 = math.exp %39 : vector<16x16xf32>
    %cst_14 = arith.constant dense<0.000000e+00> : vector<16xf32>
    %41 = vector.multi_reduction <add>, %40, %cst_14 [1] : vector<16x16xf32> to vector<16xf32>
    %42 = vector.shape_cast %41 : vector<16xf32> to vector<16x1xf32>
    %43 = tpu.reciprocal %42 {approx = true} : vector<16x1xf32> -> vector<16x1xf32>
    %44 = vector.broadcast %43 : vector<16x1xf32> to vector<16x16xf32>
    %45 = arith.mulf %40, %44 : vector<16x16xf32>
    %46 = arith.truncf %45 : vector<16x16xf32> to vector<16x16xbf16>
    %cst_15 = arith.constant dense<0.000000e+00> : vector<16x8xf32>
    %47 = tpu.matmul %46, %32, %cst_15 {dimension_numbers = #tpu.dot_dimension_numbers<[1], [0], [0], [1], [0, 0, 1, 1], [], []>} : vector<16x16xbf16>, vector<16x8xbf16>, vector<16x8xf32> -> vector<16x8xf32>
    %48 = vector.extract_strided_slice %26 {offsets = [0, 8], sizes = [16, 8], strides = [1, 1]} : vector<16x96xf32> to vector<16x8xf32>
    %49 = arith.truncf %48 : vector<16x8xf32> to vector<16x8xbf16>
    %50 = vector.extract_strided_slice %26 {offsets = [0, 40], sizes = [16, 8], strides = [1, 1]} : vector<16x96xf32> to vector<16x8xf32>
    %51 = arith.truncf %50 : vector<16x8xf32> to vector<16x8xbf16>
    %52 = vector.extract_strided_slice %26 {offsets = [0, 72], sizes = [16, 8], strides = [1, 1]} : vector<16x96xf32> to vector<16x8xf32>
    %53 = arith.truncf %52 : vector<16x8xf32> to vector<16x8xbf16>
    %cst_16 = arith.constant dense<0.000000e+00> : vector<16x16xf32>
    %54 = tpu.matmul %49, %51, %cst_16 {dimension_numbers = #tpu.dot_dimension_numbers<[1], [1], [0], [0], [0, 0, 1, 0], [], []>} : vector<16x8xbf16>, vector<16x8xbf16>, vector<16x16xf32> -> vector<16x16xf32>
    %cst_17 = arith.constant 0.353553385 : f32
    %55 = vector.broadcast %cst_17 : f32 to vector<16x16xf32>
    %56 = arith.mulf %54, %55 : vector<16x16xf32>
    %cst_18 = arith.constant dense<0xFF800000> : vector<16xf32>
    %57 = vector.multi_reduction <maximumf>, %56, %cst_18 [1] : vector<16x16xf32> to vector<16xf32>
    %58 = vector.shape_cast %57 : vector<16xf32> to vector<16x1xf32>
    %59 = vector.broadcast %58 : vector<16x1xf32> to vector<16x16xf32>
    %60 = arith.subf %56, %59 : vector<16x16xf32>
    %61 = math.exp %60 : vector<16x16xf32>
    %cst_19 = arith.constant dense<0.000000e+00> : vector<16xf32>
    %62 = vector.multi_reduction <add>, %61, %cst_19 [1] : vector<16x16xf32> to vector<16xf32>
    %63 = vector.shape_cast %62 : vector<16xf32> to vector<16x1xf32>
    %64 = tpu.reciprocal %63 {approx = true} : vector<16x1xf32> -> vector<16x1xf32>
    %65 = vector.broadcast %64 : vector<16x1xf32> to vector<16x16xf32>
    %66 = arith.mulf %61, %65 : vector<16x16xf32>
    %67 = arith.truncf %66 : vector<16x16xf32> to vector<16x16xbf16>
    %cst_20 = arith.constant dense<0.000000e+00> : vector<16x8xf32>
    %68 = tpu.matmul %67, %53, %cst_20 {dimension_numbers = #tpu.dot_dimension_numbers<[1], [0], [0], [1], [0, 0, 1, 1], [], []>} : vector<16x16xbf16>, vector<16x8xbf16>, vector<16x8xf32> -> vector<16x8xf32>
    %69 = vector.extract_strided_slice %26 {offsets = [0, 16], sizes = [16, 8], strides = [1, 1]} : vector<16x96xf32> to vector<16x8xf32>
    %70 = arith.truncf %69 : vector<16x8xf32> to vector<16x8xbf16>
    %71 = vector.extract_strided_slice %26 {offsets = [0, 48], sizes = [16, 8], strides = [1, 1]} : vector<16x96xf32> to vector<16x8xf32>
    %72 = arith.truncf %71 : vector<16x8xf32> to vector<16x8xbf16>
    %73 = vector.extract_strided_slice %26 {offsets = [0, 80], sizes = [16, 8], strides = [1, 1]} : vector<16x96xf32> to vector<16x8xf32>
    %74 = arith.truncf %73 : vector<16x8xf32> to vector<16x8xbf16>
    %cst_21 = arith.constant dense<0.000000e+00> : vector<16x16xf32>
    %75 = tpu.matmul %70, %72, %cst_21 {dimension_numbers = #tpu.dot_dimension_numbers<[1], [1], [0], [0], [0, 0, 1, 0], [], []>} : vector<16x8xbf16>, vector<16x8xbf16>, vector<16x16xf32> -> vector<16x16xf32>
    %cst_22 = arith.constant 0.353553385 : f32
    %76 = vector.broadcast %cst_22 : f32 to vector<16x16xf32>
    %77 = arith.mulf %75, %76 : vector<16x16xf32>
    %cst_23 = arith.constant dense<0xFF800000> : vector<16xf32>
    %78 = vector.multi_reduction <maximumf>, %77, %cst_23 [1] : vector<16x16xf32> to vector<16xf32>
    %79 = vector.shape_cast %78 : vector<16xf32> to vector<16x1xf32>
    %80 = vector.broadcast %79 : vector<16x1xf32> to vector<16x16xf32>
    %81 = arith.subf %77, %80 : vector<16x16xf32>
    %82 = math.exp %81 : vector<16x16xf32>
    %cst_24 = arith.constant dense<0.000000e+00> : vector<16xf32>
    %83 = vector.multi_reduction <add>, %82, %cst_24 [1] : vector<16x16xf32> to vector<16xf32>
    %84 = vector.shape_cast %83 : vector<16xf32> to vector<16x1xf32>
    %85 = tpu.reciprocal %84 {approx = true} : vector<16x1xf32> -> vector<16x1xf32>
    %86 = vector.broadcast %85 : vector<16x1xf32> to vector<16x16xf32>
    %87 = arith.mulf %82, %86 : vector<16x16xf32>
    %88 = arith.truncf %87 : vector<16x16xf32> to vector<16x16xbf16>
    %cst_25 = arith.constant dense<0.000000e+00> : vector<16x8xf32>
    %89 = tpu.matmul %88, %74, %cst_25 {dimension_numbers = #tpu.dot_dimension_numbers<[1], [0], [0], [1], [0, 0, 1, 1], [], []>} : vector<16x16xbf16>, vector<16x8xbf16>, vector<16x8xf32> -> vector<16x8xf32>
    %90 = vector.extract_strided_slice %26 {offsets = [0, 24], sizes = [16, 8], strides = [1, 1]} : vector<16x96xf32> to vector<16x8xf32>
    %91 = arith.truncf %90 : vector<16x8xf32> to vector<16x8xbf16>
    %92 = vector.extract_strided_slice %26 {offsets = [0, 56], sizes = [16, 8], strides = [1, 1]} : vector<16x96xf32> to vector<16x8xf32>
    %93 = arith.truncf %92 : vector<16x8xf32> to vector<16x8xbf16>
    %94 = vector.extract_strided_slice %26 {offsets = [0, 88], sizes = [16, 8], strides = [1, 1]} : vector<16x96xf32> to vector<16x8xf32>
    %95 = arith.truncf %94 : vector<16x8xf32> to vector<16x8xbf16>
    %cst_26 = arith.constant dense<0.000000e+00> : vector<16x16xf32>
    %96 = tpu.matmul %91, %93, %cst_26 {dimension_numbers = #tpu.dot_dimension_numbers<[1], [1], [0], [0], [0, 0, 1, 0], [], []>} : vector<16x8xbf16>, vector<16x8xbf16>, vector<16x16xf32> -> vector<16x16xf32>
    %cst_27 = arith.constant 0.353553385 : f32
    %97 = vector.broadcast %cst_27 : f32 to vector<16x16xf32>
    %98 = arith.mulf %96, %97 : vector<16x16xf32>
    %cst_28 = arith.constant dense<0xFF800000> : vector<16xf32>
    %99 = vector.multi_reduction <maximumf>, %98, %cst_28 [1] : vector<16x16xf32> to vector<16xf32>
    %100 = vector.shape_cast %99 : vector<16xf32> to vector<16x1xf32>
    %101 = vector.broadcast %100 : vector<16x1xf32> to vector<16x16xf32>
    %102 = arith.subf %98, %101 : vector<16x16xf32>
    %103 = math.exp %102 : vector<16x16xf32>
    %cst_29 = arith.constant dense<0.000000e+00> : vector<16xf32>
    %104 = vector.multi_reduction <add>, %103, %cst_29 [1] : vector<16x16xf32> to vector<16xf32>
    %105 = vector.shape_cast %104 : vector<16xf32> to vector<16x1xf32>
    %106 = tpu.reciprocal %105 {approx = true} : vector<16x1xf32> -> vector<16x1xf32>
    %107 = vector.broadcast %106 : vector<16x1xf32> to vector<16x16xf32>
    %108 = arith.mulf %103, %107 : vector<16x16xf32>
    %109 = arith.truncf %108 : vector<16x16xf32> to vector<16x16xbf16>
    %cst_30 = arith.constant dense<0.000000e+00> : vector<16x8xf32>
    %110 = tpu.matmul %109, %95, %cst_30 {dimension_numbers = #tpu.dot_dimension_numbers<[1], [0], [0], [1], [0, 0, 1, 1], [], []>} : vector<16x16xbf16>, vector<16x8xbf16>, vector<16x8xf32> -> vector<16x8xf32>
    %111 = tpu.concatenate %47, %68, %89, %110 in 1 : vector<16x8xf32>, vector<16x8xf32>, vector<16x8xf32>, vector<16x8xf32> -> vector<16x32xf32>
    %112 = arith.truncf %111 : vector<16x32xf32> to vector<16x32xbf16>
    %c0_31 = arith.constant 0 : index
    %c0_32 = arith.constant 0 : index
    %113 = vector.load %arg4[%c0_31, %c0_32] : memref<32x32xbf16, #tpu.memory_space<vmem>>, vector<32x32xbf16>
    %cst_33 = arith.constant dense<0.000000e+00> : vector<16x32xf32>
    %114 = tpu.matmul %112, %113, %cst_33 {dimension_numbers = #tpu.dot_dimension_numbers<[1], [0], [0], [1], [0, 0, 1, 1], [], []>} : vector<16x32xbf16>, vector<32x32xbf16>, vector<16x32xf32> -> vector<16x32xf32>
    %c0_34 = arith.constant 0 : index
    %c0_35 = arith.constant 0 : index
    %115 = vector.load %arg5[%c0_34, %c0_35] : memref<1x32xf32, #tpu.memory_space<vmem>>, vector<1x32xf32>
    %116 = vector.broadcast %115 : vector<1x32xf32> to vector<16x32xf32>
    %117 = arith.addf %114, %116 : vector<16x32xf32>
    %118 = arith.addf %117, %2 : vector<16x32xf32>
    %119 = arith.truncf %118 : vector<16x32xf32> to vector<16x32xbf16>
    %c0_36 = arith.constant 0 : index
    %c0_37 = arith.constant 0 : index
    %c0_38 = arith.constant 0 : index
    %120 = vector.load %arg6[%c0_36, %c0_37, %c0_38] : memref<1x16x32xbf16, #tpu.memory_space<vmem>>, vector<1x16x32xbf16>
    %121 = vector.shape_cast %120 : vector<1x16x32xbf16> to vector<16x32xbf16>
    %122 = vector.shape_cast %119 : vector<16x32xbf16> to vector<1x16x32xbf16>
    tpu.vector_store %arg6[%c0_36, %c0_37, %c0_38], %122 {strides = array<i32>} : memref<1x16x32xbf16, #tpu.memory_space<vmem>>, vector<1x16x32xbf16>,
    return
  }
  func.func @transform_0(%arg0: i32) -> (i32, i32, i32) {
    %c0_i32 = arith.constant 0 : i32
    %c0_i32_0 = arith.constant 0 : i32
    %c0_i32_1 = arith.constant 0 : i32
    return %arg0, %c0_i32, %c0_i32_0 : i32, i32, i32
  }
  func.func @transform_1(%arg0: i32) -> (i32, i32) {
    %c0_i32 = arith.constant 0 : i32
    %c0_i32_0 = arith.constant 0 : i32
    %c0_i32_1 = arith.constant 0 : i32
    return %c0_i32, %c0_i32_0 : i32, i32
  }
  func.func @transform_2(%arg0: i32) -> (i32, i32) {
    %c0_i32 = arith.constant 0 : i32
    %c0_i32_0 = arith.constant 0 : i32
    %c0_i32_1 = arith.constant 0 : i32
    return %c0_i32, %c0_i32_0 : i32, i32
  }
  func.func @transform_3(%arg0: i32) -> (i32, i32) {
    %c0_i32 = arith.constant 0 : i32
    %c0_i32_0 = arith.constant 0 : i32
    %c0_i32_1 = arith.constant 0 : i32
    return %c0_i32, %c0_i32_0 : i32, i32
  }
  func.func @transform_4(%arg0: i32) -> (i32, i32) {
    %c0_i32 = arith.constant 0 : i32
    %c0_i32_0 = arith.constant 0 : i32
    %c0_i32_1 = arith.constant 0 : i32
    return %c0_i32, %c0_i32_0 : i32, i32
  }
  func.func @transform_5(%arg0: i32) -> (i32, i32, i32) {
    %c0_i32 = arith.constant 0 : i32
    %c0_i32_0 = arith.constant 0 : i32
    %c0_i32_1 = arith.constant 0 : i32
    return %arg0, %c0_i32, %c0_i32_0 : i32, i32, i32
  }
}

module attributes {stable_mosaic.version = 11 : i64} {
  func.func @_ln_mean_kernel(%arg0: i32, %arg1: memref<1x16x32xbf16, #tpu.memory_space<vmem>>, %arg2: memref<1x32xf32, #tpu.memory_space<vmem>>, %arg3: memref<1x32xf32, #tpu.memory_space<vmem>>, %arg4: memref<1x1x32xf32, #tpu.memory_space<vmem>>) attributes {dimension_semantics = [#tpu.dimension_semantics<parallel>], iteration_bounds = array<i64: 2>, scalar_prefetch = 0 : i64, scratch_operands = 0 : i64, tpu.core_type = #tpu.core_type<tc>, window_params = [{transform_indices = @transform_0, window_bounds = array<i64: 1, 16, 32>}, {pipeline_mode = #tpu.pipeline_mode<synchronous>, transform_indices = @transform_1, window_bounds = array<i64: 1, 32>}, {pipeline_mode = #tpu.pipeline_mode<synchronous>, transform_indices = @transform_2, window_bounds = array<i64: 1, 32>}, {transform_indices = @transform_3, window_bounds = array<i64: 1, 1, 32>}]} {
    %c0 = arith.constant 0 : index
    %c0_0 = arith.constant 0 : index
    %c0_1 = arith.constant 0 : index
    %0 = vector.load %arg1[%c0, %c0_0, %c0_1] : memref<1x16x32xbf16, #tpu.memory_space<vmem>>, vector<1x16x32xbf16>
    %1 = vector.shape_cast %0 : vector<1x16x32xbf16> to vector<16x32xbf16>
    %2 = arith.extf %1 : vector<16x32xbf16> to vector<16x32xf32>
    %cst = arith.constant dense<0.000000e+00> : vector<16xf32>
    %3 = vector.multi_reduction <add>, %2, %cst [1] : vector<16x32xf32> to vector<16xf32>
    %4 = vector.shape_cast %3 : vector<16xf32> to vector<16x1xf32>
    %cst_2 = arith.constant 3.200000e+01 : f32
    %5 = vector.broadcast %cst_2 : f32 to vector<16x1xf32>
    %6 = arith.divf %4, %5 : vector<16x1xf32>
    %7 = vector.broadcast %6 : vector<16x1xf32> to vector<16x32xf32>
    %8 = arith.subf %2, %7 : vector<16x32xf32>
    %9 = arith.mulf %8, %8 : vector<16x32xf32>
    %cst_3 = arith.constant dense<0.000000e+00> : vector<16xf32>
    %10 = vector.multi_reduction <add>, %9, %cst_3 [1] : vector<16x32xf32> to vector<16xf32>
    %11 = vector.shape_cast %10 : vector<16xf32> to vector<16x1xf32>
    %cst_4 = arith.constant 3.200000e+01 : f32
    %12 = vector.broadcast %cst_4 : f32 to vector<16x1xf32>
    %13 = arith.divf %11, %12 : vector<16x1xf32>
    %14 = vector.broadcast %6 : vector<16x1xf32> to vector<16x32xf32>
    %15 = arith.subf %2, %14 : vector<16x32xf32>
    %cst_5 = arith.constant 9.99999974E-6 : f32
    %16 = vector.broadcast %cst_5 : f32 to vector<16x1xf32>
    %17 = arith.addf %13, %16 : vector<16x1xf32>
    %18 = math.rsqrt %17 : vector<16x1xf32>
    %19 = vector.broadcast %18 : vector<16x1xf32> to vector<16x32xf32>
    %20 = arith.mulf %15, %19 : vector<16x32xf32>
    %c0_6 = arith.constant 0 : index
    %c0_7 = arith.constant 0 : index
    %21 = vector.load %arg2[%c0_6, %c0_7] : memref<1x32xf32, #tpu.memory_space<vmem>>, vector<1x32xf32>
    %22 = vector.broadcast %21 : vector<1x32xf32> to vector<16x32xf32>
    %23 = arith.mulf %20, %22 : vector<16x32xf32>
    %c0_8 = arith.constant 0 : index
    %c0_9 = arith.constant 0 : index
    %24 = vector.load %arg3[%c0_8, %c0_9] : memref<1x32xf32, #tpu.memory_space<vmem>>, vector<1x32xf32>
    %25 = vector.broadcast %24 : vector<1x32xf32> to vector<16x32xf32>
    %26 = arith.addf %23, %25 : vector<16x32xf32>
    %cst_10 = arith.constant dense<0.000000e+00> : vector<32xf32>
    %27 = vector.multi_reduction <add>, %26, %cst_10 [0] : vector<16x32xf32> to vector<32xf32>
    %28 = vector.shape_cast %27 : vector<32xf32> to vector<1x32xf32>
    %cst_11 = arith.constant 1.600000e+01 : f32
    %29 = vector.broadcast %cst_11 : f32 to vector<1x32xf32>
    %30 = arith.divf %28, %29 : vector<1x32xf32>
    %c0_12 = arith.constant 0 : index
    %c0_13 = arith.constant 0 : index
    %c0_14 = arith.constant 0 : index
    %31 = vector.load %arg4[%c0_12, %c0_13, %c0_14] : memref<1x1x32xf32, #tpu.memory_space<vmem>>, vector<1x1x32xf32>
    %32 = vector.shape_cast %31 : vector<1x1x32xf32> to vector<1x32xf32>
    %33 = vector.shape_cast %30 : vector<1x32xf32> to vector<1x1x32xf32>
    tpu.vector_store %arg4[%c0_12, %c0_13, %c0_14], %33 {strides = array<i32>} : memref<1x1x32xf32, #tpu.memory_space<vmem>>, vector<1x1x32xf32>,
    return
  }
  func.func @transform_0(%arg0: i32) -> (i32, i32, i32) {
    %c0_i32 = arith.constant 0 : i32
    %c0_i32_0 = arith.constant 0 : i32
    %c0_i32_1 = arith.constant 0 : i32
    return %arg0, %c0_i32, %c0_i32_0 : i32, i32, i32
  }
  func.func @transform_1(%arg0: i32) -> (i32, i32) {
    %c0_i32 = arith.constant 0 : i32
    %c0_i32_0 = arith.constant 0 : i32
    %c0_i32_1 = arith.constant 0 : i32
    return %c0_i32, %c0_i32_0 : i32, i32
  }
  func.func @transform_2(%arg0: i32) -> (i32, i32) {
    %c0_i32 = arith.constant 0 : i32
    %c0_i32_0 = arith.constant 0 : i32
    %c0_i32_1 = arith.constant 0 : i32
    return %c0_i32, %c0_i32_0 : i32, i32
  }
  func.func @transform_3(%arg0: i32) -> (i32, i32, i32) {
    %c0_i32 = arith.constant 0 : i32
    %c0_i32_0 = arith.constant 0 : i32
    %c0_i32_1 = arith.constant 0 : i32
    return %arg0, %c0_i32, %c0_i32_0 : i32, i32, i32
  }
}

module attributes {stable_mosaic.version = 11 : i64} {
  func.func @_mgn_kernel(%arg0: i32, %arg1: memref<1x4x4x32xbf16, #tpu.memory_space<vmem>>, %arg2: memref<3x32x16xbf16, #tpu.memory_space<vmem>>, %arg3: memref<3x16xf32, #tpu.memory_space<vmem>>, %arg4: memref<1x3x16xf32, #tpu.memory_space<vmem>>) attributes {dimension_semantics = [#tpu.dimension_semantics<parallel>], iteration_bounds = array<i64: 2>, scalar_prefetch = 0 : i64, scratch_operands = 0 : i64, tpu.core_type = #tpu.core_type<tc>, window_params = [{transform_indices = @transform_0, window_bounds = array<i64: 1, 4, 4, 32>}, {pipeline_mode = #tpu.pipeline_mode<synchronous>, transform_indices = @transform_1, window_bounds = array<i64: 3, 32, 16>}, {pipeline_mode = #tpu.pipeline_mode<synchronous>, transform_indices = @transform_2, window_bounds = array<i64: 3, 16>}, {transform_indices = @transform_3, window_bounds = array<i64: 1, 3, 16>}]} {
    %c0 = arith.constant 0 : index
    %c0_0 = arith.constant 0 : index
    %c0_1 = arith.constant 0 : index
    %c0_2 = arith.constant 0 : index
    %0 = vector.load %arg1[%c0, %c0_0, %c0_1, %c0_2] : memref<1x4x4x32xbf16, #tpu.memory_space<vmem>>, vector<1x4x4x32xbf16>
    %1 = vector.shape_cast %0 : vector<1x4x4x32xbf16> to vector<4x4x32xbf16>
    %2 = arith.extf %1 : vector<4x4x32xbf16> to vector<4x4x32xf32>
    %3 = vector.extract_strided_slice %2 {offsets = [0, 0, 0], sizes = [2, 4, 32], strides = [1, 1, 1]} : vector<4x4x32xf32> to vector<2x4x32xf32>
    %cst = arith.constant dense<0xFF800000> : vector<2x32xf32>
    %4 = vector.multi_reduction <maximumf>, %3, %cst [1] : vector<2x4x32xf32> to vector<2x32xf32>
    %cst_3 = arith.constant dense<0xFF800000> : vector<32xf32>
    %5 = vector.multi_reduction <maximumf>, %4, %cst_3 [0] : vector<2x32xf32> to vector<32xf32>
    %6 = vector.extract_strided_slice %2 {offsets = [2, 0, 0], sizes = [2, 4, 32], strides = [1, 1, 1]} : vector<4x4x32xf32> to vector<2x4x32xf32>
    %cst_4 = arith.constant dense<0xFF800000> : vector<2x32xf32>
    %7 = vector.multi_reduction <maximumf>, %6, %cst_4 [1] : vector<2x4x32xf32> to vector<2x32xf32>
    %cst_5 = arith.constant dense<0xFF800000> : vector<32xf32>
    %8 = vector.multi_reduction <maximumf>, %7, %cst_5 [0] : vector<2x32xf32> to vector<32xf32>
    %9 = arith.maximumf %5, %8 : vector<32xf32>
    %c0_6 = arith.constant 0 : index
    %c0_7 = arith.constant 0 : index
    %10 = vector.load %arg3[%c0_6, %c0_7] : memref<3x16xf32, #tpu.memory_space<vmem>>, vector<3x16xf32>
    %11 = vector.shape_cast %9 : vector<32xf32> to vector<1x32xf32>
    %12 = arith.truncf %11 : vector<1x32xf32> to vector<1x32xbf16>
    %c0_8 = arith.constant 0 : index
    %c0_9 = arith.constant 0 : index
    %c0_10 = arith.constant 0 : index
    %13 = vector.load %arg2[%c0_8, %c0_9, %c0_10] : memref<3x32x16xbf16, #tpu.memory_space<vmem>>, vector<1x32x16xbf16>
    %14 = vector.shape_cast %13 : vector<1x32x16xbf16> to vector<32x16xbf16>
    %cst_11 = arith.constant dense<0.000000e+00> : vector<1x16xf32>
    %15 = tpu.matmul %12, %14, %cst_11 {dimension_numbers = #tpu.dot_dimension_numbers<[1], [0], [0], [1], [0, 0, 1, 1], [], []>} : vector<1x32xbf16>, vector<32x16xbf16>, vector<1x16xf32> -> vector<1x16xf32>
    %16 = vector.extract_strided_slice %10 {offsets = [0, 0], sizes = [1, 16], strides = [1, 1]} : vector<3x16xf32> to vector<1x16xf32>
    %17 = arith.addf %15, %16 : vector<1x16xf32>
    %cst_12 = arith.constant 0.000000e+00 : f32
    %18 = vector.broadcast %cst_12 : f32 to vector<1x16xf32>
    %19 = arith.maximumf %17, %18 : vector<1x16xf32>
    %20 = vector.shape_cast %5 : vector<32xf32> to vector<1x32xf32>
    %21 = arith.truncf %20 : vector<1x32xf32> to vector<1x32xbf16>
    %c1 = arith.constant 1 : index
    %c0_13 = arith.constant 0 : index
    %c0_14 = arith.constant 0 : index
    %22 = vector.load %arg2[%c1, %c0_13, %c0_14] : memref<3x32x16xbf16, #tpu.memory_space<vmem>>, vector<1x32x16xbf16>
    %23 = vector.shape_cast %22 : vector<1x32x16xbf16> to vector<32x16xbf16>
    %cst_15 = arith.constant dense<0.000000e+00> : vector<1x16xf32>
    %24 = tpu.matmul %21, %23, %cst_15 {dimension_numbers = #tpu.dot_dimension_numbers<[1], [0], [0], [1], [0, 0, 1, 1], [], []>} : vector<1x32xbf16>, vector<32x16xbf16>, vector<1x16xf32> -> vector<1x16xf32>
    %25 = vector.extract_strided_slice %10 {offsets = [1, 0], sizes = [1, 16], strides = [1, 1]} : vector<3x16xf32> to vector<1x16xf32>
    %26 = arith.addf %24, %25 : vector<1x16xf32>
    %cst_16 = arith.constant 0.000000e+00 : f32
    %27 = vector.broadcast %cst_16 : f32 to vector<1x16xf32>
    %28 = arith.maximumf %26, %27 : vector<1x16xf32>
    %29 = vector.shape_cast %8 : vector<32xf32> to vector<1x32xf32>
    %30 = arith.truncf %29 : vector<1x32xf32> to vector<1x32xbf16>
    %c2 = arith.constant 2 : index
    %c0_17 = arith.constant 0 : index
    %c0_18 = arith.constant 0 : index
    %31 = vector.load %arg2[%c2, %c0_17, %c0_18] : memref<3x32x16xbf16, #tpu.memory_space<vmem>>, vector<1x32x16xbf16>
    %32 = vector.shape_cast %31 : vector<1x32x16xbf16> to vector<32x16xbf16>
    %cst_19 = arith.constant dense<0.000000e+00> : vector<1x16xf32>
    %33 = tpu.matmul %30, %32, %cst_19 {dimension_numbers = #tpu.dot_dimension_numbers<[1], [0], [0], [1], [0, 0, 1, 1], [], []>} : vector<1x32xbf16>, vector<32x16xbf16>, vector<1x16xf32> -> vector<1x16xf32>
    %34 = vector.extract_strided_slice %10 {offsets = [2, 0], sizes = [1, 16], strides = [1, 1]} : vector<3x16xf32> to vector<1x16xf32>
    %35 = arith.addf %33, %34 : vector<1x16xf32>
    %cst_20 = arith.constant 0.000000e+00 : f32
    %36 = vector.broadcast %cst_20 : f32 to vector<1x16xf32>
    %37 = arith.maximumf %35, %36 : vector<1x16xf32>
    %38 = tpu.concatenate %19, %28, %37 in 0 : vector<1x16xf32>, vector<1x16xf32>, vector<1x16xf32> -> vector<3x16xf32>
    %c0_21 = arith.constant 0 : index
    %c0_22 = arith.constant 0 : index
    %c0_23 = arith.constant 0 : index
    %39 = vector.load %arg4[%c0_21, %c0_22, %c0_23] : memref<1x3x16xf32, #tpu.memory_space<vmem>>, vector<1x3x16xf32>
    %40 = vector.shape_cast %39 : vector<1x3x16xf32> to vector<3x16xf32>
    %41 = vector.shape_cast %38 : vector<3x16xf32> to vector<1x3x16xf32>
    tpu.vector_store %arg4[%c0_21, %c0_22, %c0_23], %41 {strides = array<i32>} : memref<1x3x16xf32, #tpu.memory_space<vmem>>, vector<1x3x16xf32>,
    return
  }
  func.func @transform_0(%arg0: i32) -> (i32, i32, i32, i32) {
    %c0_i32 = arith.constant 0 : i32
    %c0_i32_0 = arith.constant 0 : i32
    %c0_i32_1 = arith.constant 0 : i32
    %c0_i32_2 = arith.constant 0 : i32
    return %arg0, %c0_i32, %c0_i32_0, %c0_i32_1 : i32, i32, i32, i32
  }
  func.func @transform_1(%arg0: i32) -> (i32, i32, i32) {
    %c0_i32 = arith.constant 0 : i32
    %c0_i32_0 = arith.constant 0 : i32
    %c0_i32_1 = arith.constant 0 : i32
    %c0_i32_2 = arith.constant 0 : i32
    return %c0_i32, %c0_i32_0, %c0_i32_1 : i32, i32, i32
  }
  func.func @transform_2(%arg0: i32) -> (i32, i32) {
    %c0_i32 = arith.constant 0 : i32
    %c0_i32_0 = arith.constant 0 : i32
    %c0_i32_1 = arith.constant 0 : i32
    return %c0_i32, %c0_i32_0 : i32, i32
  }
  func.func @transform_3(%arg0: i32) -> (i32, i32, i32) {
    %c0_i32 = arith.constant 0 : i32
    %c0_i32_0 = arith.constant 0 : i32
    %c0_i32_1 = arith.constant 0 : i32
    return %arg0, %c0_i32, %c0_i32_0 : i32, i32, i32
  }
}

</mosaic_0001>

<llo_original>
// kernel: combined_model_forward.12
$region0: #{combined_model_forward.12}
  #allocation0 [shape = 'u32[]', space=smem, size = 0x4, offset = 0x4, fixed_abs, tag = 'smem constant byte address 0x4 - core index']
  #allocation1 [shape = 'u32[144,128]{1,0:T(1,128)}', space=vmem, size = 0x12000, scoped, tag = 'internal scratch']
  %s0 = inlined_call_operand.vmem [shape: bf16[32,16], index: 0, kind: input, shape index: {}]
  %s1 = inlined_call_operand.vmem [shape: bf16[16,32], index: 1, kind: input, shape index: {}]
  %s2 = inlined_call_operand.vmem [shape: f32[1,32], index: 2, kind: input, shape index: {}]
  %s3 = inlined_call_operand.vmem [shape: bf16[32,32], index: 3, kind: input, shape index: {}]
  %s4 = inlined_call_operand.vmem [shape: f32[1,32], index: 4, kind: input, shape index: {}]
  %s5 = inlined_call_operand.vmem [shape: bf16[32,32], index: 5, kind: output, shape index: {}]
  %s6 = sld [smem:[#allocation0]]
  $region30: #{combined_model_forward.12} parent=0
    _
  %s8 = ssub.s32 1, %s6
  %s9 = scalar_select 0, %s8, %s6
  // Predicated region
  $region2: #{combined_model_forward.12} parent=0 // pred_check
    _
  $region3: #{combined_model_forward.12} parent=0 // pred_check_branch
    %11 = sbr.rel (0) target = $region5
  $region4: #{combined_model_forward.12} parent=0 // pred_region
    _
  $region5: #{combined_model_forward.12} parent=0 // pred_fallthru
    _
  // Predicated region
  $region6: #{combined_model_forward.12} parent=0 // pred_check
    _
  $region7: #{combined_model_forward.12} parent=0 // pred_check_branch
    %13 = sbr.rel (0) target = $region9
  $region8: #{combined_model_forward.12} parent=0 // pred_region
    _
  $region9: #{combined_model_forward.12} parent=0 // pred_fallthru
    _
  // Predicated region
  $region10: #{combined_model_forward.12} parent=0 // pred_check
    _
  $region11: #{combined_model_forward.12} parent=0 // pred_check_branch
    %15 = sbr.rel (0) target = $region13
  $region12: #{combined_model_forward.12} parent=0 // pred_region
    _
  $region13: #{combined_model_forward.12} parent=0 // pred_fallthru
    _
  // Predicated region
  $region14: #{combined_model_forward.12} parent=0 // pred_check
    _
  $region15: #{combined_model_forward.12} parent=0 // pred_check_branch
    %17 = sbr.rel (0) target = $region17
  $region16: #{combined_model_forward.12} parent=0 // pred_region
    _
  $region17: #{combined_model_forward.12} parent=0 // pred_fallthru
    _
  // Predicated region
  $region18: #{combined_model_forward.12} parent=0 // pred_check
    _
  $region19: #{combined_model_forward.12} parent=0 // pred_check_branch
    %19 = sbr.rel (0) target = $region21
  $region20: #{combined_model_forward.12} parent=0 // pred_region
    _
  $region21: #{combined_model_forward.12} parent=0 // pred_fallthru
    _
  %v21 = vld [vmem:[%s0] sm:$0xf]
  %v22 = vld [vmem:[%s0 + $0x4] sm:$0xf]
  %v23 = vld [vmem:[%s0 + $0x8] sm:$0xf]
  %v24 = vld [vmem:[%s0 + $0xc] sm:$0xf]
  %v25 = vld [vmem:[%s1] sm:$0xf]
  %v26 = vld [vmem:[%s1 + $0x4] sm:$0xf]
  %v27 = vld [vmem:[%s2] sm:$0x1]
  %v29 = vlaneseq
  %v30 = vshrl.u32 %v29, 7
  %v31 = vsub.s32 0, %v30
  %v32 = vrot.slane %v27, %v31
  %v38 = vunpack.c.l.b16 %v21
  %v39 = vunpack.c.l.b16 %v22
  %v40 = vunpack.c.l.b16 %v23
  %v41 = vunpack.c.l.b16 %v24
  %v42 = vpack.c.b16 %v39, %v38
  %v43 = vpack.c.b16 %v41, %v40
  %v46 = vunpack.c.l.b16 %v25
  %v47 = vunpack.c.l.b16 %v26
  %v48 = vpack.c.b16 %v47, %v46
  %vm50 = vcmask 130048
  %v52 = vsel %vm50, %v42, 0
  %v55 = vsel %vm50, %v43, 0
  %57 = vmatprep.subr.bf16.mxu0 0
  %58 = vmatpush1.bf16.msra.mxu0 0
  %59 = vmatprep.subr.bf16.mxu0 0
  %60 = vmatpush1.bf16.msra.mxu0 0
  %61 = vmatprep.subr.bf16.mxu0 0
  %62 = vmatpush1.bf16.msra.mxu0 0
  %63 = vmatprep.subr.bf16.mxu0 0
  %64 = vmatpush1.bf16.msra.mxu0 0
  %65 = vmatprep.subr.bf16.mxu0 0
  %66 = vmatpush1.bf16.msra.mxu0 0
  %67 = vmatprep.subr.bf16.mxu0 0
  %68 = vmatpush1.bf16.msra.mxu0 0
  %69 = vmatprep.subr.bf16.mxu0 0
  %70 = vmatpush1.bf16.msra.mxu0 0
  %71 = vmatprep.subr.bf16.mxu0 0
  %72 = vmatpush1.bf16.msra.mxu0 %v48
  %73 = vmatprep.subr.bf16.mxu0 0
  %74 = vmatpush2.bf16.msra.mxu0 0
  %75 = vmatprep.subr.bf16.mxu0 0
  %76 = vmatpush2.bf16.msra.mxu0 0
  %77 = vmatprep.subr.bf16.mxu0 0
  %78 = vmatpush2.bf16.msra.mxu0 0
  %79 = vmatprep.subr.bf16.mxu0 0
  %80 = vmatpush2.bf16.msra.mxu0 0
  %81 = vmatprep.subr.bf16.mxu0 0
  %82 = vmatpush2.bf16.msra.mxu0 0
  %83 = vmatprep.subr.bf16.mxu0 0
  %84 = vmatpush2.bf16.msra.mxu0 0
  %85 = vmatprep.subr.bf16.mxu0 0
  %86 = vmatpush2.bf16.msra.mxu0 0
  %87 = vmatprep.subr.bf16.mxu0 0
  %88 = vmatpush2.bf16.msra.mxu0 0
  %89 = vmatprep.mubr.bf16.mxu0 0
  %90 = vmatmul.mubr.bf16.gmra.mxu0 %v52
  %v91 = vpop.f32.mrf.mxu0
  %v92 = vadd.f32 %v32, %v91
  %v93 = vpop.f32.mrf.mxu0
  %v94 = vpop.f32.mrf.mxu0
  %v95 = vadd.f32 %v32, %v94
  %v96 = vpop.f32.mrf.mxu0
  %97 = vmatprep.mubr.bf16.mxu0 0
  %98 = vmatmul.mubr.bf16.gmra.mxu0 %v55
  %v99 = vpop.f32.mrf.mxu0
  %v100 = vadd.f32 %v32, %v99
  %v101 = vpop.f32.mrf.mxu0
  %v102 = vpop.f32.mrf.mxu0
  %v103 = vadd.f32 %v32, %v102
  %v104 = vpop.f32.mrf.mxu0
  %105 = vdwg.mxu0
  %v106 = vmax.f32 %v92, 0.0
  %v107 = vmax.f32 %v95, 0.0
  %v108 = vmax.f32 %v100, 0.0
  %v109 = vmax.f32 %v103, 0.0
  %v110 = vpack.c.bf16 %v107, %v106
  %v111 = vpack.c.bf16 %v109, %v108
  %v112 = vld [vmem:[%s3] sm:$0xf]
  %v113 = vld [vmem:[%s3 + $0x4] sm:$0xf]
  %v114 = vld [vmem:[%s3 + $0x8] sm:$0xf]
  %v115 = vld [vmem:[%s3 + $0xc] sm:$0xf]
  %v116 = vld [vmem:[%s4] sm:$0x1]
  %v118 = vlaneseq
  %v119 = vshrl.u32 %v118, 7
  %v120 = vsub.s32 0, %v119
  %v121 = vrot.slane %v116, %v120
  %v127 = vunpack.c.l.b16 %v112
  %v128 = vunpack.c.l.b16 %v113
  %v129 = vunpack.c.l.b16 %v114
  %v130 = vunpack.c.l.b16 %v115
  %v131 = vpack.c.b16 %v128, %v127
  %v132 = vpack.c.b16 %v130, %v129
  %vm135 = vcmask 261120
  %v137 = vsel %vm135, %v110, 0
  %v140 = vsel %vm135, %v111, 0
  %142 = vmatprep.subr.bf16.mxu0 0
  %143 = vmatpush1.bf16.msra.mxu0 0
  %144 = vmatprep.subr.bf16.mxu0 0
  %145 = vmatpush1.bf16.msra.mxu0 0
  %146 = vmatprep.subr.bf16.mxu0 0
  %147 = vmatpush1.bf16.msra.mxu0 0
  %148 = vmatprep.subr.bf16.mxu0 0
  %149 = vmatpush1.bf16.msra.mxu0 0
  %150 = vmatprep.subr.bf16.mxu0 0
  %151 = vmatpush1.bf16.msra.mxu0 0
  %152 = vmatprep.subr.bf16.mxu0 0
  %153 = vmatpush1.bf16.msra.mxu0 0
  %154 = vmatprep.subr.bf16.mxu0 0
  %155 = vmatpush1.bf16.msra.mxu0 %v132
  %156 = vmatprep.subr.bf16.mxu0 0
  %157 = vmatpush1.bf16.msra.mxu0 %v131
  %158 = vmatprep.subr.bf16.mxu0 0
  %159 = vmatpush2.bf16.msra.mxu0 0
  %160 = vmatprep.subr.bf16.mxu0 0
  %161 = vmatpush2.bf16.msra.mxu0 0
  %162 = vmatprep.subr.bf16.mxu0 0
  %163 = vmatpush2.bf16.msra.mxu0 0
  %164 = vmatprep.subr.bf16.mxu0 0
  %165 = vmatpush2.bf16.msra.mxu0 0
  %166 = vmatprep.subr.bf16.mxu0 0
  %167 = vmatpush2.bf16.msra.mxu0 0
  %168 = vmatprep.subr.bf16.mxu0 0
  %169 = vmatpush2.bf16.msra.mxu0 0
  %170 = vmatprep.subr.bf16.mxu0 0
  %171 = vmatpush2.bf16.msra.mxu0 0
  %172 = vmatprep.subr.bf16.mxu0 0
  %173 = vmatpush2.bf16.msra.mxu0 0
  %174 = vmatprep.mubr.bf16.mxu0 0
  %175 = vmatmul.mubr.bf16.gmra.mxu0 %v137
  %v176 = vpop.f32.mrf.mxu0
  %v177 = vadd.f32 %v121, %v176
  %v178 = vpop.f32.mrf.mxu0
  %v179 = vpop.f32.mrf.mxu0
  %v180 = vadd.f32 %v121, %v179
  %v181 = vpop.f32.mrf.mxu0
  %182 = vmatprep.mubr.bf16.mxu0 0
  %183 = vmatmul.mubr.bf16.gmra.mxu0 %v140
  %v184 = vpop.f32.mrf.mxu0
  %v185 = vadd.f32 %v121, %v184
  %v186 = vpop.f32.mrf.mxu0
  %v187 = vpop.f32.mrf.mxu0
  %v188 = vadd.f32 %v121, %v187
  %v189 = vpop.f32.mrf.mxu0
  %190 = vdwg.mxu0
  %v191 = vmax.f32 %v177, 0.0
  %v192 = vmax.f32 %v180, 0.0
  %v193 = vmax.f32 %v185, 0.0
  %v194 = vmax.f32 %v188, 0.0
  %v195 = vpack.c.bf16 %v192, %v191
  %v196 = vpack.c.bf16 %v194, %v193
  %v199 = vunpack.c.l.b16 %v195
  %v200 = vunpack.c.h.b16 %v195
  %v201 = vunpack.c.l.b16 %v196
  %v202 = vunpack.c.h.b16 %v196
  %v203 = vpack.c.b16 %v199, %v199
  %v204 = vpack.c.b16 %v200, %v200
  %v205 = vpack.c.b16 %v201, %v201
  %v206 = vpack.c.b16 %v202, %v202
  %vm211 = vcmask 257024
  %212 = vst.msk [vmem:[%s5] sm:$0xf] %vm211, %v203
  %213 = vst.msk [vmem:[%s5 + $0x4] sm:$0xf] %vm211, %v204
  %214 = vst.msk [vmem:[%s5 + $0x8] sm:$0xf] %vm211, %v205
  %215 = vst.msk [vmem:[%s5 + $0xc] sm:$0xf] %vm211, %v206
  // Predicated region
  $region22: #{combined_model_forward.12} parent=0 // pred_check
    _
  $region23: #{combined_model_forward.12} parent=0 // pred_check_branch
    %217 = sbr.rel (0) target = $region25
  $region24: #{combined_model_forward.12} parent=0 // pred_region
    _
  $region25: #{combined_model_forward.12} parent=0 // pred_fallthru
    _
  // Predicated region
  $region26: #{combined_model_forward.12} parent=0 // pred_check
    _
  $region27: #{combined_model_forward.12} parent=0 // pred_check_branch
    %219 = sbr.rel (0) target = $region29
  $region28: #{combined_model_forward.12} parent=0 // pred_region
    _
  $region29: #{combined_model_forward.12} parent=0 // pred_fallthru
    _

// kernel: combined_model_forward.13
$region0: #{combined_model_forward.13}
  #allocation0 [shape = 'u32[]', space=smem, size = 0x4, offset = 0x4, fixed_abs, tag = 'smem constant byte address 0x4 - core index']
  #allocation1 [shape = 'u32[144,128]{1,0:T(1,128)}', space=vmem, size = 0x12000, scoped, tag = 'internal scratch']
  %s0 = inlined_call_operand.vmem [shape: bf16[32,32], index: 0, kind: input, shape index: {}]
  %s1 = inlined_call_operand.vmem [shape: bf16[32,32], index: 1, kind: input, shape index: {}]
  %s2 = inlined_call_operand.vmem [shape: f32[1,32], index: 2, kind: input, shape index: {}]
  %s3 = inlined_call_operand.vmem [shape: f32[16,32], index: 3, kind: input, shape index: {}]
  %s4 = inlined_call_operand.vmem [shape: bf16[32,32], index: 4, kind: output, shape index: {}]
  %s5 = sld [smem:[#allocation0]]
  $region49: #{combined_model_forward.13} parent=0
    _
  %s7 = ssub.s32 1, %s5
  %s8 = scalar_select 0, %s7, %s5
  loop: start=0, step=1, limit=4
  $region2: #{combined_model_forward.13} parent=0 // loop_pre_header
    _
  $region3: #{combined_model_forward.13} parent=0 // loop_header
    %s10 = sphi 0, %s14
    %p11 = scmp.ge.s32.totalorder %s10, 4
    %s17 = sphi 0, %s29
    %s18 = sphi 0, %s25
    %s19 = sphi 0, %s17
    %s20 = sphi 0, %s18
    %s21 = sphi 0, %s19
    %s22 = sphi 0, %s20
    %s32 = sphi 0, %s34
    %s35 = sphi 0, %s32
    %s36 = sphi 0, %s35
    %s52 = sphi 0, %s36
    %s58 = sphi 0, %s60
    %s61 = sphi 0, %s58
    %s62 = sphi 0, %s61
    %s78 = sphi 0, %s62
    %s84 = sphi 0, %s86
    %s87 = sphi 0, %s84
    %s88 = sphi 0, %s87
    %s104 = sphi 0, %s88
    %s110 = sphi 0, %s112
    %s113 = sphi 0, %s110
    %s114 = sphi 0, %s113
    %s130 = sphi 0, %s114
    %s138 = sphi 0, %s140
    %s141 = sphi 0, %s138
    %s142 = sphi 0, %s141
    %s158 = sphi 0, %s142
  $region4: #{combined_model_forward.13} parent=0 // loop_header_branch
    %13 = sbr.rel (%p11) target = $region8
  $region5: #{combined_model_forward.13} parent=0 // loop_body
    %s15 = ssub.s32 %s10, 1
    %s16 = ssub.s32 %s10, 2
    %s23 = sadd.s32 1, %s18
    %p24 = scmp.ge.s32.totalorder %s23, 1
    %s25 = scalar_select %p24, 0, %s23
    %s26 = sadd.s32 1, %s17
    %s27 = scalar_select %p24, %s26, %s17
    %p28 = scmp.ge.s32.totalorder %s27, 2
    %s29 = scalar_select %p28, 0, %s27
    %s30 = ssub.s32 %s17, %s29
    %p31 = scmp.eq.s32.totalorder %s30, 0
    %s33 = sadd.s32 %s32, 1
    %s34 = scalar_select %p31, %s32, %s33
    %p37 = pneg %p31
    %p38 = scmp.eq.s32.totalorder %s10, 1
    %p39 = por %p37, %p38
    %p40 = scmp.ne.s32.totalorder %s32, %s35
    %p41 = scmp.eq.s32.totalorder %s10, 0
    %p42 = por %p40, %p41
    %p43 = scmp.ne.s32.totalorder %s32, %s35
    %p44 = scmp.eq.s32.totalorder %s15, 1
    %p45 = por %p43, %p44
    %p46 = scmp.ne.s32.totalorder %s35, %s36
    %p47 = scmp.eq.s32.totalorder %s15, 0
    %p48 = por %p46, %p47
    %p49 = scmp.ne.s32.totalorder %s35, %s36
    %p50 = scmp.eq.s32.totalorder %s16, 1
    %p51 = por %p49, %p50
    %p53 = scmp.ne.s32.totalorder %s36, %s52
    %p54 = scmp.eq.s32.totalorder %s16, 0
    %p55 = por %p53, %p54
    %s56 = ssub.s32 %s18, %s25
    %p57 = scmp.eq.s32.totalorder %s56, 0
    %s59 = sadd.s32 %s58, 1
    %s60 = scalar_select %p57, %s58, %s59
    %p63 = pneg %p57
    %p64 = scmp.eq.s32.totalorder %s10, 1
    %p65 = por %p63, %p64
    %p66 = scmp.ne.s32.totalorder %s58, %s61
    %p67 = scmp.eq.s32.totalorder %s10, 0
    %p68 = por %p66, %p67
    %p69 = scmp.ne.s32.totalorder %s58, %s61
    %p70 = scmp.eq.s32.totalorder %s15, 1
    %p71 = por %p69, %p70
    %p72 = scmp.ne.s32.totalorder %s61, %s62
    %p73 = scmp.eq.s32.totalorder %s15, 0
    %p74 = por %p72, %p73
    %p75 = scmp.ne.s32.totalorder %s61, %s62
    %p76 = scmp.eq.s32.totalorder %s16, 1
    %p77 = por %p75, %p76
    %p79 = scmp.ne.s32.totalorder %s62, %s78
    %p80 = scmp.eq.s32.totalorder %s16, 0
    %p81 = por %p79, %p80
    %s82 = ssub.s32 %s18, %s25
    %p83 = scmp.eq.s32.totalorder %s82, 0
    %s85 = sadd.s32 %s84, 1
    %s86 = scalar_select %p83, %s84, %s85
    %p89 = pneg %p83
    %p90 = scmp.eq.s32.totalorder %s10, 1
    %p91 = por %p89, %p90
    %p92 = scmp.ne.s32.totalorder %s84, %s87
    %p93 = scmp.eq.s32.totalorder %s10, 0
    %p94 = por %p92, %p93
    %p95 = scmp.ne.s32.totalorder %s84, %s87
    %p96 = scmp.eq.s32.totalorder %s15, 1
    %p97 = por %p95, %p96
    %p98 = scmp.ne.s32.totalorder %s87, %s88
    %p99 = scmp.eq.s32.totalorder %s15, 0
    %p100 = por %p98, %p99
    %p101 = scmp.ne.s32.totalorder %s87, %s88
    %p102 = scmp.eq.s32.totalorder %s16, 1
    %p103 = por %p101, %p102
    %p105 = scmp.ne.s32.totalorder %s88, %s104
    %p106 = scmp.eq.s32.totalorder %s16, 0
    %p107 = por %p105, %p106
    %s108 = ssub.s32 %s18, %s25
    %p109 = scmp.eq.s32.totalorder %s108, 0
    %s111 = sadd.s32 %s110, 1
    %s112 = scalar_select %p109, %s110, %s111
    %p115 = pneg %p109
    %p116 = scmp.eq.s32.totalorder %s10, 1
    %p117 = por %p115, %p116
    %p118 = scmp.ne.s32.totalorder %s110, %s113
    %p119 = scmp.eq.s32.totalorder %s10, 0
    %p120 = por %p118, %p119
    %p121 = scmp.ne.s32.totalorder %s110, %s113
    %p122 = scmp.eq.s32.totalorder %s15, 1
    %p123 = por %p121, %p122
    %p124 = scmp.ne.s32.totalorder %s113, %s114
    %p125 = scmp.eq.s32.totalorder %s15, 0
    %p126 = por %p124, %p125
    %p127 = scmp.ne.s32.totalorder %s113, %s114
    %p128 = scmp.eq.s32.totalorder %s16, 1
    %p129 = por %p127, %p128
    %p131 = scmp.ne.s32.totalorder %s114, %s130
    %p132 = scmp.eq.s32.totalorder %s16, 0
    %p133 = por %p131, %p132
    %s134 = ssub.s32 %s17, %s29
    %s135 = ssub.s32 %s18, %s25
    %s136 = sor.u32 %s134, %s135
    %p137 = scmp.eq.s32.totalorder %s136, 0
    %s139 = sadd.s32 %s138, 1
    %s140 = scalar_select %p137, %s138, %s139
    %p143 = pneg %p137
    %p144 = scmp.eq.s32.totalorder %s10, 1
    %p145 = por %p143, %p144
    %p146 = scmp.ne.s32.totalorder %s138, %s141
    %p147 = scmp.eq.s32.totalorder %s10, 0
    %p148 = por %p146, %p147
    %p149 = scmp.ne.s32.totalorder %s138, %s141
    %p150 = scmp.eq.s32.totalorder %s15, 1
    %p151 = por %p149, %p150
    %p152 = scmp.ne.s32.totalorder %s141, %s142
    %p153 = scmp.eq.s32.totalorder %s15, 0
    %p154 = por %p152, %p153
    %p155 = scmp.ne.s32.totalorder %s141, %s142
    %p156 = scmp.eq.s32.totalorder %s16, 1
    %p157 = por %p155, %p156
    %p159 = scmp.ne.s32.totalorder %s142, %s158
    %p160 = scmp.eq.s32.totalorder %s16, 0
    %p161 = por %p159, %p160
    %p162 = scmp.le.s32.totalorder 1, %s10
    %p163 = scmp.lt.s32.totalorder %s10, 3
    %p164 = pnand %p162, %p163
    %p165 = pneg %p164
    // Predicated region
    $region9: #{combined_model_forward.13} parent=5 // pred_check
      _
    $region10: #{combined_model_forward.13} parent=5 // pred_check_branch
      %167 = sbr.rel (%p164) target = $region12
    $region11: #{combined_model_forward.13} parent=5 // pred_region
      %s168 = ssub.s32 %s10, 1
      // Predicated region
      $region13: #{combined_model_forward.13} parent=11 // pred_check
        %p169 = pneg %p74
      $region14: #{combined_model_forward.13} parent=11 // pred_check_branch
        %171 = sbr.rel (%p169) target = $region16
      $region15: #{combined_model_forward.13} parent=11 // pred_region
        %p172 = scmp.lt.s32.totalorder %s20, 0
        %s173 = scalar_select %p172, %s20, 0
        %s174 = smul.addr %s173, 4
        %s175 = scalar_lea.vmem %s1, %s174
      $region16: #{combined_model_forward.13} parent=11 // pred_fallthru
        _
      // Predicated region
      $region17: #{combined_model_forward.13} parent=11 // pred_check
        %p176 = pneg %p100
      $region18: #{combined_model_forward.13} parent=11 // pred_check_branch
        %178 = sbr.rel (%p176) target = $region20
      $region19: #{combined_model_forward.13} parent=11 // pred_region
        %p179 = scmp.lt.s32.totalorder %s20, 0
        %s180 = scalar_select %p179, %s20, 0
        %s181 = scalar_lea.vmem %s2, %s180
      $region20: #{combined_model_forward.13} parent=11 // pred_fallthru
        _
      // Predicated region
      $region21: #{combined_model_forward.13} parent=11 // pred_check
        %p182 = pneg %p126
      $region22: #{combined_model_forward.13} parent=11 // pred_check_branch
        %184 = sbr.rel (%p182) target = $region24
      $region23: #{combined_model_forward.13} parent=11 // pred_region
        %p185 = scmp.lt.s32.totalorder %s20, 0
        %s186 = scalar_select %p185, %s20, 0
        %s187 = smul.addr %s186, 8
        %s188 = scalar_lea.vmem %s3, %s187
      $region24: #{combined_model_forward.13} parent=11 // pred_fallthru
        _
    $region12: #{combined_model_forward.13} parent=5 // pred_fallthru
      _
    %p189 = scmp.lt.s32.totalorder %s10, 2
    // Predicated region
    $region25: #{combined_model_forward.13} parent=5 // pred_check
      %p190 = pneg %p189
    $region26: #{combined_model_forward.13} parent=5 // pred_check_branch
      %192 = sbr.rel (%p190) target = $region28
    $region27: #{combined_model_forward.13} parent=5 // pred_region
      // Predicated region
      $region29: #{combined_model_forward.13} parent=27 // pred_check
        %p193 = pneg %p42
      $region30: #{combined_model_forward.13} parent=27 // pred_check_branch
        %195 = sbr.rel (%p193) target = $region32
      $region31: #{combined_model_forward.13} parent=27 // pred_region
        %s196 = smul.u32 2, %s17
        %p197 = scmp.lt.s32.totalorder %s196, 3
        %s198 = scalar_select %p197, %s196, 3
        %s199 = smul.addr %s198, 4
        %s200 = scalar_lea.vmem %s0, %s199
        %s201 = smul.u32 2, %s17
      $region32: #{combined_model_forward.13} parent=27 // pred_fallthru
        _
    $region28: #{combined_model_forward.13} parent=5 // pred_fallthru
      _
    %p202 = scmp.le.s32.totalorder 1, %s10
    %p203 = scmp.lt.s32.totalorder %s10, 3
    %p204 = pnand %p202, %p203
    %p205 = pneg %p204
    // Predicated region
    $region33: #{combined_model_forward.13} parent=5 // pred_check
      _
    $region34: #{combined_model_forward.13} parent=5 // pred_check_branch
      %207 = sbr.rel (%p204) target = $region36
    $region35: #{combined_model_forward.13} parent=5 // pred_region
      %s208 = ssub.s32 %s10, 1
      %s209 = smul.u32 2, %s19
      %p210 = scmp.lt.s32.totalorder %s209, 3
      %s211 = scalar_select %p210, %s209, 3
      %s212 = smul.addr %s211, 4
      %s213 = scalar_lea.vmem %s0, %s212
      %p214 = pneg %p48
      %p215 = pneg %p45
      %p216 = scmp.lt.s32.totalorder %s20, 0
      %s217 = scalar_select %p216, %s20, 0
      %s218 = smul.addr %s217, 4
      %s219 = scalar_lea.vmem %s1, %s218
      %p220 = pneg %p74
      %p221 = pneg %p71
      %p222 = scmp.lt.s32.totalorder %s20, 0
      %s223 = scalar_select %p222, %s20, 0
      %s224 = scalar_lea.vmem %s2, %s223
      %p225 = pneg %p100
      %p226 = pneg %p97
      %p227 = scmp.lt.s32.totalorder %s20, 0
      %s228 = scalar_select %p227, %s20, 0
      %s229 = smul.addr %s228, 8
      %s230 = scalar_lea.vmem %s3, %s229
      %p231 = pneg %p126
      %p232 = pneg %p123
      %p233 = pneg %p154
      %p234 = pneg %p151
      %s235 = smul.u32 2, %s19
      %p236 = scmp.lt.s32.totalorder %s235, 3
      %s237 = scalar_select %p236, %s235, 3
      %p238 = scmp.lt.s32.totalorder %s20, 0
      %s239 = scalar_select %p238, %s20, 0
      %s240 = sadd.s32 %s239, %s237
      %s241 = smul.addr %s240, 4
      %s242 = scalar_lea.vmem %s4, %s241
      %s243 = smul.u32 2, %s19
      %p244 = scmp.lt.s32.totalorder %s243, 3
      %s245 = scalar_select %p244, %s243, 3
      %s246 = smul.addr %s245, 4
      %s247 = scalar_lea.vmem %s0, %s246
      %s248 = smul.u32 2, %s19
      %p249 = scmp.lt.s32.totalorder %s20, 0
      %s250 = scalar_select %p249, %s20, 0
      %s251 = smul.addr %s250, 4
      %s252 = scalar_lea.vmem %s1, %s251
      %p253 = scmp.lt.s32.totalorder %s20, 0
      %s254 = scalar_select %p253, %s20, 0
      %s255 = scalar_lea.vmem %s2, %s254
      %p256 = scmp.lt.s32.totalorder %s20, 0
      %s257 = scalar_select %p256, %s20, 0
      %s258 = smul.addr %s257, 8
      %s259 = scalar_lea.vmem %s3, %s258
      %s260 = smul.u32 2, %s19
      %p261 = scmp.lt.s32.totalorder %s260, 3
      %s262 = scalar_select %p261, %s260, 3
      %p263 = scmp.lt.s32.totalorder %s20, 0
      %s264 = scalar_select %p263, %s20, 0
      %s265 = sadd.s32 %s264, %s262
      %s266 = smul.addr %s265, 4
      %s267 = scalar_lea.vmem %s4, %s266
      %s268 = smul.u32 2, %s19
      %v270 = vld [vmem:[%s247] sm:$0xf]
      %v271 = vld [vmem:[%s247 + $0x4] sm:$0xf]
      %v272 = vld [vmem:[%s252] sm:$0xf]
      %v273 = vld [vmem:[%s252 + $0x4] sm:$0xf]
      %v274 = vld [vmem:[%s252 + $0x8] sm:$0xf]
      %v275 = vld [vmem:[%s252 + $0xc] sm:$0xf]
      %v276 = vld [vmem:[%s255] sm:$0x1]
      %v278 = vlaneseq
      %v279 = vshrl.u32 %v278, 7
      %v280 = vsub.s32 0, %v279
      %v281 = vrot.slane %v276, %v280
      %v285 = vunpack.c.l.b16 %v270
      %v286 = vunpack.c.l.b16 %v271
      %v287 = vpack.c.b16 %v286, %v285
      %v292 = vunpack.c.l.b16 %v272
      %v293 = vunpack.c.l.b16 %v273
      %v294 = vunpack.c.l.b16 %v274
      %v295 = vunpack.c.l.b16 %v275
      %v296 = vpack.c.b16 %v293, %v292
      %v297 = vpack.c.b16 %v295, %v294
      %vm300 = vcmask 261120
      %v302 = vsel %vm300, %v287, 0
      %304 = vmatprep.subr.bf16.mxu0 0
      %305 = vmatpush1.bf16.msra.mxu0 0
      %306 = vmatprep.subr.bf16.mxu0 0
      %307 = vmatpush1.bf16.msra.mxu0 0
      %308 = vmatprep.subr.bf16.mxu0 0
      %309 = vmatpush1.bf16.msra.mxu0 0
      %310 = vmatprep.subr.bf16.mxu0 0
      %311 = vmatpush1.bf16.msra.mxu0 0
      %312 = vmatprep.subr.bf16.mxu0 0
      %313 = vmatpush1.bf16.msra.mxu0 0
      %314 = vmatprep.subr.bf16.mxu0 0
      %315 = vmatpush1.bf16.msra.mxu0 0
      %316 = vmatprep.subr.bf16.mxu0 0
      %317 = vmatpush1.bf16.msra.mxu0 %v297
      %318 = vmatprep.subr.bf16.mxu0 0
      %319 = vmatpush1.bf16.msra.mxu0 %v296
      %320 = vmatprep.subr.bf16.mxu0 0
      %321 = vmatpush2.bf16.msra.mxu0 0
      %322 = vmatprep.subr.bf16.mxu0 0
      %323 = vmatpush2.bf16.msra.mxu0 0
      %324 = vmatprep.subr.bf16.mxu0 0
      %325 = vmatpush2.bf16.msra.mxu0 0
      %326 = vmatprep.subr.bf16.mxu0 0
      %327 = vmatpush2.bf16.msra.mxu0 0
      %328 = vmatprep.subr.bf16.mxu0 0
      %329 = vmatpush2.bf16.msra.mxu0 0
      %330 = vmatprep.subr.bf16.mxu0 0
      %331 = vmatpush2.bf16.msra.mxu0 0
      %332 = vmatprep.subr.bf16.mxu0 0
      %333 = vmatpush2.bf16.msra.mxu0 0
      %334 = vmatprep.subr.bf16.mxu0 0
      %335 = vmatpush2.bf16.msra.mxu0 0
      %336 = vmatprep.mubr.bf16.mxu0 0
      %337 = vmatmul.mubr.bf16.gmra.mxu0 %v302
      %v338 = vpop.f32.mrf.mxu0
      %v339 = vadd.f32 %v281, %v338
      %v340 = vpop.f32.mrf.mxu0
      %v341 = vpop.f32.mrf.mxu0
      %v342 = vadd.f32 %v281, %v341
      %v343 = vpop.f32.mrf.mxu0
      %344 = vdwg.mxu0
      %v345 = vld [vmem:[%s259] sm:$0xff]
      %v346 = vld [vmem:[%s259 + $0x8] sm:$0xff]
      %v347 = vadd.f32 %v339, %v345
      %v348 = vadd.f32 %v342, %v346
      %v349 = vpack.c.bf16 %v348, %v347
      %v351 = vunpack.c.l.b16 %v349
      %v352 = vunpack.c.h.b16 %v349
      %v353 = vpack.c.b16 %v351, %v351
      %v354 = vpack.c.b16 %v352, %v352
      %vm357 = vcmask 257024
      %358 = vst.msk [vmem:[%s267] sm:$0xf] %vm357, %v353
      %359 = vst.msk [vmem:[%s267 + $0x4] sm:$0xf] %vm357, %v354
      %s360 = smul.u32 2, %s19
      %p361 = scmp.lt.s32.totalorder %s360, 3
      %s362 = scalar_select %p361, %s360, 3
      %p363 = scmp.lt.s32.totalorder %s20, 0
      %s364 = scalar_select %p363, %s20, 0
      %s365 = sadd.s32 %s364, %s362
      %s366 = smul.addr %s365, 4
      %s367 = scalar_lea.vmem %s4, %s366
      // Predicated region
      $region37: #{combined_model_forward.13} parent=35 // pred_check
        %p368 = pneg %p151
      $region38: #{combined_model_forward.13} parent=35 // pred_check_branch
        %370 = sbr.rel (%p368) target = $region40
      $region39: #{combined_model_forward.13} parent=35 // pred_region
        %s371 = smul.u32 2, %s19
      $region40: #{combined_model_forward.13} parent=35 // pred_fallthru
        _
    $region36: #{combined_model_forward.13} parent=5 // pred_fallthru
      _
    %p372 = scmp.le.s32.totalorder 2, %s10
    // Predicated region
    $region41: #{combined_model_forward.13} parent=5 // pred_check
      %p373 = pneg %p372
    $region42: #{combined_model_forward.13} parent=5 // pred_check_branch
      %375 = sbr.rel (%p373) target = $region44
    $region43: #{combined_model_forward.13} parent=5 // pred_region
      %s376 = ssub.s32 %s10, 2
      // Predicated region
      $region45: #{combined_model_forward.13} parent=43 // pred_check
        %p377 = pneg %p157
      $region46: #{combined_model_forward.13} parent=43 // pred_check_branch
        %379 = sbr.rel (%p377) target = $region48
      $region47: #{combined_model_forward.13} parent=43 // pred_region
        %s380 = smul.u32 2, %s21
        %p381 = scmp.lt.s32.totalorder %s380, 3
        %s382 = scalar_select %p381, %s380, 3
        %p383 = scmp.lt.s32.totalorder %s22, 0
        %s384 = scalar_select %p383, %s22, 0
        %s385 = sadd.s32 %s384, %s382
        %s386 = smul.addr %s385, 4
        %s387 = scalar_lea.vmem %s4, %s386
      $region48: #{combined_model_forward.13} parent=43 // pred_fallthru
        _
    $region44: #{combined_model_forward.13} parent=5 // pred_fallthru
      _
  $region6: #{combined_model_forward.13} parent=0 // loop_footer
    %s14 = sadd.s32 1, %s10
  $region7: #{combined_model_forward.13} parent=0 // loop_footer_branch
    %9 = sbr.rel target = $region3
  $region8: #{combined_model_forward.13} parent=0 // loop_exit
    _

// kernel: combined_model_forward.11
$region0: #{combined_model_forward.11}
  #allocation0 [shape = 'u32[]', space=smem, size = 0x4, offset = 0x4, fixed_abs, tag = 'smem constant byte address 0x4 - core index']
  #allocation1 [shape = 'u32[144,128]{1,0:T(1,128)}', space=vmem, size = 0x12000, scoped, tag = 'internal scratch']
  %s0 = inlined_call_operand.vmem [shape: bf16[2,4,4,4,4,16], index: 0, kind: input, shape index: {}]
  %s1 = inlined_call_operand.vmem [shape: bf16[2,4,4,16], index: 1, kind: output, shape index: {}]
  %s2 = sld [smem:[#allocation0]]
  $region37: #{combined_model_forward.11} parent=0
    _
  %s4 = ssub.s32 1, %s2
  %s5 = scalar_select 0, %s4, %s2
  loop: start=0, step=1, limit=4
  $region2: #{combined_model_forward.11} parent=0 // loop_pre_header
    _
  $region3: #{combined_model_forward.11} parent=0 // loop_header
    %s7 = sphi 0, %s11
    %p8 = scmp.ge.s32.totalorder %s7, 4
    %s17 = sphi 0, %s19
    %s20 = sphi 0, %s17
    %s21 = sphi 0, %s20
    %s37 = sphi 0, %s21
    %s43 = sphi 0, %s45
    %s46 = sphi 0, %s43
    %s47 = sphi 0, %s46
    %s63 = sphi 0, %s47
  $region4: #{combined_model_forward.11} parent=0 // loop_header_branch
    %10 = sbr.rel (%p8) target = $region8
  $region5: #{combined_model_forward.11} parent=0 // loop_body
    %s12 = ssub.s32 %s7, 1
    %s13 = ssub.s32 %s7, 2
    %s14 = sadd.s32 %s7, 1
    %s15 = ssub.s32 %s7, %s14
    %p16 = scmp.eq.s32.totalorder %s15, 0
    %s18 = sadd.s32 %s17, 1
    %s19 = scalar_select %p16, %s17, %s18
    %p22 = pneg %p16
    %p23 = scmp.eq.s32.totalorder %s7, 1
    %p24 = por %p22, %p23
    %p25 = scmp.ne.s32.totalorder %s17, %s20
    %p26 = scmp.eq.s32.totalorder %s7, 0
    %p27 = por %p25, %p26
    %p28 = scmp.ne.s32.totalorder %s17, %s20
    %p29 = scmp.eq.s32.totalorder %s12, 1
    %p30 = por %p28, %p29
    %p31 = scmp.ne.s32.totalorder %s20, %s21
    %p32 = scmp.eq.s32.totalorder %s12, 0
    %p33 = por %p31, %p32
    %p34 = scmp.ne.s32.totalorder %s20, %s21
    %p35 = scmp.eq.s32.totalorder %s13, 1
    %p36 = por %p34, %p35
    %p38 = scmp.ne.s32.totalorder %s21, %s37
    %p39 = scmp.eq.s32.totalorder %s13, 0
    %p40 = por %p38, %p39
    %s41 = ssub.s32 %s7, %s14
    %p42 = scmp.eq.s32.totalorder %s41, 0
    %s44 = sadd.s32 %s43, 1
    %s45 = scalar_select %p42, %s43, %s44
    %p48 = pneg %p42
    %p49 = scmp.eq.s32.totalorder %s7, 1
    %p50 = por %p48, %p49
    %p51 = scmp.ne.s32.totalorder %s43, %s46
    %p52 = scmp.eq.s32.totalorder %s7, 0
    %p53 = por %p51, %p52
    %p54 = scmp.ne.s32.totalorder %s43, %s46
    %p55 = scmp.eq.s32.totalorder %s12, 1
    %p56 = por %p54, %p55
    %p57 = scmp.ne.s32.totalorder %s46, %s47
    %p58 = scmp.eq.s32.totalorder %s12, 0
    %p59 = por %p57, %p58
    %p60 = scmp.ne.s32.totalorder %s46, %s47
    %p61 = scmp.eq.s32.totalorder %s13, 1
    %p62 = por %p60, %p61
    %p64 = scmp.ne.s32.totalorder %s47, %s63
    %p65 = scmp.eq.s32.totalorder %s13, 0
    %p66 = por %p64, %p65
    %p67 = scmp.le.s32.totalorder 1, %s7
    %p68 = scmp.lt.s32.totalorder %s7, 3
    %p69 = pnand %p67, %p68
    %p70 = pneg %p69
    // Predicated region
    $region9: #{combined_model_forward.11} parent=5 // pred_check
      _
    $region10: #{combined_model_forward.11} parent=5 // pred_check_branch
      %72 = sbr.rel (%p69) target = $region12
    $region11: #{combined_model_forward.11} parent=5 // pred_region
      %s73 = ssub.s32 %s7, 1
    $region12: #{combined_model_forward.11} parent=5 // pred_fallthru
      _
    %p74 = scmp.lt.s32.totalorder %s7, 2
    // Predicated region
    $region13: #{combined_model_forward.11} parent=5 // pred_check
      %p75 = pneg %p74
    $region14: #{combined_model_forward.11} parent=5 // pred_check_branch
      %77 = sbr.rel (%p75) target = $region16
    $region15: #{combined_model_forward.11} parent=5 // pred_region
      // Predicated region
      $region17: #{combined_model_forward.11} parent=15 // pred_check
        %p78 = pneg %p27
      $region18: #{combined_model_forward.11} parent=15 // pred_check_branch
        %80 = sbr.rel (%p78) target = $region20
      $region19: #{combined_model_forward.11} parent=15 // pred_region
        %p81 = scmp.lt.s32.totalorder %s7, 1
        %s82 = scalar_select %p81, %s7, 1
        %s83 = smul.addr %s82, 64
        %s84 = smul.addr %s83, 2
        %s85 = scalar_lea.vmem %s0, %s84
      $region20: #{combined_model_forward.11} parent=15 // pred_fallthru
        _
    $region16: #{combined_model_forward.11} parent=5 // pred_fallthru
      _
    %p86 = scmp.le.s32.totalorder 1, %s7
    %p87 = scmp.lt.s32.totalorder %s7, 3
    %p88 = pnand %p86, %p87
    %p89 = pneg %p88
    // Predicated region
    $region21: #{combined_model_forward.11} parent=5 // pred_check
      _
    $region22: #{combined_model_forward.11} parent=5 // pred_check_branch
      %91 = sbr.rel (%p88) target = $region24
    $region23: #{combined_model_forward.11} parent=5 // pred_region
      %s92 = ssub.s32 %s7, 1
      %p93 = scmp.lt.s32.totalorder %s12, 1
      %s94 = scalar_select %p93, %s12, 1
      %s95 = smul.addr %s94, 64
      %s96 = smul.addr %s95, 2
      %s97 = scalar_lea.vmem %s0, %s96
      %p98 = pneg %p33
      %p99 = pneg %p30
      %p100 = pneg %p59
      %p101 = pneg %p56
      %p102 = scmp.lt.s32.totalorder %s12, 1
      %s103 = scalar_select %p102, %s12, 1
      %s104 = smul.addr %s103, 4
      %s105 = smul.addr %s104, 2
      %s106 = scalar_lea.vmem %s1, %s105
      %p107 = scmp.lt.s32.totalorder %s12, 1
      %s108 = scalar_select %p107, %s12, 1
      %s109 = smul.addr %s108, 64
      %s110 = smul.addr %s109, 2
      %s111 = scalar_lea.vmem %s0, %s110
      %p112 = scmp.lt.s32.totalorder %s12, 1
      %s113 = scalar_select %p112, %s12, 1
      %s114 = smul.addr %s113, 4
      %s115 = smul.addr %s114, 2
      %s116 = scalar_lea.vmem %s1, %s115
      %v117 = vld [vmem:[%s111] sm:$0x3]
      %v118 = vld [vmem:[%s111 + $0x2] sm:$0x3]
      %v119 = vld [vmem:[%s111 + $0x4] sm:$0x3]
      %v120 = vld [vmem:[%s111 + $0x6] sm:$0x3]
      %v121 = vld [vmem:[%s111 + $0x8] sm:$0x3]
      %v122 = vld [vmem:[%s111 + $0xa] sm:$0x3]
      %v123 = vld [vmem:[%s111 + $0xc] sm:$0x3]
      %v124 = vld [vmem:[%s111 + $0xe] sm:$0x3]
      %v125 = vld [vmem:[%s111 + $0x10] sm:$0x3]
      %v126 = vld [vmem:[%s111 + $0x12] sm:$0x3]
      %v127 = vld [vmem:[%s111 + $0x14] sm:$0x3]
      %v128 = vld [vmem:[%s111 + $0x16] sm:$0x3]
      %v129 = vld [vmem:[%s111 + $0x20] sm:$0x3]
      %v130 = vld [vmem:[%s111 + $0x22] sm:$0x3]
      %v131 = vld [vmem:[%s111 + $0x24] sm:$0x3]
      %v132 = vld [vmem:[%s111 + $0x26] sm:$0x3]
      %v133 = vld [vmem:[%s111 + $0x28] sm:$0x3]
      %v134 = vld [vmem:[%s111 + $0x2a] sm:$0x3]
      %v135 = vld [vmem:[%s111 + $0x2c] sm:$0x3]
      %v136 = vld [vmem:[%s111 + $0x2e] sm:$0x3]
      %v137 = vld [vmem:[%s111 + $0x30] sm:$0x3]
      %v138 = vld [vmem:[%s111 + $0x32] sm:$0x3]
      %v139 = vld [vmem:[%s111 + $0x34] sm:$0x3]
      %v140 = vld [vmem:[%s111 + $0x36] sm:$0x3]
      %v141 = vld [vmem:[%s111 + $0x40] sm:$0x3]
      %v142 = vld [vmem:[%s111 + $0x42] sm:$0x3]
      %v143 = vld [vmem:[%s111 + $0x44] sm:$0x3]
      %v144 = vld [vmem:[%s111 + $0x46] sm:$0x3]
      %v145 = vld [vmem:[%s111 + $0x48] sm:$0x3]
      %v146 = vld [vmem:[%s111 + $0x4a] sm:$0x3]
      %v147 = vld [vmem:[%s111 + $0x4c] sm:$0x3]
      %v148 = vld [vmem:[%s111 + $0x4e] sm:$0x3]
      %v149 = vld [vmem:[%s111 + $0x50] sm:$0x3]
      %v150 = vld [vmem:[%s111 + $0x52] sm:$0x3]
      %v151 = vld [vmem:[%s111 + $0x54] sm:$0x3]
      %v152 = vld [vmem:[%s111 + $0x56] sm:$0x3]
      %v153 = vld [vmem:[%s111 + $0x60] sm:$0x3]
      %v154 = vld [vmem:[%s111 + $0x62] sm:$0x3]
      %v155 = vld [vmem:[%s111 + $0x64] sm:$0x3]
      %v156 = vld [vmem:[%s111 + $0x66] sm:$0x3]
      %v157 = vld [vmem:[%s111 + $0x68] sm:$0x3]
      %v158 = vld [vmem:[%s111 + $0x6a] sm:$0x3]
      %v159 = vld [vmem:[%s111 + $0x6c] sm:$0x3]
      %v160 = vld [vmem:[%s111 + $0x6e] sm:$0x3]
      %v161 = vld [vmem:[%s111 + $0x70] sm:$0x3]
      %v162 = vld [vmem:[%s111 + $0x72] sm:$0x3]
      %v163 = vld [vmem:[%s111 + $0x74] sm:$0x3]
      %v164 = vld [vmem:[%s111 + $0x76] sm:$0x3]
      %v165 = vunpack.c.l.bf16 %v117
      %v166 = vunpack.c.l.bf16 %v118
      %v167 = vunpack.c.l.bf16 %v119
      %v168 = vunpack.c.l.bf16 %v120
      %v169 = vunpack.c.l.bf16 %v121
      %v170 = vunpack.c.l.bf16 %v122
      %v171 = vunpack.c.l.bf16 %v123
      %v172 = vunpack.c.l.bf16 %v124
      %v173 = vunpack.c.l.bf16 %v125
      %v174 = vunpack.c.l.bf16 %v126
      %v175 = vunpack.c.l.bf16 %v127
      %v176 = vunpack.c.l.bf16 %v128
      %v177 = vunpack.c.l.bf16 %v129
      %v178 = vunpack.c.l.bf16 %v130
      %v179 = vunpack.c.l.bf16 %v131
      %v180 = vunpack.c.l.bf16 %v132
      %v181 = vunpack.c.l.bf16 %v133
      %v182 = vunpack.c.l.bf16 %v134
      %v183 = vunpack.c.l.bf16 %v135
      %v184 = vunpack.c.l.bf16 %v136
      %v185 = vunpack.c.l.bf16 %v137
      %v186 = vunpack.c.l.bf16 %v138
      %v187 = vunpack.c.l.bf16 %v139
      %v188 = vunpack.c.l.bf16 %v140
      %v189 = vunpack.c.l.bf16 %v141
      %v190 = vunpack.c.l.bf16 %v142
      %v191 = vunpack.c.l.bf16 %v143
      %v192 = vunpack.c.l.bf16 %v144
      %v193 = vunpack.c.l.bf16 %v145
      %v194 = vunpack.c.l.bf16 %v146
      %v195 = vunpack.c.l.bf16 %v147
      %v196 = vunpack.c.l.bf16 %v148
      %v197 = vunpack.c.l.bf16 %v149
      %v198 = vunpack.c.l.bf16 %v150
      %v199 = vunpack.c.l.bf16 %v151
      %v200 = vunpack.c.l.bf16 %v152
      %v201 = vunpack.c.l.bf16 %v153
      %v202 = vunpack.c.l.bf16 %v154
      %v203 = vunpack.c.l.bf16 %v155
      %v204 = vunpack.c.l.bf16 %v156
      %v205 = vunpack.c.l.bf16 %v157
      %v206 = vunpack.c.l.bf16 %v158
      %v207 = vunpack.c.l.bf16 %v159
      %v208 = vunpack.c.l.bf16 %v160
      %v209 = vunpack.c.l.bf16 %v161
      %v210 = vunpack.c.l.bf16 %v162
      %v211 = vunpack.c.l.bf16 %v163
      %v212 = vunpack.c.l.bf16 %v164
      %vm213 = vcmask 124928
      %v214 = vsel %vm213, %v165, -inf
      %v215 = vrot.slane %v214, 4
      %v216 = vmax.f32 %v214, %v215
      %v217 = vrot.slane %v216, 2
      %v218 = vmax.f32 %v216, %v217
      %v219 = vrot.slane %v218, 1
      %v220 = vmax.f32 %v218, %v219
      %v221 = vsel %vm213, %v166, -inf
      %v222 = vrot.slane %v221, 4
      %v223 = vmax.f32 %v221, %v222
      %v224 = vrot.slane %v223, 2
      %v225 = vmax.f32 %v223, %v224
      %v226 = vrot.slane %v225, 1
      %v227 = vmax.f32 %v225, %v226
      %v228 = vsel %vm213, %v167, -inf
      %v229 = vrot.slane %v228, 4
      %v230 = vmax.f32 %v228, %v229
      %v231 = vrot.slane %v230, 2
      %v232 = vmax.f32 %v230, %v231
      %v233 = vrot.slane %v232, 1
      %v234 = vmax.f32 %v232, %v233
      %v235 = vsel %vm213, %v168, -inf
      %v236 = vrot.slane %v235, 4
      %v237 = vmax.f32 %v235, %v236
      %v238 = vrot.slane %v237, 2
      %v239 = vmax.f32 %v237, %v238
      %v240 = vrot.slane %v239, 1
      %v241 = vmax.f32 %v239, %v240
      %v242 = vsel %vm213, %v169, -inf
      %v243 = vrot.slane %v242, 4
      %v244 = vmax.f32 %v242, %v243
      %v245 = vrot.slane %v244, 2
      %v246 = vmax.f32 %v244, %v245
      %v247 = vrot.slane %v246, 1
      %v248 = vmax.f32 %v246, %v247
      %v249 = vsel %vm213, %v170, -inf
      %v250 = vrot.slane %v249, 4
      %v251 = vmax.f32 %v249, %v250
      %v252 = vrot.slane %v251, 2
      %v253 = vmax.f32 %v251, %v252
      %v254 = vrot.slane %v253, 1
      %v255 = vmax.f32 %v253, %v254
      %v256 = vsel %vm213, %v171, -inf
      %v257 = vrot.slane %v256, 4
      %v258 = vmax.f32 %v256, %v257
      %v259 = vrot.slane %v258, 2
      %v260 = vmax.f32 %v258, %v259
      %v261 = vrot.slane %v260, 1
      %v262 = vmax.f32 %v260, %v261
      %v263 = vsel %vm213, %v172, -inf
      %v264 = vrot.slane %v263, 4
      %v265 = vmax.f32 %v263, %v264
      %v266 = vrot.slane %v265, 2
      %v267 = vmax.f32 %v265, %v266
      %v268 = vrot.slane %v267, 1
      %v269 = vmax.f32 %v267, %v268
      %v270 = vsel %vm213, %v173, -inf
      %v271 = vrot.slane %v270, 4
      %v272 = vmax.f32 %v270, %v271
      %v273 = vrot.slane %v272, 2
      %v274 = vmax.f32 %v272, %v273
      %v275 = vrot.slane %v274, 1
      %v276 = vmax.f32 %v274, %v275
      %v277 = vsel %vm213, %v174, -inf
      %v278 = vrot.slane %v277, 4
      %v279 = vmax.f32 %v277, %v278
      %v280 = vrot.slane %v279, 2
      %v281 = vmax.f32 %v279, %v280
      %v282 = vrot.slane %v281, 1
      %v283 = vmax.f32 %v281, %v282
      %v284 = vsel %vm213, %v175, -inf
      %v285 = vrot.slane %v284, 4
      %v286 = vmax.f32 %v284, %v285
      %v287 = vrot.slane %v286, 2
      %v288 = vmax.f32 %v286, %v287
      %v289 = vrot.slane %v288, 1
      %v290 = vmax.f32 %v288, %v289
      %v291 = vsel %vm213, %v176, -inf
      %v292 = vrot.slane %v291, 4
      %v293 = vmax.f32 %v291, %v292
      %v294 = vrot.slane %v293, 2
      %v295 = vmax.f32 %v293, %v294
      %v296 = vrot.slane %v295, 1
      %v297 = vmax.f32 %v295, %v296
      %v298 = vsel %vm213, %v177, -inf
      %v299 = vrot.slane %v298, 4
      %v300 = vmax.f32 %v298, %v299
      %v301 = vrot.slane %v300, 2
      %v302 = vmax.f32 %v300, %v301
      %v303 = vrot.slane %v302, 1
      %v304 = vmax.f32 %v302, %v303
      %v305 = vsel %vm213, %v178, -inf
      %v306 = vrot.slane %v305, 4
      %v307 = vmax.f32 %v305, %v306
      %v308 = vrot.slane %v307, 2
      %v309 = vmax.f32 %v307, %v308
      %v310 = vrot.slane %v309, 1
      %v311 = vmax.f32 %v309, %v310
      %v312 = vsel %vm213, %v179, -inf
      %v313 = vrot.slane %v312, 4
      %v314 = vmax.f32 %v312, %v313
      %v315 = vrot.slane %v314, 2
      %v316 = vmax.f32 %v314, %v315
      %v317 = vrot.slane %v316, 1
      %v318 = vmax.f32 %v316, %v317
      %v319 = vsel %vm213, %v180, -inf
      %v320 = vrot.slane %v319, 4
      %v321 = vmax.f32 %v319, %v320
      %v322 = vrot.slane %v321, 2
      %v323 = vmax.f32 %v321, %v322
      %v324 = vrot.slane %v323, 1
      %v325 = vmax.f32 %v323, %v324
      %v326 = vsel %vm213, %v181, -inf
      %v327 = vrot.slane %v326, 4
      %v328 = vmax.f32 %v326, %v327
      %v329 = vrot.slane %v328, 2
      %v330 = vmax.f32 %v328, %v329
      %v331 = vrot.slane %v330, 1
      %v332 = vmax.f32 %v330, %v331
      %v333 = vsel %vm213, %v182, -inf
      %v334 = vrot.slane %v333, 4
      %v335 = vmax.f32 %v333, %v334
      %v336 = vrot.slane %v335, 2
      %v337 = vmax.f32 %v335, %v336
      %v338 = vrot.slane %v337, 1
      %v339 = vmax.f32 %v337, %v338
      %v340 = vsel %vm213, %v183, -inf
      %v341 = vrot.slane %v340, 4
      %v342 = vmax.f32 %v340, %v341
      %v343 = vrot.slane %v342, 2
      %v344 = vmax.f32 %v342, %v343
      %v345 = vrot.slane %v344, 1
      %v346 = vmax.f32 %v344, %v345
      %v347 = vsel %vm213, %v184, -inf
      %v348 = vrot.slane %v347, 4
      %v349 = vmax.f32 %v347, %v348
      %v350 = vrot.slane %v349, 2
      %v351 = vmax.f32 %v349, %v350
      %v352 = vrot.slane %v351, 1
      %v353 = vmax.f32 %v351, %v352
      %v354 = vsel %vm213, %v185, -inf
      %v355 = vrot.slane %v354, 4
      %v356 = vmax.f32 %v354, %v355
      %v357 = vrot.slane %v356, 2
      %v358 = vmax.f32 %v356, %v357
      %v359 = vrot.slane %v358, 1
      %v360 = vmax.f32 %v358, %v359
      %v361 = vsel %vm213, %v186, -inf
      %v362 = vrot.slane %v361, 4
      %v363 = vmax.f32 %v361, %v362
      %v364 = vrot.slane %v363, 2
      %v365 = vmax.f32 %v363, %v364
      %v366 = vrot.slane %v365, 1
      %v367 = vmax.f32 %v365, %v366
      %v368 = vsel %vm213, %v187, -inf
      %v369 = vrot.slane %v368, 4
      %v370 = vmax.f32 %v368, %v369
      %v371 = vrot.slane %v370, 2
      %v372 = vmax.f32 %v370, %v371
      %v373 = vrot.slane %v372, 1
      %v374 = vmax.f32 %v372, %v373
      %v375 = vsel %vm213, %v188, -inf
      %v376 = vrot.slane %v375, 4
      %v377 = vmax.f32 %v375, %v376
      %v378 = vrot.slane %v377, 2
      %v379 = vmax.f32 %v377, %v378
      %v380 = vrot.slane %v379, 1
      %v381 = vmax.f32 %v379, %v380
      %v382 = vsel %vm213, %v189, -inf
      %v383 = vrot.slane %v382, 4
      %v384 = vmax.f32 %v382, %v383
      %v385 = vrot.slane %v384, 2
      %v386 = vmax.f32 %v384, %v385
      %v387 = vrot.slane %v386, 1
      %v388 = vmax.f32 %v386, %v387
      %v389 = vsel %vm213, %v190, -inf
      %v390 = vrot.slane %v389, 4
      %v391 = vmax.f32 %v389, %v390
      %v392 = vrot.slane %v391, 2
      %v393 = vmax.f32 %v391, %v392
      %v394 = vrot.slane %v393, 1
      %v395 = vmax.f32 %v393, %v394
      %v396 = vsel %vm213, %v191, -inf
      %v397 = vrot.slane %v396, 4
      %v398 = vmax.f32 %v396, %v397
      %v399 = vrot.slane %v398, 2
      %v400 = vmax.f32 %v398, %v399
      %v401 = vrot.slane %v400, 1
      %v402 = vmax.f32 %v400, %v401
      %v403 = vsel %vm213, %v192, -inf
      %v404 = vrot.slane %v403, 4
      %v405 = vmax.f32 %v403, %v404
      %v406 = vrot.slane %v405, 2
      %v407 = vmax.f32 %v405, %v406
      %v408 = vrot.slane %v407, 1
      %v409 = vmax.f32 %v407, %v408
      %v410 = vsel %vm213, %v193, -inf
      %v411 = vrot.slane %v410, 4
      %v412 = vmax.f32 %v410, %v411
      %v413 = vrot.slane %v412, 2
      %v414 = vmax.f32 %v412, %v413
      %v415 = vrot.slane %v414, 1
      %v416 = vmax.f32 %v414, %v415
      %v417 = vsel %vm213, %v194, -inf
      %v418 = vrot.slane %v417, 4
      %v419 = vmax.f32 %v417, %v418
      %v420 = vrot.slane %v419, 2
      %v421 = vmax.f32 %v419, %v420
      %v422 = vrot.slane %v421, 1
      %v423 = vmax.f32 %v421, %v422
      %v424 = vsel %vm213, %v195, -inf
      %v425 = vrot.slane %v424, 4
      %v426 = vmax.f32 %v424, %v425
      %v427 = vrot.slane %v426, 2
      %v428 = vmax.f32 %v426, %v427
      %v429 = vrot.slane %v428, 1
      %v430 = vmax.f32 %v428, %v429
      %v431 = vsel %vm213, %v196, -inf
      %v432 = vrot.slane %v431, 4
      %v433 = vmax.f32 %v431, %v432
      %v434 = vrot.slane %v433, 2
      %v435 = vmax.f32 %v433, %v434
      %v436 = vrot.slane %v435, 1
      %v437 = vmax.f32 %v435, %v436
      %v438 = vsel %vm213, %v197, -inf
      %v439 = vrot.slane %v438, 4
      %v440 = vmax.f32 %v438, %v439
      %v441 = vrot.slane %v440, 2
      %v442 = vmax.f32 %v440, %v441
      %v443 = vrot.slane %v442, 1
      %v444 = vmax.f32 %v442, %v443
      %v445 = vsel %vm213, %v198, -inf
      %v446 = vrot.slane %v445, 4
      %v447 = vmax.f32 %v445, %v446
      %v448 = vrot.slane %v447, 2
      %v449 = vmax.f32 %v447, %v448
      %v450 = vrot.slane %v449, 1
      %v451 = vmax.f32 %v449, %v450
      %v452 = vsel %vm213, %v199, -inf
      %v453 = vrot.slane %v452, 4
      %v454 = vmax.f32 %v452, %v453
      %v455 = vrot.slane %v454, 2
      %v456 = vmax.f32 %v454, %v455
      %v457 = vrot.slane %v456, 1
      %v458 = vmax.f32 %v456, %v457
      %v459 = vsel %vm213, %v200, -inf
      %v460 = vrot.slane %v459, 4
      %v461 = vmax.f32 %v459, %v460
      %v462 = vrot.slane %v461, 2
      %v463 = vmax.f32 %v461, %v462
      %v464 = vrot.slane %v463, 1
      %v465 = vmax.f32 %v463, %v464
      %v466 = vsel %vm213, %v201, -inf
      %v467 = vrot.slane %v466, 4
      %v468 = vmax.f32 %v466, %v467
      %v469 = vrot.slane %v468, 2
      %v470 = vmax.f32 %v468, %v469
      %v471 = vrot.slane %v470, 1
      %v472 = vmax.f32 %v470, %v471
      %v473 = vsel %vm213, %v202, -inf
      %v474 = vrot.slane %v473, 4
      %v475 = vmax.f32 %v473, %v474
      %v476 = vrot.slane %v475, 2
      %v477 = vmax.f32 %v475, %v476
      %v478 = vrot.slane %v477, 1
      %v479 = vmax.f32 %v477, %v478
      %v480 = vsel %vm213, %v203, -inf
      %v481 = vrot.slane %v480, 4
      %v482 = vmax.f32 %v480, %v481
      %v483 = vrot.slane %v482, 2
      %v484 = vmax.f32 %v482, %v483
      %v485 = vrot.slane %v484, 1
      %v486 = vmax.f32 %v484, %v485
      %v487 = vsel %vm213, %v204, -inf
      %v488 = vrot.slane %v487, 4
      %v489 = vmax.f32 %v487, %v488
      %v490 = vrot.slane %v489, 2
      %v491 = vmax.f32 %v489, %v490
      %v492 = vrot.slane %v491, 1
      %v493 = vmax.f32 %v491, %v492
      %v494 = vsel %vm213, %v205, -inf
      %v495 = vrot.slane %v494, 4
      %v496 = vmax.f32 %v494, %v495
      %v497 = vrot.slane %v496, 2
      %v498 = vmax.f32 %v496, %v497
      %v499 = vrot.slane %v498, 1
      %v500 = vmax.f32 %v498, %v499
      %v501 = vsel %vm213, %v206, -inf
      %v502 = vrot.slane %v501, 4
      %v503 = vmax.f32 %v501, %v502
      %v504 = vrot.slane %v503, 2
      %v505 = vmax.f32 %v503, %v504
      %v506 = vrot.slane %v505, 1
      %v507 = vmax.f32 %v505, %v506
      %v508 = vsel %vm213, %v207, -inf
      %v509 = vrot.slane %v508, 4
      %v510 = vmax.f32 %v508, %v509
      %v511 = vrot.slane %v510, 2
      %v512 = vmax.f32 %v510, %v511
      %v513 = vrot.slane %v512, 1
      %v514 = vmax.f32 %v512, %v513
      %v515 = vsel %vm213, %v208, -inf
      %v516 = vrot.slane %v515, 4
      %v517 = vmax.f32 %v515, %v516
      %v518 = vrot.slane %v517, 2
      %v519 = vmax.f32 %v517, %v518
      %v520 = vrot.slane %v519, 1
      %v521 = vmax.f32 %v519, %v520
      %v522 = vsel %vm213, %v209, -inf
      %v523 = vrot.slane %v522, 4
      %v524 = vmax.f32 %v522, %v523
      %v525 = vrot.slane %v524, 2
      %v526 = vmax.f32 %v524, %v525
      %v527 = vrot.slane %v526, 1
      %v528 = vmax.f32 %v526, %v527
      %v529 = vsel %vm213, %v210, -inf
      %v530 = vrot.slane %v529, 4
      %v531 = vmax.f32 %v529, %v530
      %v532 = vrot.slane %v531, 2
      %v533 = vmax.f32 %v531, %v532
      %v534 = vrot.slane %v533, 1
      %v535 = vmax.f32 %v533, %v534
      %v536 = vsel %vm213, %v211, -inf
      %v537 = vrot.slane %v536, 4
      %v538 = vmax.f32 %v536, %v537
      %v539 = vrot.slane %v538, 2
      %v540 = vmax.f32 %v538, %v539
      %v541 = vrot.slane %v540, 1
      %v542 = vmax.f32 %v540, %v541
      %v543 = vsel %vm213, %v212, -inf
      %v544 = vrot.slane %v543, 4
      %v545 = vmax.f32 %v543, %v544
      %v546 = vrot.slane %v545, 2
      %v547 = vmax.f32 %v545, %v546
      %v548 = vrot.slane %v547, 1
      %v549 = vmax.f32 %v547, %v548
      %vm550 = vcmask 130048
      %v551 = vsel %vm550, %v220, -inf
      %v552 = vsel %vm550, %v248, -inf
      %v553 = vmax.f32 %v551, %v552
      %v554 = vsel %vm550, %v276, -inf
      %v555 = vmax.f32 %v553, %v554
      %v556 = vsel %vm550, %v227, -inf
      %v557 = vsel %vm550, %v255, -inf
      %v558 = vmax.f32 %v556, %v557
      %v559 = vsel %vm550, %v283, -inf
      %v560 = vmax.f32 %v558, %v559
      %v561 = vsel %vm550, %v234, -inf
      %v562 = vsel %vm550, %v262, -inf
      %v563 = vmax.f32 %v561, %v562
      %v564 = vsel %vm550, %v290, -inf
      %v565 = vmax.f32 %v563, %v564
      %v566 = vsel %vm550, %v241, -inf
      %v567 = vsel %vm550, %v269, -inf
      %v568 = vmax.f32 %v566, %v567
      %v569 = vsel %vm550, %v297, -inf
      %v570 = vmax.f32 %v568, %v569
      %v571 = vsel %vm550, %v304, -inf
      %v572 = vsel %vm550, %v332, -inf
      %v573 = vmax.f32 %v571, %v572
      %v574 = vsel %vm550, %v360, -inf
      %v575 = vmax.f32 %v573, %v574
      %v576 = vsel %vm550, %v311, -inf
      %v577 = vsel %vm550, %v339, -inf
      %v578 = vmax.f32 %v576, %v577
      %v579 = vsel %vm550, %v367, -inf
      %v580 = vmax.f32 %v578, %v579
      %v581 = vsel %vm550, %v318, -inf
      %v582 = vsel %vm550, %v346, -inf
      %v583 = vmax.f32 %v581, %v582
      %v584 = vsel %vm550, %v374, -inf
      %v585 = vmax.f32 %v583, %v584
      %v586 = vsel %vm550, %v325, -inf
      %v587 = vsel %vm550, %v353, -inf
      %v588 = vmax.f32 %v586, %v587
      %v589 = vsel %vm550, %v381, -inf
      %v590 = vmax.f32 %v588, %v589
      %v591 = vsel %vm550, %v388, -inf
      %v592 = vsel %vm550, %v416, -inf
      %v593 = vmax.f32 %v591, %v592
      %v594 = vsel %vm550, %v444, -inf
      %v595 = vmax.f32 %v593, %v594
      %v596 = vsel %vm550, %v395, -inf
      %v597 = vsel %vm550, %v423, -inf
      %v598 = vmax.f32 %v596, %v597
      %v599 = vsel %vm550, %v451, -inf
      %v600 = vmax.f32 %v598, %v599
      %v601 = vsel %vm550, %v402, -inf
      %v602 = vsel %vm550, %v430, -inf
      %v603 = vmax.f32 %v601, %v602
      %v604 = vsel %vm550, %v458, -inf
      %v605 = vmax.f32 %v603, %v604
      %v606 = vsel %vm550, %v409, -inf
      %v607 = vsel %vm550, %v437, -inf
      %v608 = vmax.f32 %v606, %v607
      %v609 = vsel %vm550, %v465, -inf
      %v610 = vmax.f32 %v608, %v609
      %v611 = vsel %vm550, %v472, -inf
      %v612 = vsel %vm550, %v500, -inf
      %v613 = vmax.f32 %v611, %v612
      %v614 = vsel %vm550, %v528, -inf
      %v615 = vmax.f32 %v613, %v614
      %v616 = vsel %vm550, %v479, -inf
      %v617 = vsel %vm550, %v507, -inf
      %v618 = vmax.f32 %v616, %v617
      %v619 = vsel %vm550, %v535, -inf
      %v620 = vmax.f32 %v618, %v619
      %v621 = vsel %vm550, %v486, -inf
      %v622 = vsel %vm550, %v514, -inf
      %v623 = vmax.f32 %v621, %v622
      %v624 = vsel %vm550, %v542, -inf
      %v625 = vmax.f32 %v623, %v624
      %v626 = vsel %vm550, %v493, -inf
      %v627 = vsel %vm550, %v521, -inf
      %v628 = vmax.f32 %v626, %v627
      %v629 = vsel %vm550, %v549, -inf
      %v630 = vmax.f32 %v628, %v629
      %v631 = vpack.c.bf16 %v555, %v555
      %v632 = vpack.c.bf16 %v560, %v560
      %v633 = vpack.c.bf16 %v565, %v565
      %v634 = vpack.c.bf16 %v570, %v570
      %v635 = vpack.c.bf16 %v575, %v575
      %v636 = vpack.c.bf16 %v580, %v580
      %v637 = vpack.c.bf16 %v585, %v585
      %v638 = vpack.c.bf16 %v590, %v590
      %v639 = vpack.c.bf16 %v595, %v595
      %v640 = vpack.c.bf16 %v600, %v600
      %v641 = vpack.c.bf16 %v605, %v605
      %v642 = vpack.c.bf16 %v610, %v610
      %v643 = vpack.c.bf16 %v615, %v615
      %v644 = vpack.c.bf16 %v620, %v620
      %v645 = vpack.c.bf16 %v625, %v625
      %v646 = vpack.c.bf16 %v630, %v630
      %v664 = vunpack.c.l.s4 1983009808
      %v665 = vunpack.c.0.s8 %v664
      %v666 = vlaneseq
      %v667 = vshrl.u32 %v666, 7
      %v668 = vsub.s32 %v665, %v667
      %v669 = vrot.slane %v631, %v668
      %v671 = vunpack.c.l.s4 1983009808
      %v672 = vunpack.c.0.s8 %v671
      %v673 = vlaneseq
      %v674 = vshrl.u32 %v673, 7
      %v675 = vsub.s32 %v672, %v674
      %v676 = vrot.slane %v632, %v675
      %v678 = vunpack.c.l.s4 1983009808
      %v679 = vunpack.c.0.s8 %v678
      %v680 = vlaneseq
      %v681 = vshrl.u32 %v680, 7
      %v682 = vsub.s32 %v679, %v681
      %v683 = vrot.slane %v633, %v682
      %v685 = vunpack.c.l.s4 1983009808
      %v686 = vunpack.c.0.s8 %v685
      %v687 = vlaneseq
      %v688 = vshrl.u32 %v687, 7
      %v689 = vsub.s32 %v686, %v688
      %v690 = vrot.slane %v634, %v689
      %v692 = vunpack.c.l.s4 1983009808
      %v693 = vunpack.c.0.s8 %v692
      %v694 = vlaneseq
      %v695 = vshrl.u32 %v694, 7
      %v696 = vsub.s32 %v693, %v695
      %v697 = vrot.slane %v635, %v696
      %v699 = vunpack.c.l.s4 1983009808
      %v700 = vunpack.c.0.s8 %v699
      %v701 = vlaneseq
      %v702 = vshrl.u32 %v701, 7
      %v703 = vsub.s32 %v700, %v702
      %v704 = vrot.slane %v636, %v703
      %v706 = vunpack.c.l.s4 1983009808
      %v707 = vunpack.c.0.s8 %v706
      %v708 = vlaneseq
      %v709 = vshrl.u32 %v708, 7
      %v710 = vsub.s32 %v707, %v709
      %v711 = vrot.slane %v637, %v710
      %v713 = vunpack.c.l.s4 1983009808
      %v714 = vunpack.c.0.s8 %v713
      %v715 = vlaneseq
      %v716 = vshrl.u32 %v715, 7
      %v717 = vsub.s32 %v714, %v716
      %v718 = vrot.slane %v638, %v717
      %v720 = vunpack.c.l.s4 1983009808
      %v721 = vunpack.c.0.s8 %v720
      %v722 = vlaneseq
      %v723 = vshrl.u32 %v722, 7
      %v724 = vsub.s32 %v721, %v723
      %v725 = vrot.slane %v639, %v724
      %v727 = vunpack.c.l.s4 1983009808
      %v728 = vunpack.c.0.s8 %v727
      %v729 = vlaneseq
      %v730 = vshrl.u32 %v729, 7
      %v731 = vsub.s32 %v728, %v730
      %v732 = vrot.slane %v640, %v731
      %v734 = vunpack.c.l.s4 1983009808
      %v735 = vunpack.c.0.s8 %v734
      %v736 = vlaneseq
      %v737 = vshrl.u32 %v736, 7
      %v738 = vsub.s32 %v735, %v737
      %v739 = vrot.slane %v641, %v738
      %v741 = vunpack.c.l.s4 1983009808
      %v742 = vunpack.c.0.s8 %v741
      %v743 = vlaneseq
      %v744 = vshrl.u32 %v743, 7
      %v745 = vsub.s32 %v742, %v744
      %v746 = vrot.slane %v642, %v745
      %v748 = vunpack.c.l.s4 1983009808
      %v749 = vunpack.c.0.s8 %v748
      %v750 = vlaneseq
      %v751 = vshrl.u32 %v750, 7
      %v752 = vsub.s32 %v749, %v751
      %v753 = vrot.slane %v643, %v752
      %v755 = vunpack.c.l.s4 1983009808
      %v756 = vunpack.c.0.s8 %v755
      %v757 = vlaneseq
      %v758 = vshrl.u32 %v757, 7
      %v759 = vsub.s32 %v756, %v758
      %v760 = vrot.slane %v644, %v759
      %v762 = vunpack.c.l.s4 1983009808
      %v763 = vunpack.c.0.s8 %v762
      %v764 = vlaneseq
      %v765 = vshrl.u32 %v764, 7
      %v766 = vsub.s32 %v763, %v765
      %v767 = vrot.slane %v645, %v766
      %v769 = vunpack.c.l.s4 1983009808
      %v770 = vunpack.c.0.s8 %v769
      %v771 = vlaneseq
      %v772 = vshrl.u32 %v771, 7
      %v773 = vsub.s32 %v770, %v772
      %v774 = vrot.slane %v646, %v773
      %v776 = vunpack.c.l.s4 1983009808
      %v777 = vunpack.c.0.s8 %v776
      %v778 = vlaneseq
      %v779 = vshrl.u32 %v778, 7
      %v780 = vsub.s32 %v777, %v779
      %v781 = vrot.slane %v669, %v780
      %v783 = vunpack.c.l.s4 1983009808
      %v784 = vunpack.c.0.s8 %v783
      %v785 = vlaneseq
      %v786 = vshrl.u32 %v785, 7
      %v787 = vsub.s32 %v784, %v786
      %v788 = vrot.slane %v676, %v787
      %v790 = vunpack.c.l.s4 1983009808
      %v791 = vunpack.c.0.s8 %v790
      %v792 = vlaneseq
      %v793 = vshrl.u32 %v792, 7
      %v794 = vsub.s32 %v791, %v793
      %v795 = vrot.slane %v683, %v794
      %v797 = vunpack.c.l.s4 1983009808
      %v798 = vunpack.c.0.s8 %v797
      %v799 = vlaneseq
      %v800 = vshrl.u32 %v799, 7
      %v801 = vsub.s32 %v798, %v800
      %v802 = vrot.slane %v690, %v801
      %v804 = vunpack.c.l.s4 1983009808
      %v805 = vunpack.c.0.s8 %v804
      %v806 = vlaneseq
      %v807 = vshrl.u32 %v806, 7
      %v808 = vsub.s32 %v805, %v807
      %v809 = vrot.slane %v697, %v808
      %v811 = vunpack.c.l.s4 1983009808
      %v812 = vunpack.c.0.s8 %v811
      %v813 = vlaneseq
      %v814 = vshrl.u32 %v813, 7
      %v815 = vsub.s32 %v812, %v814
      %v816 = vrot.slane %v704, %v815
      %v818 = vunpack.c.l.s4 1983009808
      %v819 = vunpack.c.0.s8 %v818
      %v820 = vlaneseq
      %v821 = vshrl.u32 %v820, 7
      %v822 = vsub.s32 %v819, %v821
      %v823 = vrot.slane %v711, %v822
      %v825 = vunpack.c.l.s4 1983009808
      %v826 = vunpack.c.0.s8 %v825
      %v827 = vlaneseq
      %v828 = vshrl.u32 %v827, 7
      %v829 = vsub.s32 %v826, %v828
      %v830 = vrot.slane %v718, %v829
      %v832 = vunpack.c.l.s4 1983009808
      %v833 = vunpack.c.0.s8 %v832
      %v834 = vlaneseq
      %v835 = vshrl.u32 %v834, 7
      %v836 = vsub.s32 %v833, %v835
      %v837 = vrot.slane %v725, %v836
      %v839 = vunpack.c.l.s4 1983009808
      %v840 = vunpack.c.0.s8 %v839
      %v841 = vlaneseq
      %v842 = vshrl.u32 %v841, 7
      %v843 = vsub.s32 %v840, %v842
      %v844 = vrot.slane %v732, %v843
      %v846 = vunpack.c.l.s4 1983009808
      %v847 = vunpack.c.0.s8 %v846
      %v848 = vlaneseq
      %v849 = vshrl.u32 %v848, 7
      %v850 = vsub.s32 %v847, %v849
      %v851 = vrot.slane %v739, %v850
      %v853 = vunpack.c.l.s4 1983009808
      %v854 = vunpack.c.0.s8 %v853
      %v855 = vlaneseq
      %v856 = vshrl.u32 %v855, 7
      %v857 = vsub.s32 %v854, %v856
      %v858 = vrot.slane %v746, %v857
      %v860 = vunpack.c.l.s4 1983009808
      %v861 = vunpack.c.0.s8 %v860
      %v862 = vlaneseq
      %v863 = vshrl.u32 %v862, 7
      %v864 = vsub.s32 %v861, %v863
      %v865 = vrot.slane %v753, %v864
      %v867 = vunpack.c.l.s4 1983009808
      %v868 = vunpack.c.0.s8 %v867
      %v869 = vlaneseq
      %v870 = vshrl.u32 %v869, 7
      %v871 = vsub.s32 %v868, %v870
      %v872 = vrot.slane %v760, %v871
      %v874 = vunpack.c.l.s4 1983009808
      %v875 = vunpack.c.0.s8 %v874
      %v876 = vlaneseq
      %v877 = vshrl.u32 %v876, 7
      %v878 = vsub.s32 %v875, %v877
      %v879 = vrot.slane %v767, %v878
      %v881 = vunpack.c.l.s4 1983009808
      %v882 = vunpack.c.0.s8 %v881
      %v883 = vlaneseq
      %v884 = vshrl.u32 %v883, 7
      %v885 = vsub.s32 %v882, %v884
      %v886 = vrot.slane %v774, %v885
      %v887 = vunpack.c.l.b16 %v781
      %v888 = vunpack.c.l.b16 %v788
      %v889 = vunpack.c.l.b16 %v795
      %v890 = vunpack.c.l.b16 %v802
      %v891 = vunpack.c.l.b16 %v809
      %v892 = vunpack.c.l.b16 %v816
      %v893 = vunpack.c.l.b16 %v823
      %v894 = vunpack.c.l.b16 %v830
      %v895 = vunpack.c.l.b16 %v837
      %v896 = vunpack.c.l.b16 %v844
      %v897 = vunpack.c.l.b16 %v851
      %v898 = vunpack.c.l.b16 %v858
      %v899 = vunpack.c.l.b16 %v865
      %v900 = vunpack.c.l.b16 %v872
      %v901 = vunpack.c.l.b16 %v879
      %v902 = vunpack.c.l.b16 %v886
      %v903 = vrot.slane %v888, 7
      %vm904 = vcmask 1041409
      %v905 = vsel %vm904, %v903, %v887
      %v906 = vrot.slane %v889, 6
      %vm907 = vcmask 1042434
      %v908 = vsel %vm907, %v906, %v905
      %v909 = vrot.slane %v890, 5
      %vm910 = vcmask 1043459
      %v911 = vsel %vm910, %v909, %v908
      %v912 = vrot.slane %v892, 7
      %v913 = vsel %vm904, %v912, %v891
      %v914 = vrot.slane %v893, 6
      %v915 = vsel %vm907, %v914, %v913
      %v916 = vrot.slane %v894, 5
      %v917 = vsel %vm910, %v916, %v915
      %v918 = vrot.slane %v896, 7
      %v919 = vsel %vm904, %v918, %v895
      %v920 = vrot.slane %v897, 6
      %v921 = vsel %vm907, %v920, %v919
      %v922 = vrot.slane %v898, 5
      %v923 = vsel %vm910, %v922, %v921
      %v924 = vrot.slane %v900, 7
      %v925 = vsel %vm904, %v924, %v899
      %v926 = vrot.slane %v901, 6
      %v927 = vsel %vm907, %v926, %v925
      %v928 = vrot.slane %v902, 5
      %v929 = vsel %vm910, %v928, %v927
      %v930 = vpack.c.b16 %v911, %v911
      %v931 = vpack.c.b16 %v917, %v917
      %v932 = vpack.c.b16 %v923, %v923
      %v933 = vpack.c.b16 %v929, %v929
      %v935 = vunpack.c.l.s4 1983009808
      %v936 = vunpack.c.0.s8 %v935
      %v937 = vlaneseq
      %v938 = vshrl.u32 %v937, 7
      %v939 = vsub.s32 %v936, %v938
      %v940 = vrot.slane %v930, %v939
      %v942 = vunpack.c.l.s4 1983009808
      %v943 = vunpack.c.0.s8 %v942
      %v944 = vlaneseq
      %v945 = vshrl.u32 %v944, 7
      %v946 = vsub.s32 %v943, %v945
      %v947 = vrot.slane %v931, %v946
      %v949 = vunpack.c.l.s4 1983009808
      %v950 = vunpack.c.0.s8 %v949
      %v951 = vlaneseq
      %v952 = vshrl.u32 %v951, 7
      %v953 = vsub.s32 %v950, %v952
      %v954 = vrot.slane %v932, %v953
      %v956 = vunpack.c.l.s4 1983009808
      %v957 = vunpack.c.0.s8 %v956
      %v958 = vlaneseq
      %v959 = vshrl.u32 %v958, 7
      %v960 = vsub.s32 %v957, %v959
      %v961 = vrot.slane %v933, %v960
      %vm966 = vcmask 123904
      %967 = vst.msk [vmem:[%s116] sm:$0x3] %vm966, %v940
      %968 = vst.msk [vmem:[%s116 + $0x2] sm:$0x3] %vm966, %v947
      %969 = vst.msk [vmem:[%s116 + $0x4] sm:$0x3] %vm966, %v954
      %970 = vst.msk [vmem:[%s116 + $0x6] sm:$0x3] %vm966, %v961
      %p971 = scmp.lt.s32.totalorder %s12, 1
      %s972 = scalar_select %p971, %s12, 1
      %s973 = smul.addr %s972, 4
      %s974 = smul.addr %s973, 2
      %s975 = scalar_lea.vmem %s1, %s974
      // Predicated region
      $region25: #{combined_model_forward.11} parent=23 // pred_check
        %p976 = pneg %p56
      $region26: #{combined_model_forward.11} parent=23 // pred_check_branch
        %978 = sbr.rel (%p976) target = $region28
      $region27: #{combined_model_forward.11} parent=23 // pred_region
        _
      $region28: #{combined_model_forward.11} parent=23 // pred_fallthru
        _
    $region24: #{combined_model_forward.11} parent=5 // pred_fallthru
      _
    %p979 = scmp.le.s32.totalorder 2, %s7
    // Predicated region
    $region29: #{combined_model_forward.11} parent=5 // pred_check
      %p980 = pneg %p979
    $region30: #{combined_model_forward.11} parent=5 // pred_check_branch
      %982 = sbr.rel (%p980) target = $region32
    $region31: #{combined_model_forward.11} parent=5 // pred_region
      %s983 = ssub.s32 %s7, 2
      // Predicated region
      $region33: #{combined_model_forward.11} parent=31 // pred_check
        %p984 = pneg %p62
      $region34: #{combined_model_forward.11} parent=31 // pred_check_branch
        %986 = sbr.rel (%p984) target = $region36
      $region35: #{combined_model_forward.11} parent=31 // pred_region
        %p987 = scmp.lt.s32.totalorder %s13, 1
        %s988 = scalar_select %p987, %s13, 1
        %s989 = smul.addr %s988, 4
        %s990 = smul.addr %s989, 2
        %s991 = scalar_lea.vmem %s1, %s990
      $region36: #{combined_model_forward.11} parent=31 // pred_fallthru
        _
    $region32: #{combined_model_forward.11} parent=5 // pred_fallthru
      _
  $region6: #{combined_model_forward.11} parent=0 // loop_footer
    %s11 = sadd.s32 1, %s7
  $region7: #{combined_model_forward.11} parent=0 // loop_footer_branch
    %6 = sbr.rel target = $region3
  $region8: #{combined_model_forward.11} parent=0 // loop_exit
    _

// kernel: combined_model_forward.10
$region0: #{combined_model_forward.10}
  #allocation0 [shape = 'u32[]', space=smem, size = 0x4, offset = 0x4, fixed_abs, tag = 'smem constant byte address 0x4 - core index']
  #allocation1 [shape = 'u32[144,128]{1,0:T(1,128)}', space=vmem, size = 0x12000, scoped, tag = 'internal scratch']
  %s0 = inlined_call_operand.vmem [shape: bf16[512,147], index: 0, kind: input, shape index: {}]
  %s1 = inlined_call_operand.vmem [shape: bf16[147,16], index: 1, kind: input, shape index: {}]
  %s2 = inlined_call_operand.vmem [shape: f32[1,16], index: 2, kind: input, shape index: {}]
  %s3 = inlined_call_operand.vmem [shape: bf16[512,16], index: 3, kind: output, shape index: {}]
  %s4 = sld [smem:[#allocation0]]
  $region45: #{combined_model_forward.10} parent=0
    _
  %s6 = ssub.s32 1, %s4
  %s7 = scalar_select 0, %s6, %s4
  loop: start=0, step=1, limit=4
  $region2: #{combined_model_forward.10} parent=0 // loop_pre_header
    _
  $region3: #{combined_model_forward.10} parent=0 // loop_header
    %s9 = sphi 0, %s13
    %p10 = scmp.ge.s32.totalorder %s9, 4
    %s16 = sphi 0, %s28
    %s17 = sphi 0, %s24
    %s18 = sphi 0, %s16
    %s19 = sphi 0, %s17
    %s20 = sphi 0, %s18
    %s21 = sphi 0, %s19
    %s31 = sphi 0, %s33
    %s34 = sphi 0, %s31
    %s35 = sphi 0, %s34
    %s51 = sphi 0, %s35
    %s57 = sphi 0, %s59
    %s60 = sphi 0, %s57
    %s61 = sphi 0, %s60
    %s77 = sphi 0, %s61
    %s83 = sphi 0, %s85
    %s86 = sphi 0, %s83
    %s87 = sphi 0, %s86
    %s103 = sphi 0, %s87
    %s111 = sphi 0, %s113
    %s114 = sphi 0, %s111
    %s115 = sphi 0, %s114
    %s131 = sphi 0, %s115
  $region4: #{combined_model_forward.10} parent=0 // loop_header_branch
    %12 = sbr.rel (%p10) target = $region8
  $region5: #{combined_model_forward.10} parent=0 // loop_body
    %s14 = ssub.s32 %s9, 1
    %s15 = ssub.s32 %s9, 2
    %s22 = sadd.s32 1, %s17
    %p23 = scmp.ge.s32.totalorder %s22, 1
    %s24 = scalar_select %p23, 0, %s22
    %s25 = sadd.s32 1, %s16
    %s26 = scalar_select %p23, %s25, %s16
    %p27 = scmp.ge.s32.totalorder %s26, 2
    %s28 = scalar_select %p27, 0, %s26
    %s29 = ssub.s32 %s16, %s28
    %p30 = scmp.eq.s32.totalorder %s29, 0
    %s32 = sadd.s32 %s31, 1
    %s33 = scalar_select %p30, %s31, %s32
    %p36 = pneg %p30
    %p37 = scmp.eq.s32.totalorder %s9, 1
    %p38 = por %p36, %p37
    %p39 = scmp.ne.s32.totalorder %s31, %s34
    %p40 = scmp.eq.s32.totalorder %s9, 0
    %p41 = por %p39, %p40
    %p42 = scmp.ne.s32.totalorder %s31, %s34
    %p43 = scmp.eq.s32.totalorder %s14, 1
    %p44 = por %p42, %p43
    %p45 = scmp.ne.s32.totalorder %s34, %s35
    %p46 = scmp.eq.s32.totalorder %s14, 0
    %p47 = por %p45, %p46
    %p48 = scmp.ne.s32.totalorder %s34, %s35
    %p49 = scmp.eq.s32.totalorder %s15, 1
    %p50 = por %p48, %p49
    %p52 = scmp.ne.s32.totalorder %s35, %s51
    %p53 = scmp.eq.s32.totalorder %s15, 0
    %p54 = por %p52, %p53
    %s55 = ssub.s32 %s17, %s24
    %p56 = scmp.eq.s32.totalorder %s55, 0
    %s58 = sadd.s32 %s57, 1
    %s59 = scalar_select %p56, %s57, %s58
    %p62 = pneg %p56
    %p63 = scmp.eq.s32.totalorder %s9, 1
    %p64 = por %p62, %p63
    %p65 = scmp.ne.s32.totalorder %s57, %s60
    %p66 = scmp.eq.s32.totalorder %s9, 0
    %p67 = por %p65, %p66
    %p68 = scmp.ne.s32.totalorder %s57, %s60
    %p69 = scmp.eq.s32.totalorder %s14, 1
    %p70 = por %p68, %p69
    %p71 = scmp.ne.s32.totalorder %s60, %s61
    %p72 = scmp.eq.s32.totalorder %s14, 0
    %p73 = por %p71, %p72
    %p74 = scmp.ne.s32.totalorder %s60, %s61
    %p75 = scmp.eq.s32.totalorder %s15, 1
    %p76 = por %p74, %p75
    %p78 = scmp.ne.s32.totalorder %s61, %s77
    %p79 = scmp.eq.s32.totalorder %s15, 0
    %p80 = por %p78, %p79
    %s81 = ssub.s32 %s17, %s24
    %p82 = scmp.eq.s32.totalorder %s81, 0
    %s84 = sadd.s32 %s83, 1
    %s85 = scalar_select %p82, %s83, %s84
    %p88 = pneg %p82
    %p89 = scmp.eq.s32.totalorder %s9, 1
    %p90 = por %p88, %p89
    %p91 = scmp.ne.s32.totalorder %s83, %s86
    %p92 = scmp.eq.s32.totalorder %s9, 0
    %p93 = por %p91, %p92
    %p94 = scmp.ne.s32.totalorder %s83, %s86
    %p95 = scmp.eq.s32.totalorder %s14, 1
    %p96 = por %p94, %p95
    %p97 = scmp.ne.s32.totalorder %s86, %s87
    %p98 = scmp.eq.s32.totalorder %s14, 0
    %p99 = por %p97, %p98
    %p100 = scmp.ne.s32.totalorder %s86, %s87
    %p101 = scmp.eq.s32.totalorder %s15, 1
    %p102 = por %p100, %p101
    %p104 = scmp.ne.s32.totalorder %s87, %s103
    %p105 = scmp.eq.s32.totalorder %s15, 0
    %p106 = por %p104, %p105
    %s107 = ssub.s32 %s16, %s28
    %s108 = ssub.s32 %s17, %s24
    %s109 = sor.u32 %s107, %s108
    %p110 = scmp.eq.s32.totalorder %s109, 0
    %s112 = sadd.s32 %s111, 1
    %s113 = scalar_select %p110, %s111, %s112
    %p116 = pneg %p110
    %p117 = scmp.eq.s32.totalorder %s9, 1
    %p118 = por %p116, %p117
    %p119 = scmp.ne.s32.totalorder %s111, %s114
    %p120 = scmp.eq.s32.totalorder %s9, 0
    %p121 = por %p119, %p120
    %p122 = scmp.ne.s32.totalorder %s111, %s114
    %p123 = scmp.eq.s32.totalorder %s14, 1
    %p124 = por %p122, %p123
    %p125 = scmp.ne.s32.totalorder %s114, %s115
    %p126 = scmp.eq.s32.totalorder %s14, 0
    %p127 = por %p125, %p126
    %p128 = scmp.ne.s32.totalorder %s114, %s115
    %p129 = scmp.eq.s32.totalorder %s15, 1
    %p130 = por %p128, %p129
    %p132 = scmp.ne.s32.totalorder %s115, %s131
    %p133 = scmp.eq.s32.totalorder %s15, 0
    %p134 = por %p132, %p133
    %p135 = scmp.le.s32.totalorder 1, %s9
    %p136 = scmp.lt.s32.totalorder %s9, 3
    %p137 = pnand %p135, %p136
    %p138 = pneg %p137
    // Predicated region
    $region9: #{combined_model_forward.10} parent=5 // pred_check
      _
    $region10: #{combined_model_forward.10} parent=5 // pred_check_branch
      %140 = sbr.rel (%p137) target = $region12
    $region11: #{combined_model_forward.10} parent=5 // pred_region
      %s141 = ssub.s32 %s9, 1
      // Predicated region
      $region13: #{combined_model_forward.10} parent=11 // pred_check
        %p142 = pneg %p73
      $region14: #{combined_model_forward.10} parent=11 // pred_check_branch
        %144 = sbr.rel (%p142) target = $region16
      $region15: #{combined_model_forward.10} parent=11 // pred_region
        %p145 = scmp.lt.s32.totalorder %s19, 0
        %s146 = scalar_select %p145, %s19, 0
        %s147 = smul.addr %s146, 4
        %s148 = scalar_lea.vmem %s1, %s147
      $region16: #{combined_model_forward.10} parent=11 // pred_fallthru
        _
      // Predicated region
      $region17: #{combined_model_forward.10} parent=11 // pred_check
        %p149 = pneg %p99
      $region18: #{combined_model_forward.10} parent=11 // pred_check_branch
        %151 = sbr.rel (%p149) target = $region20
      $region19: #{combined_model_forward.10} parent=11 // pred_region
        %p152 = scmp.lt.s32.totalorder %s19, 0
        %s153 = scalar_select %p152, %s19, 0
        %s154 = scalar_lea.vmem %s2, %s153
      $region20: #{combined_model_forward.10} parent=11 // pred_fallthru
        _
    $region12: #{combined_model_forward.10} parent=5 // pred_fallthru
      _
    %p155 = scmp.lt.s32.totalorder %s9, 2
    // Predicated region
    $region21: #{combined_model_forward.10} parent=5 // pred_check
      %p156 = pneg %p155
    $region22: #{combined_model_forward.10} parent=5 // pred_check_branch
      %158 = sbr.rel (%p156) target = $region24
    $region23: #{combined_model_forward.10} parent=5 // pred_region
      // Predicated region
      $region25: #{combined_model_forward.10} parent=23 // pred_check
        %p159 = pneg %p41
      $region26: #{combined_model_forward.10} parent=23 // pred_check_branch
        %161 = sbr.rel (%p159) target = $region28
      $region27: #{combined_model_forward.10} parent=23 // pred_region
        %s162 = smul.u32 32, %s16
        %p163 = scmp.lt.s32.totalorder %s162, 63
        %s164 = scalar_select %p163, %s162, 63
        %s165 = smul.addr %s164, 2
        %s166 = smul.addr %s165, 4
        %s167 = scalar_lea.vmem %s0, %s166
        %s168 = smul.u32 32, %s16
      $region28: #{combined_model_forward.10} parent=23 // pred_fallthru
        _
    $region24: #{combined_model_forward.10} parent=5 // pred_fallthru
      _
    %p169 = scmp.le.s32.totalorder 1, %s9
    %p170 = scmp.lt.s32.totalorder %s9, 3
    %p171 = pnand %p169, %p170
    %p172 = pneg %p171
    // Predicated region
    $region29: #{combined_model_forward.10} parent=5 // pred_check
      _
    $region30: #{combined_model_forward.10} parent=5 // pred_check_branch
      %174 = sbr.rel (%p171) target = $region32
    $region31: #{combined_model_forward.10} parent=5 // pred_region
      %s175 = ssub.s32 %s9, 1
      %s176 = smul.u32 32, %s18
      %p177 = scmp.lt.s32.totalorder %s176, 63
      %s178 = scalar_select %p177, %s176, 63
      %s179 = smul.addr %s178, 2
      %s180 = smul.addr %s179, 4
      %s181 = scalar_lea.vmem %s0, %s180
      %p182 = pneg %p47
      %p183 = pneg %p44
      %p184 = scmp.lt.s32.totalorder %s19, 0
      %s185 = scalar_select %p184, %s19, 0
      %s186 = smul.addr %s185, 4
      %s187 = scalar_lea.vmem %s1, %s186
      %p188 = pneg %p73
      %p189 = pneg %p70
      %p190 = scmp.lt.s32.totalorder %s19, 0
      %s191 = scalar_select %p190, %s19, 0
      %s192 = scalar_lea.vmem %s2, %s191
      %p193 = pneg %p99
      %p194 = pneg %p96
      %p195 = pneg %p127
      %p196 = pneg %p124
      %s197 = smul.u32 32, %s18
      %p198 = scmp.lt.s32.totalorder %s197, 63
      %s199 = scalar_select %p198, %s197, 63
      %p200 = scmp.lt.s32.totalorder %s19, 0
      %s201 = scalar_select %p200, %s19, 0
      %s202 = sadd.s32 %s201, %s199
      %s203 = smul.addr %s202, 4
      %s204 = scalar_lea.vmem %s3, %s203
      %s205 = smul.u32 32, %s18
      %p206 = scmp.lt.s32.totalorder %s205, 63
      %s207 = scalar_select %p206, %s205, 63
      %s208 = smul.addr %s207, 2
      %s209 = smul.addr %s208, 4
      %s210 = scalar_lea.vmem %s0, %s209
      %s211 = smul.u32 32, %s18
      %p212 = scmp.lt.s32.totalorder %s19, 0
      %s213 = scalar_select %p212, %s19, 0
      %s214 = smul.addr %s213, 4
      %s215 = scalar_lea.vmem %s1, %s214
      %p216 = scmp.lt.s32.totalorder %s19, 0
      %s217 = scalar_select %p216, %s19, 0
      %s218 = scalar_lea.vmem %s2, %s217
      %s219 = smul.u32 32, %s18
      %p220 = scmp.lt.s32.totalorder %s219, 63
      %s221 = scalar_select %p220, %s219, 63
      %p222 = scmp.lt.s32.totalorder %s19, 0
      %s223 = scalar_select %p222, %s19, 0
      %s224 = sadd.s32 %s223, %s221
      %s225 = smul.addr %s224, 4
      %s226 = scalar_lea.vmem %s3, %s225
      %s227 = smul.u32 32, %s18
      %v229 = vld [vmem:[%s210] sm:$0xff]
      %v230 = vld [vmem:[%s210 + $0x8] sm:$0xff]
      %v231 = vld [vmem:[%s210 + $0x10] sm:$0xff]
      %v232 = vld [vmem:[%s210 + $0x18] sm:$0xff]
      %v233 = vld [vmem:[%s210 + $0x20] sm:$0xff]
      %v234 = vld [vmem:[%s210 + $0x28] sm:$0xff]
      %v235 = vld [vmem:[%s210 + $0x30] sm:$0xff]
      %v236 = vld [vmem:[%s210 + $0x38] sm:$0xff]
      %v237 = vld [vmem:[%s210 + $0x40] sm:$0xff]
      %v238 = vld [vmem:[%s210 + $0x48] sm:$0xff]
      %v239 = vld [vmem:[%s210 + $0x50] sm:$0xff]
      %v240 = vld [vmem:[%s210 + $0x58] sm:$0xff]
      %v241 = vld [vmem:[%s210 + $0x60] sm:$0xff]
      %v242 = vld [vmem:[%s210 + $0x68] sm:$0xff]
      %v243 = vld [vmem:[%s210 + $0x70] sm:$0xff]
      %v244 = vld [vmem:[%s210 + $0x78] sm:$0xff]
      %v245 = vld [vmem:[%s210 + $0x80] sm:$0xff]
      %v246 = vld [vmem:[%s210 + $0x88] sm:$0xff]
      %v247 = vld [vmem:[%s210 + $0x90] sm:$0xff]
      %v248 = vld [vmem:[%s210 + $0x98] sm:$0xff]
      %v249 = vld [vmem:[%s210 + $0xa0] sm:$0xff]
      %v250 = vld [vmem:[%s210 + $0xa8] sm:$0xff]
      %v251 = vld [vmem:[%s210 + $0xb0] sm:$0xff]
      %v252 = vld [vmem:[%s210 + $0xb8] sm:$0xff]
      %v253 = vld [vmem:[%s210 + $0xc0] sm:$0xff]
      %v254 = vld [vmem:[%s210 + $0xc8] sm:$0xff]
      %v255 = vld [vmem:[%s210 + $0xd0] sm:$0xff]
      %v256 = vld [vmem:[%s210 + $0xd8] sm:$0xff]
      %v257 = vld [vmem:[%s210 + $0xe0] sm:$0xff]
      %v258 = vld [vmem:[%s210 + $0xe8] sm:$0xff]
      %v259 = vld [vmem:[%s210 + $0xf0] sm:$0xff]
      %v260 = vld [vmem:[%s210 + $0xf8] sm:$0xff]
      %v261 = vld [vmem:[%s215] sm:$0xf]
      %v262 = vld [vmem:[%s215 + $0x4] sm:$0xf]
      %v263 = vld [vmem:[%s215 + $0x8] sm:$0xf]
      %v264 = vld [vmem:[%s215 + $0xc] sm:$0xf]
      %v265 = vld [vmem:[%s215 + $0x10] sm:$0xf]
      %v266 = vld [vmem:[%s215 + $0x14] sm:$0xf]
      %v267 = vld [vmem:[%s215 + $0x18] sm:$0xf]
      %v268 = vld [vmem:[%s215 + $0x1c] sm:$0xf]
      %v269 = vld [vmem:[%s215 + $0x20] sm:$0xf]
      %v270 = vld [vmem:[%s215 + $0x24] sm:$0xf]
      %v271 = vld [vmem:[%s215 + $0x28] sm:$0xf]
      %v272 = vld [vmem:[%s215 + $0x2c] sm:$0xf]
      %v273 = vld [vmem:[%s215 + $0x30] sm:$0xf]
      %v274 = vld [vmem:[%s215 + $0x34] sm:$0xf]
      %v275 = vld [vmem:[%s215 + $0x38] sm:$0xf]
      %v276 = vld [vmem:[%s215 + $0x3c] sm:$0xf]
      %v277 = vld [vmem:[%s215 + $0x40] sm:$0xf]
      %v278 = vld [vmem:[%s215 + $0x44] sm:$0xf]
      %v279 = vld [vmem:[%s215 + $0x48] sm:$0x3]
      %v280 = vld [vmem:[%s218] sm:$0x1]
      %v282 = vlaneseq
      %v283 = vshrl.u32 %v282, 7
      %v284 = vsub.s32 0, %v283
      %v285 = vrot.slane %v280, %v284
      %v319 = vunpack.c.l.b16 %v229
      %v320 = vunpack.c.h.b16 %v229
      %v321 = vunpack.c.l.b16 %v230
      %v322 = vunpack.c.h.b16 %v230
      %v323 = vunpack.c.l.b16 %v231
      %v324 = vunpack.c.h.b16 %v231
      %v325 = vunpack.c.l.b16 %v232
      %v326 = vunpack.c.h.b16 %v232
      %v327 = vunpack.c.l.b16 %v233
      %v328 = vunpack.c.h.b16 %v233
      %v329 = vunpack.c.l.b16 %v234
      %v330 = vunpack.c.h.b16 %v234
      %v331 = vunpack.c.l.b16 %v235
      %v332 = vunpack.c.h.b16 %v235
      %v333 = vunpack.c.l.b16 %v236
      %v334 = vunpack.c.h.b16 %v236
      %v335 = vunpack.c.l.b16 %v237
      %v336 = vunpack.c.h.b16 %v237
      %v337 = vunpack.c.l.b16 %v238
      %v338 = vunpack.c.h.b16 %v238
      %v339 = vunpack.c.l.b16 %v239
      %v340 = vunpack.c.h.b16 %v239
      %v341 = vunpack.c.l.b16 %v240
      %v342 = vunpack.c.h.b16 %v240
      %v343 = vunpack.c.l.b16 %v241
      %v344 = vunpack.c.h.b16 %v241
      %v345 = vunpack.c.l.b16 %v242
      %v346 = vunpack.c.h.b16 %v242
      %v347 = vunpack.c.l.b16 %v243
      %v348 = vunpack.c.h.b16 %v243
      %v349 = vunpack.c.l.b16 %v244
      %v350 = vunpack.c.h.b16 %v244
      %v351 = vunpack.c.l.b16 %v245
      %v352 = vunpack.c.h.b16 %v245
      %v353 = vunpack.c.l.b16 %v246
      %v354 = vunpack.c.h.b16 %v246
      %v355 = vunpack.c.l.b16 %v247
      %v356 = vunpack.c.h.b16 %v247
      %v357 = vunpack.c.l.b16 %v248
      %v358 = vunpack.c.h.b16 %v248
      %v359 = vunpack.c.l.b16 %v249
      %v360 = vunpack.c.h.b16 %v249
      %v361 = vunpack.c.l.b16 %v250
      %v362 = vunpack.c.h.b16 %v250
      %v363 = vunpack.c.l.b16 %v251
      %v364 = vunpack.c.h.b16 %v251
      %v365 = vunpack.c.l.b16 %v252
      %v366 = vunpack.c.h.b16 %v252
      %v367 = vunpack.c.l.b16 %v253
      %v368 = vunpack.c.h.b16 %v253
      %v369 = vunpack.c.l.b16 %v254
      %v370 = vunpack.c.h.b16 %v254
      %v371 = vunpack.c.l.b16 %v255
      %v372 = vunpack.c.h.b16 %v255
      %v373 = vunpack.c.l.b16 %v256
      %v374 = vunpack.c.h.b16 %v256
      %v375 = vunpack.c.l.b16 %v257
      %v376 = vunpack.c.h.b16 %v257
      %v377 = vunpack.c.l.b16 %v258
      %v378 = vunpack.c.h.b16 %v258
      %v379 = vunpack.c.l.b16 %v259
      %v380 = vunpack.c.h.b16 %v259
      %v381 = vunpack.c.l.b16 %v260
      %v382 = vunpack.c.h.b16 %v260
      %v383 = vpack.c.b16 %v321, %v319
      %v384 = vpack.c.b16 %v322, %v320
      %v385 = vpack.c.b16 %v325, %v323
      %v386 = vpack.c.b16 %v326, %v324
      %v387 = vpack.c.b16 %v329, %v327
      %v388 = vpack.c.b16 %v330, %v328
      %v389 = vpack.c.b16 %v333, %v331
      %v390 = vpack.c.b16 %v334, %v332
      %v391 = vpack.c.b16 %v337, %v335
      %v392 = vpack.c.b16 %v338, %v336
      %v393 = vpack.c.b16 %v341, %v339
      %v394 = vpack.c.b16 %v342, %v340
      %v395 = vpack.c.b16 %v345, %v343
      %v396 = vpack.c.b16 %v346, %v344
      %v397 = vpack.c.b16 %v349, %v347
      %v398 = vpack.c.b16 %v350, %v348
      %v399 = vpack.c.b16 %v353, %v351
      %v400 = vpack.c.b16 %v354, %v352
      %v401 = vpack.c.b16 %v357, %v355
      %v402 = vpack.c.b16 %v358, %v356
      %v403 = vpack.c.b16 %v361, %v359
      %v404 = vpack.c.b16 %v362, %v360
      %v405 = vpack.c.b16 %v365, %v363
      %v406 = vpack.c.b16 %v366, %v364
      %v407 = vpack.c.b16 %v369, %v367
      %v408 = vpack.c.b16 %v370, %v368
      %v409 = vpack.c.b16 %v373, %v371
      %v410 = vpack.c.b16 %v374, %v372
      %v411 = vpack.c.b16 %v377, %v375
      %v412 = vpack.c.b16 %v378, %v376
      %v413 = vpack.c.b16 %v381, %v379
      %v414 = vpack.c.b16 %v382, %v380
      %v450 = vunpack.c.l.b16 %v261
      %v451 = vunpack.c.l.b16 %v262
      %v452 = vunpack.c.l.b16 %v263
      %v453 = vunpack.c.l.b16 %v264
      %v454 = vunpack.c.l.b16 %v265
      %v455 = vunpack.c.l.b16 %v266
      %v456 = vunpack.c.l.b16 %v267
      %v457 = vunpack.c.l.b16 %v268
      %v458 = vunpack.c.l.b16 %v269
      %v459 = vunpack.c.l.b16 %v270
      %v460 = vunpack.c.l.b16 %v271
      %v461 = vunpack.c.l.b16 %v272
      %v462 = vunpack.c.l.b16 %v273
      %v463 = vunpack.c.l.b16 %v274
      %v464 = vunpack.c.l.b16 %v275
      %v465 = vunpack.c.l.b16 %v276
      %v466 = vunpack.c.l.b16 %v277
      %v467 = vunpack.c.l.b16 %v278
      %v468 = vunpack.c.l.b16 %v279
      %v469 = vpack.c.b16 %v451, %v450
      %v470 = vpack.c.b16 %v453, %v452
      %v471 = vpack.c.b16 %v455, %v454
      %v472 = vpack.c.b16 %v457, %v456
      %v473 = vpack.c.b16 %v459, %v458
      %v474 = vpack.c.b16 %v461, %v460
      %v475 = vpack.c.b16 %v463, %v462
      %v476 = vpack.c.b16 %v465, %v464
      %v477 = vpack.c.b16 %v467, %v466
      %v478 = vpack.c.b16 %v468, %v468
      %vm488 = vcmask 154624
      %v490 = vsel %vm488, %v384, 0
      %v493 = vsel %vm488, %v386, 0
      %v496 = vsel %vm488, %v388, 0
      %v499 = vsel %vm488, %v390, 0
      %v502 = vsel %vm488, %v392, 0
      %v505 = vsel %vm488, %v394, 0
      %v508 = vsel %vm488, %v396, 0
      %v511 = vsel %vm488, %v398, 0
      %v514 = vsel %vm488, %v400, 0
      %v517 = vsel %vm488, %v402, 0
      %v520 = vsel %vm488, %v404, 0
      %v523 = vsel %vm488, %v406, 0
      %v526 = vsel %vm488, %v408, 0
      %v529 = vsel %vm488, %v410, 0
      %v532 = vsel %vm488, %v412, 0
      %v535 = vsel %vm488, %v414, 0
      %vm537 = vcmask 1040384
      %vm538 = vcmask 1041408
      %v539 = vsel %vm537, 4294967295, 65535
      %v540 = vsel %vm538, %v539, 0
      %v542 = vand.u32 %v478, %v540
      %544 = vmatprep.subr.bf16.mxu0 0
      %545 = vmatpush1.bf16.msra.mxu0 %v476
      %546 = vmatprep.subr.bf16.mxu0 0
      %547 = vmatpush1.bf16.msra.mxu0 %v475
      %548 = vmatprep.subr.bf16.mxu0 0
      %549 = vmatpush1.bf16.msra.mxu0 %v474
      %550 = vmatprep.subr.bf16.mxu0 0
      %551 = vmatpush1.bf16.msra.mxu0 %v473
      %552 = vmatprep.subr.bf16.mxu0 0
      %553 = vmatpush1.bf16.msra.mxu0 %v472
      %554 = vmatprep.subr.bf16.mxu0 0
      %555 = vmatpush1.bf16.msra.mxu0 %v471
      %556 = vmatprep.subr.bf16.mxu0 0
      %557 = vmatpush1.bf16.msra.mxu0 %v470
      %558 = vmatprep.subr.bf16.mxu0 0
      %559 = vmatpush1.bf16.msra.mxu0 %v469
      %560 = vmatprep.subr.bf16.mxu0 0
      %561 = vmatpush2.bf16.msra.mxu0 0
      %562 = vmatprep.subr.bf16.mxu0 0
      %563 = vmatpush2.bf16.msra.mxu0 0
      %564 = vmatprep.subr.bf16.mxu0 0
      %565 = vmatpush2.bf16.msra.mxu0 0
      %566 = vmatprep.subr.bf16.mxu0 0
      %567 = vmatpush2.bf16.msra.mxu0 0
      %568 = vmatprep.subr.bf16.mxu0 0
      %569 = vmatpush2.bf16.msra.mxu0 0
      %570 = vmatprep.subr.bf16.mxu0 0
      %571 = vmatpush2.bf16.msra.mxu0 0
      %572 = vmatprep.subr.bf16.mxu0 0
      %573 = vmatpush2.bf16.msra.mxu0 %v542
      %574 = vmatprep.subr.bf16.mxu0 0
      %575 = vmatpush2.bf16.msra.mxu0 %v477
      %576 = vmatprep.mubr.bf16.mxu0 %v490
      %577 = vmatmul.mubr.bf16.gmra.mxu0 %v383
      %v578 = vpop.f32.mrf.mxu0
      %v579 = vadd.f32 %v285, %v578
      %v580 = vpop.f32.mrf.mxu0
      %v581 = vpop.f32.mrf.mxu0
      %v582 = vadd.f32 %v285, %v581
      %v583 = vpop.f32.mrf.mxu0
      %584 = vmatprep.mubr.bf16.mxu0 %v493
      %585 = vmatmul.mubr.bf16.gmra.mxu0 %v385
      %v586 = vpop.f32.mrf.mxu0
      %v587 = vadd.f32 %v285, %v586
      %v588 = vpop.f32.mrf.mxu0
      %v589 = vpop.f32.mrf.mxu0
      %v590 = vadd.f32 %v285, %v589
      %v591 = vpop.f32.mrf.mxu0
      %592 = vmatprep.mubr.bf16.mxu0 %v496
      %593 = vmatmul.mubr.bf16.gmra.mxu0 %v387
      %v594 = vpop.f32.mrf.mxu0
      %v595 = vadd.f32 %v285, %v594
      %v596 = vpop.f32.mrf.mxu0
      %v597 = vpop.f32.mrf.mxu0
      %v598 = vadd.f32 %v285, %v597
      %v599 = vpop.f32.mrf.mxu0
      %600 = vmatprep.mubr.bf16.mxu0 %v499
      %601 = vmatmul.mubr.bf16.gmra.mxu0 %v389
      %v602 = vpop.f32.mrf.mxu0
      %v603 = vadd.f32 %v285, %v602
      %v604 = vpop.f32.mrf.mxu0
      %v605 = vpop.f32.mrf.mxu0
      %v606 = vadd.f32 %v285, %v605
      %v607 = vpop.f32.mrf.mxu0
      %608 = vmatprep.mubr.bf16.mxu0 %v502
      %609 = vmatmul.mubr.bf16.gmra.mxu0 %v391
      %v610 = vpop.f32.mrf.mxu0
      %v611 = vadd.f32 %v285, %v610
      %v612 = vpop.f32.mrf.mxu0
      %v613 = vpop.f32.mrf.mxu0
      %v614 = vadd.f32 %v285, %v613
      %v615 = vpop.f32.mrf.mxu0
      %616 = vmatprep.mubr.bf16.mxu0 %v505
      %617 = vmatmul.mubr.bf16.gmra.mxu0 %v393
      %v618 = vpop.f32.mrf.mxu0
      %v619 = vadd.f32 %v285, %v618
      %v620 = vpop.f32.mrf.mxu0
      %v621 = vpop.f32.mrf.mxu0
      %v622 = vadd.f32 %v285, %v621
      %v623 = vpop.f32.mrf.mxu0
      %624 = vmatprep.mubr.bf16.mxu0 %v508
      %625 = vmatmul.mubr.bf16.gmra.mxu0 %v395
      %v626 = vpop.f32.mrf.mxu0
      %v627 = vadd.f32 %v285, %v626
      %v628 = vpop.f32.mrf.mxu0
      %v629 = vpop.f32.mrf.mxu0
      %v630 = vadd.f32 %v285, %v629
      %v631 = vpop.f32.mrf.mxu0
      %632 = vmatprep.mubr.bf16.mxu0 %v511
      %633 = vmatmul.mubr.bf16.gmra.mxu0 %v397
      %v634 = vpop.f32.mrf.mxu0
      %v635 = vadd.f32 %v285, %v634
      %v636 = vpop.f32.mrf.mxu0
      %v637 = vpop.f32.mrf.mxu0
      %v638 = vadd.f32 %v285, %v637
      %v639 = vpop.f32.mrf.mxu0
      %640 = vmatprep.mubr.bf16.mxu0 %v514
      %641 = vmatmul.mubr.bf16.gmra.mxu0 %v399
      %v642 = vpop.f32.mrf.mxu0
      %v643 = vadd.f32 %v285, %v642
      %v644 = vpop.f32.mrf.mxu0
      %v645 = vpop.f32.mrf.mxu0
      %v646 = vadd.f32 %v285, %v645
      %v647 = vpop.f32.mrf.mxu0
      %648 = vmatprep.mubr.bf16.mxu0 %v517
      %649 = vmatmul.mubr.bf16.gmra.mxu0 %v401
      %v650 = vpop.f32.mrf.mxu0
      %v651 = vadd.f32 %v285, %v650
      %v652 = vpop.f32.mrf.mxu0
      %v653 = vpop.f32.mrf.mxu0
      %v654 = vadd.f32 %v285, %v653
      %v655 = vpop.f32.mrf.mxu0
      %656 = vmatprep.mubr.bf16.mxu0 %v520
      %657 = vmatmul.mubr.bf16.gmra.mxu0 %v403
      %v658 = vpop.f32.mrf.mxu0
      %v659 = vadd.f32 %v285, %v658
      %v660 = vpop.f32.mrf.mxu0
      %v661 = vpop.f32.mrf.mxu0
      %v662 = vadd.f32 %v285, %v661
      %v663 = vpop.f32.mrf.mxu0
      %664 = vmatprep.mubr.bf16.mxu0 %v523
      %665 = vmatmul.mubr.bf16.gmra.mxu0 %v405
      %v666 = vpop.f32.mrf.mxu0
      %v667 = vadd.f32 %v285, %v666
      %v668 = vpop.f32.mrf.mxu0
      %v669 = vpop.f32.mrf.mxu0
      %v670 = vadd.f32 %v285, %v669
      %v671 = vpop.f32.mrf.mxu0
      %672 = vmatprep.mubr.bf16.mxu0 %v526
      %673 = vmatmul.mubr.bf16.gmra.mxu0 %v407
      %v674 = vpop.f32.mrf.mxu0
      %v675 = vadd.f32 %v285, %v674
      %v676 = vpop.f32.mrf.mxu0
      %v677 = vpop.f32.mrf.mxu0
      %v678 = vadd.f32 %v285, %v677
      %v679 = vpop.f32.mrf.mxu0
      %680 = vmatprep.mubr.bf16.mxu0 %v529
      %681 = vmatmul.mubr.bf16.gmra.mxu0 %v409
      %v682 = vpop.f32.mrf.mxu0
      %v683 = vadd.f32 %v285, %v682
      %v684 = vpop.f32.mrf.mxu0
      %v685 = vpop.f32.mrf.mxu0
      %v686 = vadd.f32 %v285, %v685
      %v687 = vpop.f32.mrf.mxu0
      %688 = vmatprep.mubr.bf16.mxu0 %v532
      %689 = vmatmul.mubr.bf16.gmra.mxu0 %v411
      %v690 = vpop.f32.mrf.mxu0
      %v691 = vadd.f32 %v285, %v690
      %v692 = vpop.f32.mrf.mxu0
      %v693 = vpop.f32.mrf.mxu0
      %v694 = vadd.f32 %v285, %v693
      %v695 = vpop.f32.mrf.mxu0
      %696 = vmatprep.mubr.bf16.mxu0 %v535
      %697 = vmatmul.mubr.bf16.gmra.mxu0 %v413
      %v698 = vpop.f32.mrf.mxu0
      %v699 = vadd.f32 %v285, %v698
      %v700 = vpop.f32.mrf.mxu0
      %v701 = vpop.f32.mrf.mxu0
      %v702 = vadd.f32 %v285, %v701
      %v703 = vpop.f32.mrf.mxu0
      %704 = vdwg.mxu0
      %v705 = vmax.f32 %v579, 0.0
      %v706 = vmax.f32 %v582, 0.0
      %v707 = vmax.f32 %v587, 0.0
      %v708 = vmax.f32 %v590, 0.0
      %v709 = vmax.f32 %v595, 0.0
      %v710 = vmax.f32 %v598, 0.0
      %v711 = vmax.f32 %v603, 0.0
      %v712 = vmax.f32 %v606, 0.0
      %v713 = vmax.f32 %v611, 0.0
      %v714 = vmax.f32 %v614, 0.0
      %v715 = vmax.f32 %v619, 0.0
      %v716 = vmax.f32 %v622, 0.0
      %v717 = vmax.f32 %v627, 0.0
      %v718 = vmax.f32 %v630, 0.0
      %v719 = vmax.f32 %v635, 0.0
      %v720 = vmax.f32 %v638, 0.0
      %v721 = vmax.f32 %v643, 0.0
      %v722 = vmax.f32 %v646, 0.0
      %v723 = vmax.f32 %v651, 0.0
      %v724 = vmax.f32 %v654, 0.0
      %v725 = vmax.f32 %v659, 0.0
      %v726 = vmax.f32 %v662, 0.0
      %v727 = vmax.f32 %v667, 0.0
      %v728 = vmax.f32 %v670, 0.0
      %v729 = vmax.f32 %v675, 0.0
      %v730 = vmax.f32 %v678, 0.0
      %v731 = vmax.f32 %v683, 0.0
      %v732 = vmax.f32 %v686, 0.0
      %v733 = vmax.f32 %v691, 0.0
      %v734 = vmax.f32 %v694, 0.0
      %v735 = vmax.f32 %v699, 0.0
      %v736 = vmax.f32 %v702, 0.0
      %v737 = vpack.c.bf16 %v706, %v705
      %v738 = vpack.c.bf16 %v708, %v707
      %v739 = vpack.c.bf16 %v710, %v709
      %v740 = vpack.c.bf16 %v712, %v711
      %v741 = vpack.c.bf16 %v714, %v713
      %v742 = vpack.c.bf16 %v716, %v715
      %v743 = vpack.c.bf16 %v718, %v717
      %v744 = vpack.c.bf16 %v720, %v719
      %v745 = vpack.c.bf16 %v722, %v721
      %v746 = vpack.c.bf16 %v724, %v723
      %v747 = vpack.c.bf16 %v726, %v725
      %v748 = vpack.c.bf16 %v728, %v727
      %v749 = vpack.c.bf16 %v730, %v729
      %v750 = vpack.c.bf16 %v732, %v731
      %v751 = vpack.c.bf16 %v734, %v733
      %v752 = vpack.c.bf16 %v736, %v735
      %v769 = vunpack.c.l.b16 %v737
      %v770 = vunpack.c.h.b16 %v737
      %v771 = vunpack.c.l.b16 %v738
      %v772 = vunpack.c.h.b16 %v738
      %v773 = vunpack.c.l.b16 %v739
      %v774 = vunpack.c.h.b16 %v739
      %v775 = vunpack.c.l.b16 %v740
      %v776 = vunpack.c.h.b16 %v740
      %v777 = vunpack.c.l.b16 %v741
      %v778 = vunpack.c.h.b16 %v741
      %v779 = vunpack.c.l.b16 %v742
      %v780 = vunpack.c.h.b16 %v742
      %v781 = vunpack.c.l.b16 %v743
      %v782 = vunpack.c.h.b16 %v743
      %v783 = vunpack.c.l.b16 %v744
      %v784 = vunpack.c.h.b16 %v744
      %v785 = vunpack.c.l.b16 %v745
      %v786 = vunpack.c.h.b16 %v745
      %v787 = vunpack.c.l.b16 %v746
      %v788 = vunpack.c.h.b16 %v746
      %v789 = vunpack.c.l.b16 %v747
      %v790 = vunpack.c.h.b16 %v747
      %v791 = vunpack.c.l.b16 %v748
      %v792 = vunpack.c.h.b16 %v748
      %v793 = vunpack.c.l.b16 %v749
      %v794 = vunpack.c.h.b16 %v749
      %v795 = vunpack.c.l.b16 %v750
      %v796 = vunpack.c.h.b16 %v750
      %v797 = vunpack.c.l.b16 %v751
      %v798 = vunpack.c.h.b16 %v751
      %v799 = vunpack.c.l.b16 %v752
      %v800 = vunpack.c.h.b16 %v752
      %v801 = vpack.c.b16 %v769, %v769
      %v802 = vpack.c.b16 %v770, %v770
      %v803 = vpack.c.b16 %v771, %v771
      %v804 = vpack.c.b16 %v772, %v772
      %v805 = vpack.c.b16 %v773, %v773
      %v806 = vpack.c.b16 %v774, %v774
      %v807 = vpack.c.b16 %v775, %v775
      %v808 = vpack.c.b16 %v776, %v776
      %v809 = vpack.c.b16 %v777, %v777
      %v810 = vpack.c.b16 %v778, %v778
      %v811 = vpack.c.b16 %v779, %v779
      %v812 = vpack.c.b16 %v780, %v780
      %v813 = vpack.c.b16 %v781, %v781
      %v814 = vpack.c.b16 %v782, %v782
      %v815 = vpack.c.b16 %v783, %v783
      %v816 = vpack.c.b16 %v784, %v784
      %v817 = vpack.c.b16 %v785, %v785
      %v818 = vpack.c.b16 %v786, %v786
      %v819 = vpack.c.b16 %v787, %v787
      %v820 = vpack.c.b16 %v788, %v788
      %v821 = vpack.c.b16 %v789, %v789
      %v822 = vpack.c.b16 %v790, %v790
      %v823 = vpack.c.b16 %v791, %v791
      %v824 = vpack.c.b16 %v792, %v792
      %v825 = vpack.c.b16 %v793, %v793
      %v826 = vpack.c.b16 %v794, %v794
      %v827 = vpack.c.b16 %v795, %v795
      %v828 = vpack.c.b16 %v796, %v796
      %v829 = vpack.c.b16 %v797, %v797
      %v830 = vpack.c.b16 %v798, %v798
      %v831 = vpack.c.b16 %v799, %v799
      %v832 = vpack.c.b16 %v800, %v800
      %vm865 = vcmask 125952
      %866 = vst.msk [vmem:[%s226] sm:$0xf] %vm865, %v801
      %867 = vst.msk [vmem:[%s226 + $0x4] sm:$0xf] %vm865, %v802
      %868 = vst.msk [vmem:[%s226 + $0x8] sm:$0xf] %vm865, %v803
      %869 = vst.msk [vmem:[%s226 + $0xc] sm:$0xf] %vm865, %v804
      %870 = vst.msk [vmem:[%s226 + $0x10] sm:$0xf] %vm865, %v805
      %871 = vst.msk [vmem:[%s226 + $0x14] sm:$0xf] %vm865, %v806
      %872 = vst.msk [vmem:[%s226 + $0x18] sm:$0xf] %vm865, %v807
      %873 = vst.msk [vmem:[%s226 + $0x1c] sm:$0xf] %vm865, %v808
      %874 = vst.msk [vmem:[%s226 + $0x20] sm:$0xf] %vm865, %v809
      %875 = vst.msk [vmem:[%s226 + $0x24] sm:$0xf] %vm865, %v810
      %876 = vst.msk [vmem:[%s226 + $0x28] sm:$0xf] %vm865, %v811
      %877 = vst.msk [vmem:[%s226 + $0x2c] sm:$0xf] %vm865, %v812
      %878 = vst.msk [vmem:[%s226 + $0x30] sm:$0xf] %vm865, %v813
      %879 = vst.msk [vmem:[%s226 + $0x34] sm:$0xf] %vm865, %v814
      %880 = vst.msk [vmem:[%s226 + $0x38] sm:$0xf] %vm865, %v815
      %881 = vst.msk [vmem:[%s226 + $0x3c] sm:$0xf] %vm865, %v816
      %882 = vst.msk [vmem:[%s226 + $0x40] sm:$0xf] %vm865, %v817
      %883 = vst.msk [vmem:[%s226 + $0x44] sm:$0xf] %vm865, %v818
      %884 = vst.msk [vmem:[%s226 + $0x48] sm:$0xf] %vm865, %v819
      %885 = vst.msk [vmem:[%s226 + $0x4c] sm:$0xf] %vm865, %v820
      %886 = vst.msk [vmem:[%s226 + $0x50] sm:$0xf] %vm865, %v821
      %887 = vst.msk [vmem:[%s226 + $0x54] sm:$0xf] %vm865, %v822
      %888 = vst.msk [vmem:[%s226 + $0x58] sm:$0xf] %vm865, %v823
      %889 = vst.msk [vmem:[%s226 + $0x5c] sm:$0xf] %vm865, %v824
      %890 = vst.msk [vmem:[%s226 + $0x60] sm:$0xf] %vm865, %v825
      %891 = vst.msk [vmem:[%s226 + $0x64] sm:$0xf] %vm865, %v826
      %892 = vst.msk [vmem:[%s226 + $0x68] sm:$0xf] %vm865, %v827
      %893 = vst.msk [vmem:[%s226 + $0x6c] sm:$0xf] %vm865, %v828
      %894 = vst.msk [vmem:[%s226 + $0x70] sm:$0xf] %vm865, %v829
      %895 = vst.msk [vmem:[%s226 + $0x74] sm:$0xf] %vm865, %v830
      %896 = vst.msk [vmem:[%s226 + $0x78] sm:$0xf] %vm865, %v831
      %897 = vst.msk [vmem:[%s226 + $0x7c] sm:$0xf] %vm865, %v832
      %s898 = smul.u32 32, %s18
      %p899 = scmp.lt.s32.totalorder %s898, 63
      %s900 = scalar_select %p899, %s898, 63
      %p901 = scmp.lt.s32.totalorder %s19, 0
      %s902 = scalar_select %p901, %s19, 0
      %s903 = sadd.s32 %s902, %s900
      %s904 = smul.addr %s903, 4
      %s905 = scalar_lea.vmem %s3, %s904
      // Predicated region
      $region33: #{combined_model_forward.10} parent=31 // pred_check
        %p906 = pneg %p124
      $region34: #{combined_model_forward.10} parent=31 // pred_check_branch
        %908 = sbr.rel (%p906) target = $region36
      $region35: #{combined_model_forward.10} parent=31 // pred_region
        %s909 = smul.u32 32, %s18
      $region36: #{combined_model_forward.10} parent=31 // pred_fallthru
        _
    $region32: #{combined_model_forward.10} parent=5 // pred_fallthru
      _
    %p910 = scmp.le.s32.totalorder 2, %s9
    // Predicated region
    $region37: #{combined_model_forward.10} parent=5 // pred_check
      %p911 = pneg %p910
    $region38: #{combined_model_forward.10} parent=5 // pred_check_branch
      %913 = sbr.rel (%p911) target = $region40
    $region39: #{combined_model_forward.10} parent=5 // pred_region
      %s914 = ssub.s32 %s9, 2
      // Predicated region
      $region41: #{combined_model_forward.10} parent=39 // pred_check
        %p915 = pneg %p130
      $region42: #{combined_model_forward.10} parent=39 // pred_check_branch
        %917 = sbr.rel (%p915) target = $region44
      $region43: #{combined_model_forward.10} parent=39 // pred_region
        %s918 = smul.u32 32, %s20
        %p919 = scmp.lt.s32.totalorder %s918, 63
        %s920 = scalar_select %p919, %s918, 63
        %p921 = scmp.lt.s32.totalorder %s21, 0
        %s922 = scalar_select %p921, %s21, 0
        %s923 = sadd.s32 %s922, %s920
        %s924 = smul.addr %s923, 4
        %s925 = scalar_lea.vmem %s3, %s924
      $region44: #{combined_model_forward.10} parent=39 // pred_fallthru
        _
    $region40: #{combined_model_forward.10} parent=5 // pred_fallthru
      _
  $region6: #{combined_model_forward.10} parent=0 // loop_footer
    %s13 = sadd.s32 1, %s9
  $region7: #{combined_model_forward.10} parent=0 // loop_footer_branch
    %8 = sbr.rel target = $region3
  $region8: #{combined_model_forward.10} parent=0 // loop_exit
    _

// kernel: combined_model_forward.18
$region0: #{combined_model_forward.18}
  #allocation0 [shape = 'u32[]', space=smem, size = 0x4, offset = 0x4, fixed_abs, tag = 'smem constant byte address 0x4 - core index']
  #allocation1 [shape = 'u32[144,128]{1,0:T(1,128)}', space=vmem, size = 0x12000, scoped, tag = 'internal scratch']
  %s0 = inlined_call_operand.vmem [shape: bf16[2,16,32], index: 0, kind: input, shape index: {}]
  %s1 = inlined_call_operand.vmem [shape: f32[1,32], index: 1, kind: input, shape index: {}]
  %s2 = inlined_call_operand.vmem [shape: f32[1,32], index: 2, kind: input, shape index: {}]
  %s3 = inlined_call_operand.vmem [shape: f32[2,1,32], index: 3, kind: output, shape index: {}]
  %s4 = sld [smem:[#allocation0]]
  $region45: #{combined_model_forward.18} parent=0
    _
  %s6 = ssub.s32 1, %s4
  %s7 = scalar_select 0, %s6, %s4
  loop: start=0, step=1, limit=4
  $region2: #{combined_model_forward.18} parent=0 // loop_pre_header
    _
  $region3: #{combined_model_forward.18} parent=0 // loop_header
    %s9 = sphi 0, %s13
    %p10 = scmp.ge.s32.totalorder %s9, 4
    %s19 = sphi 0, %s21
    %s22 = sphi 0, %s19
    %s23 = sphi 0, %s22
    %s39 = sphi 0, %s23
    %s43 = sphi 0, %s43
    %s45 = sphi 0, %s43
    %s46 = sphi 0, %s45
    %s60 = sphi 0, %s46
    %s64 = sphi 0, %s64
    %s66 = sphi 0, %s64
    %s67 = sphi 0, %s66
    %s81 = sphi 0, %s67
    %s87 = sphi 0, %s89
    %s90 = sphi 0, %s87
    %s91 = sphi 0, %s90
    %s107 = sphi 0, %s91
  $region4: #{combined_model_forward.18} parent=0 // loop_header_branch
    %12 = sbr.rel (%p10) target = $region8
  $region5: #{combined_model_forward.18} parent=0 // loop_body
    %s14 = ssub.s32 %s9, 1
    %s15 = ssub.s32 %s9, 2
    %s16 = sadd.s32 %s9, 1
    %s17 = ssub.s32 %s9, %s16
    %p18 = scmp.eq.s32.totalorder %s17, 0
    %s20 = sadd.s32 %s19, 1
    %s21 = scalar_select %p18, %s19, %s20
    %p24 = pneg %p18
    %p25 = scmp.eq.s32.totalorder %s9, 1
    %p26 = por %p24, %p25
    %p27 = scmp.ne.s32.totalorder %s19, %s22
    %p28 = scmp.eq.s32.totalorder %s9, 0
    %p29 = por %p27, %p28
    %p30 = scmp.ne.s32.totalorder %s19, %s22
    %p31 = scmp.eq.s32.totalorder %s14, 1
    %p32 = por %p30, %p31
    %p33 = scmp.ne.s32.totalorder %s22, %s23
    %p34 = scmp.eq.s32.totalorder %s14, 0
    %p35 = por %p33, %p34
    %p36 = scmp.ne.s32.totalorder %s22, %s23
    %p37 = scmp.eq.s32.totalorder %s15, 1
    %p38 = por %p36, %p37
    %p40 = scmp.ne.s32.totalorder %s23, %s39
    %p41 = scmp.eq.s32.totalorder %s15, 0
    %p42 = por %p40, %p41
    %s44 = sadd.s32 %s43, 1
    %p47 = scmp.eq.s32.totalorder %s9, 1
    %p48 = scmp.ne.s32.totalorder %s43, %s45
    %p49 = scmp.eq.s32.totalorder %s9, 0
    %p50 = por %p48, %p49
    %p51 = scmp.ne.s32.totalorder %s43, %s45
    %p52 = scmp.eq.s32.totalorder %s14, 1
    %p53 = por %p51, %p52
    %p54 = scmp.ne.s32.totalorder %s45, %s46
    %p55 = scmp.eq.s32.totalorder %s14, 0
    %p56 = por %p54, %p55
    %p57 = scmp.ne.s32.totalorder %s45, %s46
    %p58 = scmp.eq.s32.totalorder %s15, 1
    %p59 = por %p57, %p58
    %p61 = scmp.ne.s32.totalorder %s46, %s60
    %p62 = scmp.eq.s32.totalorder %s15, 0
    %p63 = por %p61, %p62
    %s65 = sadd.s32 %s64, 1
    %p68 = scmp.eq.s32.totalorder %s9, 1
    %p69 = scmp.ne.s32.totalorder %s64, %s66
    %p70 = scmp.eq.s32.totalorder %s9, 0
    %p71 = por %p69, %p70
    %p72 = scmp.ne.s32.totalorder %s64, %s66
    %p73 = scmp.eq.s32.totalorder %s14, 1
    %p74 = por %p72, %p73
    %p75 = scmp.ne.s32.totalorder %s66, %s67
    %p76 = scmp.eq.s32.totalorder %s14, 0
    %p77 = por %p75, %p76
    %p78 = scmp.ne.s32.totalorder %s66, %s67
    %p79 = scmp.eq.s32.totalorder %s15, 1
    %p80 = por %p78, %p79
    %p82 = scmp.ne.s32.totalorder %s67, %s81
    %p83 = scmp.eq.s32.totalorder %s15, 0
    %p84 = por %p82, %p83
    %s85 = ssub.s32 %s9, %s16
    %p86 = scmp.eq.s32.totalorder %s85, 0
    %s88 = sadd.s32 %s87, 1
    %s89 = scalar_select %p86, %s87, %s88
    %p92 = pneg %p86
    %p93 = scmp.eq.s32.totalorder %s9, 1
    %p94 = por %p92, %p93
    %p95 = scmp.ne.s32.totalorder %s87, %s90
    %p96 = scmp.eq.s32.totalorder %s9, 0
    %p97 = por %p95, %p96
    %p98 = scmp.ne.s32.totalorder %s87, %s90
    %p99 = scmp.eq.s32.totalorder %s14, 1
    %p100 = por %p98, %p99
    %p101 = scmp.ne.s32.totalorder %s90, %s91
    %p102 = scmp.eq.s32.totalorder %s14, 0
    %p103 = por %p101, %p102
    %p104 = scmp.ne.s32.totalorder %s90, %s91
    %p105 = scmp.eq.s32.totalorder %s15, 1
    %p106 = por %p104, %p105
    %p108 = scmp.ne.s32.totalorder %s91, %s107
    %p109 = scmp.eq.s32.totalorder %s15, 0
    %p110 = por %p108, %p109
    %p111 = scmp.le.s32.totalorder 1, %s9
    %p112 = scmp.lt.s32.totalorder %s9, 3
    %p113 = pnand %p111, %p112
    %p114 = pneg %p113
    // Predicated region
    $region9: #{combined_model_forward.18} parent=5 // pred_check
      _
    $region10: #{combined_model_forward.18} parent=5 // pred_check_branch
      %116 = sbr.rel (%p113) target = $region12
    $region11: #{combined_model_forward.18} parent=5 // pred_region
      %s117 = ssub.s32 %s9, 1
      // Predicated region
      $region13: #{combined_model_forward.18} parent=11 // pred_check
        %p118 = pneg %p56
      $region14: #{combined_model_forward.18} parent=11 // pred_check_branch
        %120 = sbr.rel (%p118) target = $region16
      $region15: #{combined_model_forward.18} parent=11 // pred_region
        _
      $region16: #{combined_model_forward.18} parent=11 // pred_fallthru
        _
      // Predicated region
      $region17: #{combined_model_forward.18} parent=11 // pred_check
        %p121 = pneg %p77
      $region18: #{combined_model_forward.18} parent=11 // pred_check_branch
        %123 = sbr.rel (%p121) target = $region20
      $region19: #{combined_model_forward.18} parent=11 // pred_region
        _
      $region20: #{combined_model_forward.18} parent=11 // pred_fallthru
        _
    $region12: #{combined_model_forward.18} parent=5 // pred_fallthru
      _
    %p124 = scmp.lt.s32.totalorder %s9, 2
    // Predicated region
    $region21: #{combined_model_forward.18} parent=5 // pred_check
      %p125 = pneg %p124
    $region22: #{combined_model_forward.18} parent=5 // pred_check_branch
      %127 = sbr.rel (%p125) target = $region24
    $region23: #{combined_model_forward.18} parent=5 // pred_region
      // Predicated region
      $region25: #{combined_model_forward.18} parent=23 // pred_check
        %p128 = pneg %p29
      $region26: #{combined_model_forward.18} parent=23 // pred_check_branch
        %130 = sbr.rel (%p128) target = $region28
      $region27: #{combined_model_forward.18} parent=23 // pred_region
        %p131 = scmp.lt.s32.totalorder %s9, 1
        %s132 = scalar_select %p131, %s9, 1
        %s133 = smul.addr %s132, 2
        %s134 = smul.addr %s133, 4
        %s135 = scalar_lea.vmem %s0, %s134
      $region28: #{combined_model_forward.18} parent=23 // pred_fallthru
        _
    $region24: #{combined_model_forward.18} parent=5 // pred_fallthru
      _
    %p136 = scmp.le.s32.totalorder 1, %s9
    %p137 = scmp.lt.s32.totalorder %s9, 3
    %p138 = pnand %p136, %p137
    %p139 = pneg %p138
    // Predicated region
    $region29: #{combined_model_forward.18} parent=5 // pred_check
      _
    $region30: #{combined_model_forward.18} parent=5 // pred_check_branch
      %141 = sbr.rel (%p138) target = $region32
    $region31: #{combined_model_forward.18} parent=5 // pred_region
      %s142 = ssub.s32 %s9, 1
      %p143 = scmp.lt.s32.totalorder %s14, 1
      %s144 = scalar_select %p143, %s14, 1
      %s145 = smul.addr %s144, 2
      %s146 = smul.addr %s145, 4
      %s147 = scalar_lea.vmem %s0, %s146
      %p148 = pneg %p35
      %p149 = pneg %p32
      %p150 = pneg %p56
      %p151 = pneg %p53
      %p152 = pneg %p77
      %p153 = pneg %p74
      %p154 = pneg %p103
      %p155 = pneg %p100
      %p156 = scmp.lt.s32.totalorder %s14, 1
      %s157 = scalar_select %p156, %s14, 1
      %s158 = scalar_lea.vmem %s3, %s157
      %p159 = scmp.lt.s32.totalorder %s14, 1
      %s160 = scalar_select %p159, %s14, 1
      %s161 = smul.addr %s160, 2
      %s162 = smul.addr %s161, 4
      %s163 = scalar_lea.vmem %s0, %s162
      %p164 = scmp.lt.s32.totalorder %s14, 1
      %s165 = scalar_select %p164, %s14, 1
      %s166 = scalar_lea.vmem %s3, %s165
      %v167 = vld [vmem:[%s163] sm:$0xf]
      %v168 = vld [vmem:[%s163 + $0x4] sm:$0xf]
      %v169 = vunpack.c.l.bf16 %v167
      %v170 = vunpack.c.l.bf16 %v168
      %vm171 = vcmask 261120
      %v172 = vsel %vm171, %v169, 0.0
      %173 = vadd.xlane.f32.xlu0 %v172
      %v174 = vpop.xlane.xlu0 %173
      %v175 = vsel %vm171, %v170, 0.0
      %176 = vadd.xlane.f32.xlu0 %v175
      %v177 = vpop.xlane.xlu0 %176
      %v178 = vrcp.pop 32.0
      %v179 = vmul.f32 %v174, %v178
      %v180 = vmul.f32 %v177, %v178
      %v181 = vsub.f32 %v169, %v179
      %v182 = vsub.f32 %v170, %v180
      %v183 = vmul.f32 %v181, %v181
      %v184 = vmul.f32 %v182, %v182
      %v185 = vsel %vm171, %v183, 0.0
      %186 = vadd.xlane.f32.xlu0 %v185
      %v187 = vpop.xlane.xlu0 %186
      %v188 = vsel %vm171, %v184, 0.0
      %189 = vadd.xlane.f32.xlu0 %v188
      %v190 = vpop.xlane.xlu0 %189
      %v191 = vmul.f32 %v187, %v178
      %v192 = vmul.f32 %v190, %v178
      %v193 = vadd.f32 %v191, 1e-05
      %v194 = vadd.f32 %v192, 1e-05
      %v195 = vrsqrt.pop %v193
      %v196 = vrsqrt.pop %v194
      %v197 = vmul.f32 %v181, %v195
      %v198 = vmul.f32 %v182, %v196
      %v199 = vld [vmem:[%s1] sm:$0x1]
      %v201 = vlaneseq
      %v202 = vshrl.u32 %v201, 7
      %v203 = vsub.s32 0, %v202
      %v204 = vrot.slane %v199, %v203
      %v206 = vmul.f32 %v197, %v204
      %v207 = vmul.f32 %v198, %v204
      %v208 = vld [vmem:[%s2] sm:$0x1]
      %v210 = vlaneseq
      %v211 = vshrl.u32 %v210, 7
      %v212 = vsub.s32 0, %v211
      %v213 = vrot.slane %v208, %v212
      %v215 = vadd.f32 %v206, %v213
      %v216 = vadd.f32 %v207, %v213
      %v217 = vsel %vm171, %v215, 0.0
      %v218 = vsel %vm171, %v216, 0.0
      %v219 = vadd.f32 %v217, %v218
      %v220 = vrot.slane %v219, 4
      %v221 = vadd.f32 %v219, %v220
      %v222 = vrot.slane %v221, 2
      %v223 = vadd.f32 %v221, %v222
      %v224 = vrot.slane %v223, 1
      %v225 = vadd.f32 %v223, %v224
      %v226 = vrcp.pop 16.0
      %v227 = vmul.f32 %v225, %v226
      %vm228 = vcmask 253952
      %229 = vst.msk [vmem:[%s166] sm:$0x1] %vm228, %v227
      %p230 = scmp.lt.s32.totalorder %s14, 1
      %s231 = scalar_select %p230, %s14, 1
      %s232 = scalar_lea.vmem %s3, %s231
      // Predicated region
      $region33: #{combined_model_forward.18} parent=31 // pred_check
        %p233 = pneg %p100
      $region34: #{combined_model_forward.18} parent=31 // pred_check_branch
        %235 = sbr.rel (%p233) target = $region36
      $region35: #{combined_model_forward.18} parent=31 // pred_region
        _
      $region36: #{combined_model_forward.18} parent=31 // pred_fallthru
        _
    $region32: #{combined_model_forward.18} parent=5 // pred_fallthru
      _
    %p236 = scmp.le.s32.totalorder 2, %s9
    // Predicated region
    $region37: #{combined_model_forward.18} parent=5 // pred_check
      %p237 = pneg %p236
    $region38: #{combined_model_forward.18} parent=5 // pred_check_branch
      %239 = sbr.rel (%p237) target = $region40
    $region39: #{combined_model_forward.18} parent=5 // pred_region
      %s240 = ssub.s32 %s9, 2
      // Predicated region
      $region41: #{combined_model_forward.18} parent=39 // pred_check
        %p241 = pneg %p106
      $region42: #{combined_model_forward.18} parent=39 // pred_check_branch
        %243 = sbr.rel (%p241) target = $region44
      $region43: #{combined_model_forward.18} parent=39 // pred_region
        %p244 = scmp.lt.s32.totalorder %s15, 1
        %s245 = scalar_select %p244, %s15, 1
        %s246 = scalar_lea.vmem %s3, %s245
      $region44: #{combined_model_forward.18} parent=39 // pred_fallthru
        _
    $region40: #{combined_model_forward.18} parent=5 // pred_fallthru
      _
  $region6: #{combined_model_forward.18} parent=0 // loop_footer
    %s13 = sadd.s32 1, %s9
  $region7: #{combined_model_forward.18} parent=0 // loop_footer_branch
    %8 = sbr.rel target = $region3
  $region8: #{combined_model_forward.18} parent=0 // loop_exit
    _

// kernel: combined_model_forward.15
$region0: #{combined_model_forward.15}
  #allocation0 [shape = 'u32[]', space=smem, size = 0x4, offset = 0x4, fixed_abs, tag = 'smem constant byte address 0x4 - core index']
  #allocation1 [shape = 'u32[144,128]{1,0:T(1,128)}', space=vmem, size = 0x12000, scoped, tag = 'internal scratch']
  %s0 = inlined_call_operand.vmem [shape: bf16[32,32], index: 0, kind: input, shape index: {}, may-alias: {0,5}]
  %s1 = inlined_call_operand.vmem [shape: bf16[32,64], index: 1, kind: input, shape index: {}]
  %s2 = inlined_call_operand.vmem [shape: f32[1,64], index: 2, kind: input, shape index: {}]
  %s3 = inlined_call_operand.vmem [shape: bf16[64,32], index: 3, kind: input, shape index: {}]
  %s4 = inlined_call_operand.vmem [shape: f32[1,32], index: 4, kind: input, shape index: {}]
  %s5 = inlined_call_operand.vmem [shape: bf16[32,32], index: 5, kind: input, shape index: {}, may-alias: {0,5}]
  %s6 = inlined_call_operand.vmem [shape: bf16[32,32], index: 6, kind: output, shape index: {}]
  %s7 = sld [smem:[#allocation0]]
  $region34: #{combined_model_forward.15} parent=0
    _
  %s9 = ssub.s32 1, %s7
  %s10 = scalar_select 0, %s9, %s7
  // Predicated region
  $region2: #{combined_model_forward.15} parent=0 // pred_check
    _
  $region3: #{combined_model_forward.15} parent=0 // pred_check_branch
    %12 = sbr.rel (0) target = $region5
  $region4: #{combined_model_forward.15} parent=0 // pred_region
    _
  $region5: #{combined_model_forward.15} parent=0 // pred_fallthru
    _
  // Predicated region
  $region6: #{combined_model_forward.15} parent=0 // pred_check
    _
  $region7: #{combined_model_forward.15} parent=0 // pred_check_branch
    %14 = sbr.rel (0) target = $region9
  $region8: #{combined_model_forward.15} parent=0 // pred_region
    _
  $region9: #{combined_model_forward.15} parent=0 // pred_fallthru
    _
  // Predicated region
  $region10: #{combined_model_forward.15} parent=0 // pred_check
    _
  $region11: #{combined_model_forward.15} parent=0 // pred_check_branch
    %16 = sbr.rel (0) target = $region13
  $region12: #{combined_model_forward.15} parent=0 // pred_region
    _
  $region13: #{combined_model_forward.15} parent=0 // pred_fallthru
    _
  // Predicated region
  $region14: #{combined_model_forward.15} parent=0 // pred_check
    _
  $region15: #{combined_model_forward.15} parent=0 // pred_check_branch
    %18 = sbr.rel (0) target = $region17
  $region16: #{combined_model_forward.15} parent=0 // pred_region
    _
  $region17: #{combined_model_forward.15} parent=0 // pred_fallthru
    _
  // Predicated region
  $region18: #{combined_model_forward.15} parent=0 // pred_check
    _
  $region19: #{combined_model_forward.15} parent=0 // pred_check_branch
    %20 = sbr.rel (0) target = $region21
  $region20: #{combined_model_forward.15} parent=0 // pred_region
    _
  $region21: #{combined_model_forward.15} parent=0 // pred_fallthru
    _
  // Predicated region
  $region22: #{combined_model_forward.15} parent=0 // pred_check
    _
  $region23: #{combined_model_forward.15} parent=0 // pred_check_branch
    %22 = sbr.rel (0) target = $region25
  $region24: #{combined_model_forward.15} parent=0 // pred_region
    _
  $region25: #{combined_model_forward.15} parent=0 // pred_fallthru
    _
  %v24 = vld [vmem:[%s0] sm:$0xf]
  %v25 = vld [vmem:[%s0 + $0x4] sm:$0xf]
  %v26 = vld [vmem:[%s0 + $0x8] sm:$0xf]
  %v27 = vld [vmem:[%s0 + $0xc] sm:$0xf]
  %v28 = vunpack.c.l.bf16 %v24
  %v29 = vunpack.c.l.bf16 %v25
  %v30 = vunpack.c.l.bf16 %v26
  %v31 = vunpack.c.l.bf16 %v27
  %vm32 = vcmask 261120
  %v33 = vsel %vm32, %v28, 0.0
  %34 = vadd.xlane.f32.xlu0 %v33
  %v35 = vpop.xlane.xlu0 %34
  %v36 = vsel %vm32, %v29, 0.0
  %37 = vadd.xlane.f32.xlu0 %v36
  %v38 = vpop.xlane.xlu0 %37
  %v39 = vsel %vm32, %v30, 0.0
  %40 = vadd.xlane.f32.xlu0 %v39
  %v41 = vpop.xlane.xlu0 %40
  %v42 = vsel %vm32, %v31, 0.0
  %43 = vadd.xlane.f32.xlu0 %v42
  %v44 = vpop.xlane.xlu0 %43
  %v45 = vrcp.pop 32.0
  %v46 = vmul.f32 %v35, %v45
  %v47 = vmul.f32 %v38, %v45
  %v48 = vmul.f32 %v41, %v45
  %v49 = vmul.f32 %v44, %v45
  %v50 = vsub.f32 %v28, %v46
  %v51 = vsub.f32 %v29, %v47
  %v52 = vsub.f32 %v30, %v48
  %v53 = vsub.f32 %v31, %v49
  %v54 = vmul.f32 %v50, %v50
  %v55 = vmul.f32 %v51, %v51
  %v56 = vmul.f32 %v52, %v52
  %v57 = vmul.f32 %v53, %v53
  %v58 = vsel %vm32, %v54, 0.0
  %59 = vadd.xlane.f32.xlu0 %v58
  %v60 = vpop.xlane.xlu0 %59
  %v61 = vsel %vm32, %v55, 0.0
  %62 = vadd.xlane.f32.xlu0 %v61
  %v63 = vpop.xlane.xlu0 %62
  %v64 = vsel %vm32, %v56, 0.0
  %65 = vadd.xlane.f32.xlu0 %v64
  %v66 = vpop.xlane.xlu0 %65
  %v67 = vsel %vm32, %v57, 0.0
  %68 = vadd.xlane.f32.xlu0 %v67
  %v69 = vpop.xlane.xlu0 %68
  %v70 = vmul.f32 %v60, %v45
  %v71 = vmul.f32 %v63, %v45
  %v72 = vmul.f32 %v66, %v45
  %v73 = vmul.f32 %v69, %v45
  %v74 = vadd.f32 %v70, 1e-05
  %v75 = vadd.f32 %v71, 1e-05
  %v76 = vadd.f32 %v72, 1e-05
  %v77 = vadd.f32 %v73, 1e-05
  %v78 = vrsqrt.pop %v74
  %v79 = vrsqrt.pop %v75
  %v80 = vrsqrt.pop %v76
  %v81 = vrsqrt.pop %v77
  %v82 = vmul.f32 %v50, %v78
  %v83 = vmul.f32 %v51, %v79
  %v84 = vmul.f32 %v52, %v80
  %v85 = vmul.f32 %v53, %v81
  %v86 = vpack.c.bf16 %v83, %v82
  %v87 = vpack.c.bf16 %v85, %v84
  %v88 = vld [vmem:[%s1] sm:$0xf]
  %v89 = vld [vmem:[%s1 + $0x4] sm:$0xf]
  %v90 = vld [vmem:[%s1 + $0x8] sm:$0xf]
  %v91 = vld [vmem:[%s1 + $0xc] sm:$0xf]
  %v92 = vld [vmem:[%s2] sm:$0x1]
  %v94 = vlaneseq
  %v95 = vshrl.u32 %v94, 7
  %v96 = vsub.s32 0, %v95
  %v97 = vrot.slane %v92, %v96
  %v103 = vunpack.c.l.b16 %v88
  %v104 = vunpack.c.l.b16 %v89
  %v105 = vunpack.c.l.b16 %v90
  %v106 = vunpack.c.l.b16 %v91
  %v107 = vpack.c.b16 %v104, %v103
  %v108 = vpack.c.b16 %v106, %v105
  %v112 = vsel %vm32, %v86, 0
  %v115 = vsel %vm32, %v87, 0
  %117 = vmatprep.subr.bf16.mxu0 0
  %118 = vmatpush1.bf16.msra.mxu0 0
  %119 = vmatprep.subr.bf16.mxu0 0
  %120 = vmatpush1.bf16.msra.mxu0 0
  %121 = vmatprep.subr.bf16.mxu0 0
  %122 = vmatpush1.bf16.msra.mxu0 0
  %123 = vmatprep.subr.bf16.mxu0 0
  %124 = vmatpush1.bf16.msra.mxu0 0
  %125 = vmatprep.subr.bf16.mxu0 0
  %126 = vmatpush1.bf16.msra.mxu0 0
  %127 = vmatprep.subr.bf16.mxu0 0
  %128 = vmatpush1.bf16.msra.mxu0 0
  %129 = vmatprep.subr.bf16.mxu0 0
  %130 = vmatpush1.bf16.msra.mxu0 %v108
  %131 = vmatprep.subr.bf16.mxu0 0
  %132 = vmatpush1.bf16.msra.mxu0 %v107
  %133 = vmatprep.subr.bf16.mxu0 0
  %134 = vmatpush2.bf16.msra.mxu0 0
  %135 = vmatprep.subr.bf16.mxu0 0
  %136 = vmatpush2.bf16.msra.mxu0 0
  %137 = vmatprep.subr.bf16.mxu0 0
  %138 = vmatpush2.bf16.msra.mxu0 0
  %139 = vmatprep.subr.bf16.mxu0 0
  %140 = vmatpush2.bf16.msra.mxu0 0
  %141 = vmatprep.subr.bf16.mxu0 0
  %142 = vmatpush2.bf16.msra.mxu0 0
  %143 = vmatprep.subr.bf16.mxu0 0
  %144 = vmatpush2.bf16.msra.mxu0 0
  %145 = vmatprep.subr.bf16.mxu0 0
  %146 = vmatpush2.bf16.msra.mxu0 0
  %147 = vmatprep.subr.bf16.mxu0 0
  %148 = vmatpush2.bf16.msra.mxu0 0
  %149 = vmatprep.mubr.bf16.mxu0 0
  %150 = vmatmul.mubr.bf16.gmra.mxu0 %v112
  %v151 = vpop.f32.mrf.mxu0
  %v152 = vadd.f32 %v97, %v151
  %v153 = vpop.f32.mrf.mxu0
  %v154 = vpop.f32.mrf.mxu0
  %v155 = vadd.f32 %v97, %v154
  %v156 = vpop.f32.mrf.mxu0
  %157 = vmatprep.mubr.bf16.mxu0 0
  %158 = vmatmul.mubr.bf16.gmra.mxu0 %v115
  %v159 = vpop.f32.mrf.mxu0
  %v160 = vadd.f32 %v97, %v159
  %v161 = vpop.f32.mrf.mxu0
  %v162 = vpop.f32.mrf.mxu0
  %v163 = vadd.f32 %v97, %v162
  %v164 = vpop.f32.mrf.mxu0
  %165 = vdwg.mxu0
  %v166 = vmul.f32 %v152, %v152
  %v167 = vmul.f32 %v155, %v155
  %v168 = vmul.f32 %v160, %v160
  %v169 = vmul.f32 %v163, %v163
  %v170 = vmul.f32 %v152, %v166
  %v171 = vmul.f32 %v155, %v167
  %v172 = vmul.f32 %v160, %v168
  %v173 = vmul.f32 %v163, %v169
  %v174 = vmul.f32 %v170, 0.044715
  %v175 = vmul.f32 %v171, 0.044715
  %v176 = vmul.f32 %v172, 0.044715
  %v177 = vmul.f32 %v173, 0.044715
  %v178 = vadd.f32 %v152, %v174
  %v179 = vadd.f32 %v155, %v175
  %v180 = vadd.f32 %v160, %v176
  %v181 = vadd.f32 %v163, %v177
  %v182 = vmul.f32 %v178, 0.7978846
  %v183 = vmul.f32 %v179, 0.7978846
  %v184 = vmul.f32 %v180, 0.7978846
  %v185 = vmul.f32 %v181, 0.7978846
  %v186 = vtanh.pop %v182
  %v187 = vtanh.pop %v183
  %v188 = vtanh.pop %v184
  %v189 = vtanh.pop %v185
  %v190 = vadd.f32 %v186, 1.0
  %v191 = vadd.f32 %v187, 1.0
  %v192 = vadd.f32 %v188, 1.0
  %v193 = vadd.f32 %v189, 1.0
  %v194 = vmul.f32 %v190, 0.5
  %v195 = vmul.f32 %v191, 0.5
  %v196 = vmul.f32 %v192, 0.5
  %v197 = vmul.f32 %v193, 0.5
  %v198 = vmul.f32 %v152, %v194
  %v199 = vmul.f32 %v155, %v195
  %v200 = vmul.f32 %v160, %v196
  %v201 = vmul.f32 %v163, %v197
  %v202 = vpack.c.bf16 %v199, %v198
  %v203 = vpack.c.bf16 %v201, %v200
  %v204 = vld [vmem:[%s3] sm:$0xf]
  %v205 = vld [vmem:[%s3 + $0x4] sm:$0xf]
  %v206 = vld [vmem:[%s3 + $0x8] sm:$0xf]
  %v207 = vld [vmem:[%s3 + $0xc] sm:$0xf]
  %v208 = vld [vmem:[%s3 + $0x10] sm:$0xf]
  %v209 = vld [vmem:[%s3 + $0x14] sm:$0xf]
  %v210 = vld [vmem:[%s3 + $0x18] sm:$0xf]
  %v211 = vld [vmem:[%s3 + $0x1c] sm:$0xf]
  %v212 = vld [vmem:[%s4] sm:$0x1]
  %v214 = vlaneseq
  %v215 = vshrl.u32 %v214, 7
  %v216 = vsub.s32 0, %v215
  %v217 = vrot.slane %v212, %v216
  %v227 = vunpack.c.l.b16 %v204
  %v228 = vunpack.c.l.b16 %v205
  %v229 = vunpack.c.l.b16 %v206
  %v230 = vunpack.c.l.b16 %v207
  %v231 = vunpack.c.l.b16 %v208
  %v232 = vunpack.c.l.b16 %v209
  %v233 = vunpack.c.l.b16 %v210
  %v234 = vunpack.c.l.b16 %v211
  %v235 = vpack.c.b16 %v228, %v227
  %v236 = vpack.c.b16 %v230, %v229
  %v237 = vpack.c.b16 %v232, %v231
  %v238 = vpack.c.b16 %v234, %v233
  %vm243 = vcmask 523264
  %v245 = vsel %vm243, %v202, 0
  %v248 = vsel %vm243, %v203, 0
  %250 = vmatprep.subr.bf16.mxu0 0
  %251 = vmatpush1.bf16.msra.mxu0 0
  %252 = vmatprep.subr.bf16.mxu0 0
  %253 = vmatpush1.bf16.msra.mxu0 0
  %254 = vmatprep.subr.bf16.mxu0 0
  %255 = vmatpush1.bf16.msra.mxu0 0
  %256 = vmatprep.subr.bf16.mxu0 0
  %257 = vmatpush1.bf16.msra.mxu0 0
  %258 = vmatprep.subr.bf16.mxu0 0
  %259 = vmatpush1.bf16.msra.mxu0 %v238
  %260 = vmatprep.subr.bf16.mxu0 0
  %261 = vmatpush1.bf16.msra.mxu0 %v237
  %262 = vmatprep.subr.bf16.mxu0 0
  %263 = vmatpush1.bf16.msra.mxu0 %v236
  %264 = vmatprep.subr.bf16.mxu0 0
  %265 = vmatpush1.bf16.msra.mxu0 %v235
  %266 = vmatprep.subr.bf16.mxu0 0
  %267 = vmatpush2.bf16.msra.mxu0 0
  %268 = vmatprep.subr.bf16.mxu0 0
  %269 = vmatpush2.bf16.msra.mxu0 0
  %270 = vmatprep.subr.bf16.mxu0 0
  %271 = vmatpush2.bf16.msra.mxu0 0
  %272 = vmatprep.subr.bf16.mxu0 0
  %273 = vmatpush2.bf16.msra.mxu0 0
  %274 = vmatprep.subr.bf16.mxu0 0
  %275 = vmatpush2.bf16.msra.mxu0 0
  %276 = vmatprep.subr.bf16.mxu0 0
  %277 = vmatpush2.bf16.msra.mxu0 0
  %278 = vmatprep.subr.bf16.mxu0 0
  %279 = vmatpush2.bf16.msra.mxu0 0
  %280 = vmatprep.subr.bf16.mxu0 0
  %281 = vmatpush2.bf16.msra.mxu0 0
  %282 = vmatprep.mubr.bf16.mxu0 0
  %283 = vmatmul.mubr.bf16.gmra.mxu0 %v245
  %v284 = vpop.f32.mrf.mxu0
  %v285 = vadd.f32 %v217, %v284
  %v286 = vpop.f32.mrf.mxu0
  %v287 = vpop.f32.mrf.mxu0
  %v288 = vadd.f32 %v217, %v287
  %v289 = vpop.f32.mrf.mxu0
  %290 = vmatprep.mubr.bf16.mxu0 0
  %291 = vmatmul.mubr.bf16.gmra.mxu0 %v248
  %v292 = vpop.f32.mrf.mxu0
  %v293 = vadd.f32 %v217, %v292
  %v294 = vpop.f32.mrf.mxu0
  %v295 = vpop.f32.mrf.mxu0
  %v296 = vadd.f32 %v217, %v295
  %v297 = vpop.f32.mrf.mxu0
  %298 = vdwg.mxu0
  %v299 = vld [vmem:[%s5] sm:$0xf]
  %v300 = vld [vmem:[%s5 + $0x4] sm:$0xf]
  %v301 = vld [vmem:[%s5 + $0x8] sm:$0xf]
  %v302 = vld [vmem:[%s5 + $0xc] sm:$0xf]
  %v303 = vunpack.c.l.bf16 %v299
  %v304 = vunpack.c.l.bf16 %v300
  %v305 = vunpack.c.l.bf16 %v301
  %v306 = vunpack.c.l.bf16 %v302
  %v307 = vadd.f32 %v285, %v303
  %v308 = vadd.f32 %v288, %v304
  %v309 = vadd.f32 %v293, %v305
  %v310 = vadd.f32 %v296, %v306
  %v311 = vpack.c.bf16 %v308, %v307
  %v312 = vpack.c.bf16 %v310, %v309
  %v315 = vunpack.c.l.b16 %v311
  %v316 = vunpack.c.h.b16 %v311
  %v317 = vunpack.c.l.b16 %v312
  %v318 = vunpack.c.h.b16 %v312
  %v319 = vpack.c.b16 %v315, %v315
  %v320 = vpack.c.b16 %v316, %v316
  %v321 = vpack.c.b16 %v317, %v317
  %v322 = vpack.c.b16 %v318, %v318
  %vm327 = vcmask 257024
  %328 = vst.msk [vmem:[%s6] sm:$0xf] %vm327, %v319
  %329 = vst.msk [vmem:[%s6 + $0x4] sm:$0xf] %vm327, %v320
  %330 = vst.msk [vmem:[%s6 + $0x8] sm:$0xf] %vm327, %v321
  %331 = vst.msk [vmem:[%s6 + $0xc] sm:$0xf] %vm327, %v322
  // Predicated region
  $region26: #{combined_model_forward.15} parent=0 // pred_check
    _
  $region27: #{combined_model_forward.15} parent=0 // pred_check_branch
    %333 = sbr.rel (0) target = $region29
  $region28: #{combined_model_forward.15} parent=0 // pred_region
    _
  $region29: #{combined_model_forward.15} parent=0 // pred_fallthru
    _
  // Predicated region
  $region30: #{combined_model_forward.15} parent=0 // pred_check
    _
  $region31: #{combined_model_forward.15} parent=0 // pred_check_branch
    %335 = sbr.rel (0) target = $region33
  $region32: #{combined_model_forward.15} parent=0 // pred_region
    _
  $region33: #{combined_model_forward.15} parent=0 // pred_fallthru
    _

// kernel: combined_model_forward.19
$region0: #{combined_model_forward.19}
  #allocation0 [shape = 'u32[]', space=smem, size = 0x4, offset = 0x4, fixed_abs, tag = 'smem constant byte address 0x4 - core index']
  #allocation1 [shape = 'u32[144,128]{1,0:T(1,128)}', space=vmem, size = 0x12000, scoped, tag = 'internal scratch']
  %s0 = inlined_call_operand.vmem [shape: bf16[2,4,4,32], index: 0, kind: input, shape index: {}]
  %s1 = inlined_call_operand.vmem [shape: bf16[3,32,16], index: 1, kind: input, shape index: {}]
  %s2 = inlined_call_operand.vmem [shape: f32[3,16], index: 2, kind: input, shape index: {}]
  %s3 = inlined_call_operand.vmem [shape: f32[2,3,16], index: 3, kind: output, shape index: {}]
  %s4 = sld [smem:[#allocation0]]
  $region45: #{combined_model_forward.19} parent=0
    _
  %s6 = ssub.s32 1, %s4
  %s7 = scalar_select 0, %s6, %s4
  loop: start=0, step=1, limit=4
  $region2: #{combined_model_forward.19} parent=0 // loop_pre_header
    _
  $region3: #{combined_model_forward.19} parent=0 // loop_header
    %s9 = sphi 0, %s13
    %p10 = scmp.ge.s32.totalorder %s9, 4
    %s19 = sphi 0, %s21
    %s22 = sphi 0, %s19
    %s23 = sphi 0, %s22
    %s39 = sphi 0, %s23
    %s43 = sphi 0, %s43
    %s45 = sphi 0, %s43
    %s46 = sphi 0, %s45
    %s60 = sphi 0, %s46
    %s64 = sphi 0, %s64
    %s66 = sphi 0, %s64
    %s67 = sphi 0, %s66
    %s81 = sphi 0, %s67
    %s87 = sphi 0, %s89
    %s90 = sphi 0, %s87
    %s91 = sphi 0, %s90
    %s107 = sphi 0, %s91
  $region4: #{combined_model_forward.19} parent=0 // loop_header_branch
    %12 = sbr.rel (%p10) target = $region8
  $region5: #{combined_model_forward.19} parent=0 // loop_body
    %s14 = ssub.s32 %s9, 1
    %s15 = ssub.s32 %s9, 2
    %s16 = sadd.s32 %s9, 1
    %s17 = ssub.s32 %s9, %s16
    %p18 = scmp.eq.s32.totalorder %s17, 0
    %s20 = sadd.s32 %s19, 1
    %s21 = scalar_select %p18, %s19, %s20
    %p24 = pneg %p18
    %p25 = scmp.eq.s32.totalorder %s9, 1
    %p26 = por %p24, %p25
    %p27 = scmp.ne.s32.totalorder %s19, %s22
    %p28 = scmp.eq.s32.totalorder %s9, 0
    %p29 = por %p27, %p28
    %p30 = scmp.ne.s32.totalorder %s19, %s22
    %p31 = scmp.eq.s32.totalorder %s14, 1
    %p32 = por %p30, %p31
    %p33 = scmp.ne.s32.totalorder %s22, %s23
    %p34 = scmp.eq.s32.totalorder %s14, 0
    %p35 = por %p33, %p34
    %p36 = scmp.ne.s32.totalorder %s22, %s23
    %p37 = scmp.eq.s32.totalorder %s15, 1
    %p38 = por %p36, %p37
    %p40 = scmp.ne.s32.totalorder %s23, %s39
    %p41 = scmp.eq.s32.totalorder %s15, 0
    %p42 = por %p40, %p41
    %s44 = sadd.s32 %s43, 1
    %p47 = scmp.eq.s32.totalorder %s9, 1
    %p48 = scmp.ne.s32.totalorder %s43, %s45
    %p49 = scmp.eq.s32.totalorder %s9, 0
    %p50 = por %p48, %p49
    %p51 = scmp.ne.s32.totalorder %s43, %s45
    %p52 = scmp.eq.s32.totalorder %s14, 1
    %p53 = por %p51, %p52
    %p54 = scmp.ne.s32.totalorder %s45, %s46
    %p55 = scmp.eq.s32.totalorder %s14, 0
    %p56 = por %p54, %p55
    %p57 = scmp.ne.s32.totalorder %s45, %s46
    %p58 = scmp.eq.s32.totalorder %s15, 1
    %p59 = por %p57, %p58
    %p61 = scmp.ne.s32.totalorder %s46, %s60
    %p62 = scmp.eq.s32.totalorder %s15, 0
    %p63 = por %p61, %p62
    %s65 = sadd.s32 %s64, 1
    %p68 = scmp.eq.s32.totalorder %s9, 1
    %p69 = scmp.ne.s32.totalorder %s64, %s66
    %p70 = scmp.eq.s32.totalorder %s9, 0
    %p71 = por %p69, %p70
    %p72 = scmp.ne.s32.totalorder %s64, %s66
    %p73 = scmp.eq.s32.totalorder %s14, 1
    %p74 = por %p72, %p73
    %p75 = scmp.ne.s32.totalorder %s66, %s67
    %p76 = scmp.eq.s32.totalorder %s14, 0
    %p77 = por %p75, %p76
    %p78 = scmp.ne.s32.totalorder %s66, %s67
    %p79 = scmp.eq.s32.totalorder %s15, 1
    %p80 = por %p78, %p79
    %p82 = scmp.ne.s32.totalorder %s67, %s81
    %p83 = scmp.eq.s32.totalorder %s15, 0
    %p84 = por %p82, %p83
    %s85 = ssub.s32 %s9, %s16
    %p86 = scmp.eq.s32.totalorder %s85, 0
    %s88 = sadd.s32 %s87, 1
    %s89 = scalar_select %p86, %s87, %s88
    %p92 = pneg %p86
    %p93 = scmp.eq.s32.totalorder %s9, 1
    %p94 = por %p92, %p93
    %p95 = scmp.ne.s32.totalorder %s87, %s90
    %p96 = scmp.eq.s32.totalorder %s9, 0
    %p97 = por %p95, %p96
    %p98 = scmp.ne.s32.totalorder %s87, %s90
    %p99 = scmp.eq.s32.totalorder %s14, 1
    %p100 = por %p98, %p99
    %p101 = scmp.ne.s32.totalorder %s90, %s91
    %p102 = scmp.eq.s32.totalorder %s14, 0
    %p103 = por %p101, %p102
    %p104 = scmp.ne.s32.totalorder %s90, %s91
    %p105 = scmp.eq.s32.totalorder %s15, 1
    %p106 = por %p104, %p105
    %p108 = scmp.ne.s32.totalorder %s91, %s107
    %p109 = scmp.eq.s32.totalorder %s15, 0
    %p110 = por %p108, %p109
    %p111 = scmp.le.s32.totalorder 1, %s9
    %p112 = scmp.lt.s32.totalorder %s9, 3
    %p113 = pnand %p111, %p112
    %p114 = pneg %p113
    // Predicated region
    $region9: #{combined_model_forward.19} parent=5 // pred_check
      _
    $region10: #{combined_model_forward.19} parent=5 // pred_check_branch
      %116 = sbr.rel (%p113) target = $region12
    $region11: #{combined_model_forward.19} parent=5 // pred_region
      %s117 = ssub.s32 %s9, 1
      // Predicated region
      $region13: #{combined_model_forward.19} parent=11 // pred_check
        %p118 = pneg %p56
      $region14: #{combined_model_forward.19} parent=11 // pred_check_branch
        %120 = sbr.rel (%p118) target = $region16
      $region15: #{combined_model_forward.19} parent=11 // pred_region
        _
      $region16: #{combined_model_forward.19} parent=11 // pred_fallthru
        _
      // Predicated region
      $region17: #{combined_model_forward.19} parent=11 // pred_check
        %p121 = pneg %p77
      $region18: #{combined_model_forward.19} parent=11 // pred_check_branch
        %123 = sbr.rel (%p121) target = $region20
      $region19: #{combined_model_forward.19} parent=11 // pred_region
        _
      $region20: #{combined_model_forward.19} parent=11 // pred_fallthru
        _
    $region12: #{combined_model_forward.19} parent=5 // pred_fallthru
      _
    %p124 = scmp.lt.s32.totalorder %s9, 2
    // Predicated region
    $region21: #{combined_model_forward.19} parent=5 // pred_check
      %p125 = pneg %p124
    $region22: #{combined_model_forward.19} parent=5 // pred_check_branch
      %127 = sbr.rel (%p125) target = $region24
    $region23: #{combined_model_forward.19} parent=5 // pred_region
      // Predicated region
      $region25: #{combined_model_forward.19} parent=23 // pred_check
        %p128 = pneg %p29
      $region26: #{combined_model_forward.19} parent=23 // pred_check_branch
        %130 = sbr.rel (%p128) target = $region28
      $region27: #{combined_model_forward.19} parent=23 // pred_region
        %p131 = scmp.lt.s32.totalorder %s9, 1
        %s132 = scalar_select %p131, %s9, 1
        %s133 = smul.addr %s132, 4
        %s134 = smul.addr %s133, 2
        %s135 = scalar_lea.vmem %s0, %s134
      $region28: #{combined_model_forward.19} parent=23 // pred_fallthru
        _
    $region24: #{combined_model_forward.19} parent=5 // pred_fallthru
      _
    %p136 = scmp.le.s32.totalorder 1, %s9
    %p137 = scmp.lt.s32.totalorder %s9, 3
    %p138 = pnand %p136, %p137
    %p139 = pneg %p138
    // Predicated region
    $region29: #{combined_model_forward.19} parent=5 // pred_check
      _
    $region30: #{combined_model_forward.19} parent=5 // pred_check_branch
      %141 = sbr.rel (%p138) target = $region32
    $region31: #{combined_model_forward.19} parent=5 // pred_region
      %s142 = ssub.s32 %s9, 1
      %p143 = scmp.lt.s32.totalorder %s14, 1
      %s144 = scalar_select %p143, %s14, 1
      %s145 = smul.addr %s144, 4
      %s146 = smul.addr %s145, 2
      %s147 = scalar_lea.vmem %s0, %s146
      %p148 = pneg %p35
      %p149 = pneg %p32
      %p150 = pneg %p56
      %p151 = pneg %p53
      %p152 = pneg %p77
      %p153 = pneg %p74
      %p154 = pneg %p103
      %p155 = pneg %p100
      %p156 = scmp.lt.s32.totalorder %s14, 1
      %s157 = scalar_select %p156, %s14, 1
      %s158 = smul.addr %s157, 4
      %s159 = scalar_lea.vmem %s3, %s158
      %p160 = scmp.lt.s32.totalorder %s14, 1
      %s161 = scalar_select %p160, %s14, 1
      %s162 = smul.addr %s161, 4
      %s163 = smul.addr %s162, 2
      %s164 = scalar_lea.vmem %s0, %s163
      %p165 = scmp.lt.s32.totalorder %s14, 1
      %s166 = scalar_select %p165, %s14, 1
      %s167 = smul.addr %s166, 4
      %s168 = scalar_lea.vmem %s3, %s167
      %v170 = vld [vmem:[%s164] sm:$0x3]
      %v171 = vld [vmem:[%s164 + $0x2] sm:$0x3]
      %v172 = vld [vmem:[%s164 + $0x4] sm:$0x3]
      %v173 = vld [vmem:[%s164 + $0x6] sm:$0x3]
      %v174 = vunpack.c.l.bf16 %v170
      %v175 = vunpack.c.l.bf16 %v171
      %v176 = vunpack.c.l.bf16 %v172
      %v177 = vunpack.c.l.bf16 %v173
      %vm178 = vcmask 257024
      %v179 = vsel %vm178, %v174, -inf
      %v180 = vrot.slane %v179, 4
      %v181 = vmax.f32 %v179, %v180
      %v182 = vrot.slane %v181, 2
      %v183 = vmax.f32 %v181, %v182
      %v184 = vrot.slane %v183, 1
      %v185 = vmax.f32 %v183, %v184
      %v186 = vsel %vm178, %v175, -inf
      %v187 = vrot.slane %v186, 4
      %v188 = vmax.f32 %v186, %v187
      %v189 = vrot.slane %v188, 2
      %v190 = vmax.f32 %v188, %v189
      %v191 = vrot.slane %v190, 1
      %v192 = vmax.f32 %v190, %v191
      %vm193 = vcmask 261120
      %v194 = vsel %vm193, %v185, -inf
      %v195 = vsel %vm193, %v192, -inf
      %v196 = vmax.f32 %v194, %v195
      %v197 = vsel %vm178, %v176, -inf
      %v198 = vrot.slane %v197, 4
      %v199 = vmax.f32 %v197, %v198
      %v200 = vrot.slane %v199, 2
      %v201 = vmax.f32 %v199, %v200
      %v202 = vrot.slane %v201, 1
      %v203 = vmax.f32 %v201, %v202
      %v204 = vsel %vm178, %v177, -inf
      %v205 = vrot.slane %v204, 4
      %v206 = vmax.f32 %v204, %v205
      %v207 = vrot.slane %v206, 2
      %v208 = vmax.f32 %v206, %v207
      %v209 = vrot.slane %v208, 1
      %v210 = vmax.f32 %v208, %v209
      %v211 = vsel %vm193, %v203, -inf
      %v212 = vsel %vm193, %v210, -inf
      %v213 = vmax.f32 %v211, %v212
      %v214 = vmax.f32 %v196, %v213
      %v215 = vld [vmem:[%s2] sm:$0x7]
      %v216 = vpack.c.bf16 %v214, %v214
      %v217 = vld [vmem:[%s1] sm:$0xf]
      %v218 = vld [vmem:[%s1 + $0x4] sm:$0xf]
      %v219 = vld [vmem:[%s1 + $0x8] sm:$0xf]
      %v220 = vld [vmem:[%s1 + $0xc] sm:$0xf]
      %v225 = vunpack.c.l.b16 %v217
      %v226 = vunpack.c.l.b16 %v218
      %v227 = vunpack.c.l.b16 %v219
      %v228 = vunpack.c.l.b16 %v220
      %v229 = vpack.c.b16 %v226, %v225
      %v230 = vpack.c.b16 %v228, %v227
      %v234 = vsel %vm193, %v216, 0
      %236 = vmatprep.subr.bf16.mxu0 0
      %237 = vmatpush1.bf16.msra.mxu0 0
      %238 = vmatprep.subr.bf16.mxu0 0
      %239 = vmatpush1.bf16.msra.mxu0 0
      %240 = vmatprep.subr.bf16.mxu0 0
      %241 = vmatpush1.bf16.msra.mxu0 0
      %242 = vmatprep.subr.bf16.mxu0 0
      %243 = vmatpush1.bf16.msra.mxu0 0
      %244 = vmatprep.subr.bf16.mxu0 0
      %245 = vmatpush1.bf16.msra.mxu0 0
      %246 = vmatprep.subr.bf16.mxu0 0
      %247 = vmatpush1.bf16.msra.mxu0 0
      %248 = vmatprep.subr.bf16.mxu0 0
      %249 = vmatpush1.bf16.msra.mxu0 %v230
      %250 = vmatprep.subr.bf16.mxu0 0
      %251 = vmatpush1.bf16.msra.mxu0 %v229
      %252 = vmatprep.subr.bf16.mxu0 0
      %253 = vmatpush2.bf16.msra.mxu0 0
      %254 = vmatprep.subr.bf16.mxu0 0
      %255 = vmatpush2.bf16.msra.mxu0 0
      %256 = vmatprep.subr.bf16.mxu0 0
      %257 = vmatpush2.bf16.msra.mxu0 0
      %258 = vmatprep.subr.bf16.mxu0 0
      %259 = vmatpush2.bf16.msra.mxu0 0
      %260 = vmatprep.subr.bf16.mxu0 0
      %261 = vmatpush2.bf16.msra.mxu0 0
      %262 = vmatprep.subr.bf16.mxu0 0
      %263 = vmatpush2.bf16.msra.mxu0 0
      %264 = vmatprep.subr.bf16.mxu0 0
      %265 = vmatpush2.bf16.msra.mxu0 0
      %266 = vmatprep.subr.bf16.mxu0 0
      %267 = vmatpush2.bf16.msra.mxu0 0
      %268 = vmatprep.mubr.bf16.mxu0 0
      %269 = vmatmul.mubr.bf16.gmra.mxu0 %v234
      %v270 = vpop.f32.mrf.mxu0
      %v271 = vadd.f32 %v215, %v270
      %v272 = vpop.f32.mrf.mxu0
      %v273 = vpop.f32.mrf.mxu0
      %v274 = vpop.f32.mrf.mxu0
      %275 = vdwg.mxu0
      %v276 = vmax.f32 %v271, 0.0
      %v277 = vpack.c.bf16 %v196, %v196
      %s278 = scalar_lea.vmem %s1, 16
      %v279 = vld [vmem:[%s278] sm:$0xf]
      %v280 = vld [vmem:[%s278 + $0x4] sm:$0xf]
      %v281 = vld [vmem:[%s278 + $0x8] sm:$0xf]
      %v282 = vld [vmem:[%s278 + $0xc] sm:$0xf]
      %v287 = vunpack.c.l.b16 %v279
      %v288 = vunpack.c.l.b16 %v280
      %v289 = vunpack.c.l.b16 %v281
      %v290 = vunpack.c.l.b16 %v282
      %v291 = vpack.c.b16 %v288, %v287
      %v292 = vpack.c.b16 %v290, %v289
      %v296 = vrot.slane %v215, 1
      %v299 = vsel %vm193, %v277, 0
      %301 = vmatprep.subr.bf16.mxu0 0
      %302 = vmatpush1.bf16.msra.mxu0 0
      %303 = vmatprep.subr.bf16.mxu0 0
      %304 = vmatpush1.bf16.msra.mxu0 0
      %305 = vmatprep.subr.bf16.mxu0 0
      %306 = vmatpush1.bf16.msra.mxu0 0
      %307 = vmatprep.subr.bf16.mxu0 0
      %308 = vmatpush1.bf16.msra.mxu0 0
      %309 = vmatprep.subr.bf16.mxu0 0
      %310 = vmatpush1.bf16.msra.mxu0 0
      %311 = vmatprep.subr.bf16.mxu0 0
      %312 = vmatpush1.bf16.msra.mxu0 0
      %313 = vmatprep.subr.bf16.mxu0 0
      %314 = vmatpush1.bf16.msra.mxu0 %v292
      %315 = vmatprep.subr.bf16.mxu0 0
      %316 = vmatpush1.bf16.msra.mxu0 %v291
      %317 = vmatprep.subr.bf16.mxu0 0
      %318 = vmatpush2.bf16.msra.mxu0 0
      %319 = vmatprep.subr.bf16.mxu0 0
      %320 = vmatpush2.bf16.msra.mxu0 0
      %321 = vmatprep.subr.bf16.mxu0 0
      %322 = vmatpush2.bf16.msra.mxu0 0
      %323 = vmatprep.subr.bf16.mxu0 0
      %324 = vmatpush2.bf16.msra.mxu0 0
      %325 = vmatprep.subr.bf16.mxu0 0
      %326 = vmatpush2.bf16.msra.mxu0 0
      %327 = vmatprep.subr.bf16.mxu0 0
      %328 = vmatpush2.bf16.msra.mxu0 0
      %329 = vmatprep.subr.bf16.mxu0 0
      %330 = vmatpush2.bf16.msra.mxu0 0
      %331 = vmatprep.subr.bf16.mxu0 0
      %332 = vmatpush2.bf16.msra.mxu0 0
      %333 = vmatprep.mubr.bf16.mxu0 0
      %334 = vmatmul.mubr.bf16.gmra.mxu0 %v299
      %v335 = vpop.f32.mrf.mxu0
      %v336 = vadd.f32 %v296, %v335
      %v337 = vpop.f32.mrf.mxu0
      %v338 = vpop.f32.mrf.mxu0
      %v339 = vpop.f32.mrf.mxu0
      %340 = vdwg.mxu0
      %v341 = vmax.f32 %v336, 0.0
      %v342 = vpack.c.bf16 %v213, %v213
      %s343 = scalar_lea.vmem %s1, 32
      %v344 = vld [vmem:[%s343] sm:$0xf]
      %v345 = vld [vmem:[%s343 + $0x4] sm:$0xf]
      %v346 = vld [vmem:[%s343 + $0x8] sm:$0xf]
      %v347 = vld [vmem:[%s343 + $0xc] sm:$0xf]
      %v352 = vunpack.c.l.b16 %v344
      %v353 = vunpack.c.l.b16 %v345
      %v354 = vunpack.c.l.b16 %v346
      %v355 = vunpack.c.l.b16 %v347
      %v356 = vpack.c.b16 %v353, %v352
      %v357 = vpack.c.b16 %v355, %v354
      %v360 = vrot.slane %v215, 2
      %v363 = vsel %vm193, %v342, 0
      %365 = vmatprep.subr.bf16.mxu0 0
      %366 = vmatpush1.bf16.msra.mxu0 0
      %367 = vmatprep.subr.bf16.mxu0 0
      %368 = vmatpush1.bf16.msra.mxu0 0
      %369 = vmatprep.subr.bf16.mxu0 0
      %370 = vmatpush1.bf16.msra.mxu0 0
      %371 = vmatprep.subr.bf16.mxu0 0
      %372 = vmatpush1.bf16.msra.mxu0 0
      %373 = vmatprep.subr.bf16.mxu0 0
      %374 = vmatpush1.bf16.msra.mxu0 0
      %375 = vmatprep.subr.bf16.mxu0 0
      %376 = vmatpush1.bf16.msra.mxu0 0
      %377 = vmatprep.subr.bf16.mxu0 0
      %378 = vmatpush1.bf16.msra.mxu0 %v357
      %379 = vmatprep.subr.bf16.mxu0 0
      %380 = vmatpush1.bf16.msra.mxu0 %v356
      %381 = vmatprep.subr.bf16.mxu0 0
      %382 = vmatpush2.bf16.msra.mxu0 0
      %383 = vmatprep.subr.bf16.mxu0 0
      %384 = vmatpush2.bf16.msra.mxu0 0
      %385 = vmatprep.subr.bf16.mxu0 0
      %386 = vmatpush2.bf16.msra.mxu0 0
      %387 = vmatprep.subr.bf16.mxu0 0
      %388 = vmatpush2.bf16.msra.mxu0 0
      %389 = vmatprep.subr.bf16.mxu0 0
      %390 = vmatpush2.bf16.msra.mxu0 0
      %391 = vmatprep.subr.bf16.mxu0 0
      %392 = vmatpush2.bf16.msra.mxu0 0
      %393 = vmatprep.subr.bf16.mxu0 0
      %394 = vmatpush2.bf16.msra.mxu0 0
      %395 = vmatprep.subr.bf16.mxu0 0
      %396 = vmatpush2.bf16.msra.mxu0 0
      %397 = vmatprep.mubr.bf16.mxu0 0
      %398 = vmatmul.mubr.bf16.gmra.mxu0 %v363
      %v399 = vpop.f32.mrf.mxu0
      %v400 = vadd.f32 %v360, %v399
      %v401 = vpop.f32.mrf.mxu0
      %v402 = vpop.f32.mrf.mxu0
      %v403 = vpop.f32.mrf.mxu0
      %404 = vdwg.mxu0
      %v405 = vmax.f32 %v400, 0.0
      %v407 = vrot.slane %v341, 7
      %v410 = vrot.slane %v405, 6
      %vm412 = vcmask 1040384
      %v413 = vsel %vm412, %v276, %v407
      %vm414 = vcmask 1041408
      %v415 = vsel %vm414, %v413, %v410
      %vm416 = vcmask 124928
      %417 = vst.msk [vmem:[%s168] sm:$0x7] %vm416, %v415
      %p418 = scmp.lt.s32.totalorder %s14, 1
      %s419 = scalar_select %p418, %s14, 1
      %s420 = smul.addr %s419, 4
      %s421 = scalar_lea.vmem %s3, %s420
      // Predicated region
      $region33: #{combined_model_forward.19} parent=31 // pred_check
        %p422 = pneg %p100
      $region34: #{combined_model_forward.19} parent=31 // pred_check_branch
        %424 = sbr.rel (%p422) target = $region36
      $region35: #{combined_model_forward.19} parent=31 // pred_region
        _
      $region36: #{combined_model_forward.19} parent=31 // pred_fallthru
        _
    $region32: #{combined_model_forward.19} parent=5 // pred_fallthru
      _
    %p425 = scmp.le.s32.totalorder 2, %s9
    // Predicated region
    $region37: #{combined_model_forward.19} parent=5 // pred_check
      %p426 = pneg %p425
    $region38: #{combined_model_forward.19} parent=5 // pred_check_branch
      %428 = sbr.rel (%p426) target = $region40
    $region39: #{combined_model_forward.19} parent=5 // pred_region
      %s429 = ssub.s32 %s9, 2
      // Predicated region
      $region41: #{combined_model_forward.19} parent=39 // pred_check
        %p430 = pneg %p106
      $region42: #{combined_model_forward.19} parent=39 // pred_check_branch
        %432 = sbr.rel (%p430) target = $region44
      $region43: #{combined_model_forward.19} parent=39 // pred_region
        %p433 = scmp.lt.s32.totalorder %s15, 1
        %s434 = scalar_select %p433, %s15, 1
        %s435 = smul.addr %s434, 4
        %s436 = scalar_lea.vmem %s3, %s435
      $region44: #{combined_model_forward.19} parent=39 // pred_fallthru
        _
    $region40: #{combined_model_forward.19} parent=5 // pred_fallthru
      _
  $region6: #{combined_model_forward.19} parent=0 // loop_footer
    %s13 = sadd.s32 1, %s9
  $region7: #{combined_model_forward.19} parent=0 // loop_footer_branch
    %8 = sbr.rel target = $region3
  $region8: #{combined_model_forward.19} parent=0 // loop_exit
    _

// kernel: combined_model_forward.14
$region0: #{combined_model_forward.14}
  #allocation0 [shape = 'u32[]', space=smem, size = 0x4, offset = 0x4, fixed_abs, tag = 'smem constant byte address 0x4 - core index']
  #allocation1 [shape = 'u32[144,128]{1,0:T(1,128)}', space=vmem, size = 0x12000, scoped, tag = 'internal scratch']
  %s0 = inlined_call_operand.vmem [shape: bf16[2,16,32], index: 0, kind: input, shape index: {}]
  %s1 = inlined_call_operand.vmem [shape: bf16[32,96], index: 1, kind: input, shape index: {}]
  %s2 = inlined_call_operand.vmem [shape: f32[1,96], index: 2, kind: input, shape index: {}]
  %s3 = inlined_call_operand.vmem [shape: bf16[32,32], index: 3, kind: input, shape index: {}]
  %s4 = inlined_call_operand.vmem [shape: f32[1,32], index: 4, kind: input, shape index: {}]
  %s5 = inlined_call_operand.vmem [shape: bf16[2,16,32], index: 5, kind: output, shape index: {}]
  %s6 = sld [smem:[#allocation0]]
  $region53: #{combined_model_forward.14} parent=0
    _
  %s8 = ssub.s32 1, %s6
  %s9 = scalar_select 0, %s8, %s6
  loop: start=0, step=1, limit=4
  $region2: #{combined_model_forward.14} parent=0 // loop_pre_header
    _
  $region3: #{combined_model_forward.14} parent=0 // loop_header
    %s11 = sphi 0, %s15
    %p12 = scmp.ge.s32.totalorder %s11, 4
    %s21 = sphi 0, %s23
    %s24 = sphi 0, %s21
    %s25 = sphi 0, %s24
    %s41 = sphi 0, %s25
    %s45 = sphi 0, %s45
    %s47 = sphi 0, %s45
    %s48 = sphi 0, %s47
    %s62 = sphi 0, %s48
    %s66 = sphi 0, %s66
    %s68 = sphi 0, %s66
    %s69 = sphi 0, %s68
    %s83 = sphi 0, %s69
    %s87 = sphi 0, %s87
    %s89 = sphi 0, %s87
    %s90 = sphi 0, %s89
    %s104 = sphi 0, %s90
    %s108 = sphi 0, %s108
    %s110 = sphi 0, %s108
    %s111 = sphi 0, %s110
    %s125 = sphi 0, %s111
    %s131 = sphi 0, %s133
    %s134 = sphi 0, %s131
    %s135 = sphi 0, %s134
    %s151 = sphi 0, %s135
  $region4: #{combined_model_forward.14} parent=0 // loop_header_branch
    %14 = sbr.rel (%p12) target = $region8
  $region5: #{combined_model_forward.14} parent=0 // loop_body
    %s16 = ssub.s32 %s11, 1
    %s17 = ssub.s32 %s11, 2
    %s18 = sadd.s32 %s11, 1
    %s19 = ssub.s32 %s11, %s18
    %p20 = scmp.eq.s32.totalorder %s19, 0
    %s22 = sadd.s32 %s21, 1
    %s23 = scalar_select %p20, %s21, %s22
    %p26 = pneg %p20
    %p27 = scmp.eq.s32.totalorder %s11, 1
    %p28 = por %p26, %p27
    %p29 = scmp.ne.s32.totalorder %s21, %s24
    %p30 = scmp.eq.s32.totalorder %s11, 0
    %p31 = por %p29, %p30
    %p32 = scmp.ne.s32.totalorder %s21, %s24
    %p33 = scmp.eq.s32.totalorder %s16, 1
    %p34 = por %p32, %p33
    %p35 = scmp.ne.s32.totalorder %s24, %s25
    %p36 = scmp.eq.s32.totalorder %s16, 0
    %p37 = por %p35, %p36
    %p38 = scmp.ne.s32.totalorder %s24, %s25
    %p39 = scmp.eq.s32.totalorder %s17, 1
    %p40 = por %p38, %p39
    %p42 = scmp.ne.s32.totalorder %s25, %s41
    %p43 = scmp.eq.s32.totalorder %s17, 0
    %p44 = por %p42, %p43
    %s46 = sadd.s32 %s45, 1
    %p49 = scmp.eq.s32.totalorder %s11, 1
    %p50 = scmp.ne.s32.totalorder %s45, %s47
    %p51 = scmp.eq.s32.totalorder %s11, 0
    %p52 = por %p50, %p51
    %p53 = scmp.ne.s32.totalorder %s45, %s47
    %p54 = scmp.eq.s32.totalorder %s16, 1
    %p55 = por %p53, %p54
    %p56 = scmp.ne.s32.totalorder %s47, %s48
    %p57 = scmp.eq.s32.totalorder %s16, 0
    %p58 = por %p56, %p57
    %p59 = scmp.ne.s32.totalorder %s47, %s48
    %p60 = scmp.eq.s32.totalorder %s17, 1
    %p61 = por %p59, %p60
    %p63 = scmp.ne.s32.totalorder %s48, %s62
    %p64 = scmp.eq.s32.totalorder %s17, 0
    %p65 = por %p63, %p64
    %s67 = sadd.s32 %s66, 1
    %p70 = scmp.eq.s32.totalorder %s11, 1
    %p71 = scmp.ne.s32.totalorder %s66, %s68
    %p72 = scmp.eq.s32.totalorder %s11, 0
    %p73 = por %p71, %p72
    %p74 = scmp.ne.s32.totalorder %s66, %s68
    %p75 = scmp.eq.s32.totalorder %s16, 1
    %p76 = por %p74, %p75
    %p77 = scmp.ne.s32.totalorder %s68, %s69
    %p78 = scmp.eq.s32.totalorder %s16, 0
    %p79 = por %p77, %p78
    %p80 = scmp.ne.s32.totalorder %s68, %s69
    %p81 = scmp.eq.s32.totalorder %s17, 1
    %p82 = por %p80, %p81
    %p84 = scmp.ne.s32.totalorder %s69, %s83
    %p85 = scmp.eq.s32.totalorder %s17, 0
    %p86 = por %p84, %p85
    %s88 = sadd.s32 %s87, 1
    %p91 = scmp.eq.s32.totalorder %s11, 1
    %p92 = scmp.ne.s32.totalorder %s87, %s89
    %p93 = scmp.eq.s32.totalorder %s11, 0
    %p94 = por %p92, %p93
    %p95 = scmp.ne.s32.totalorder %s87, %s89
    %p96 = scmp.eq.s32.totalorder %s16, 1
    %p97 = por %p95, %p96
    %p98 = scmp.ne.s32.totalorder %s89, %s90
    %p99 = scmp.eq.s32.totalorder %s16, 0
    %p100 = por %p98, %p99
    %p101 = scmp.ne.s32.totalorder %s89, %s90
    %p102 = scmp.eq.s32.totalorder %s17, 1
    %p103 = por %p101, %p102
    %p105 = scmp.ne.s32.totalorder %s90, %s104
    %p106 = scmp.eq.s32.totalorder %s17, 0
    %p107 = por %p105, %p106
    %s109 = sadd.s32 %s108, 1
    %p112 = scmp.eq.s32.totalorder %s11, 1
    %p113 = scmp.ne.s32.totalorder %s108, %s110
    %p114 = scmp.eq.s32.totalorder %s11, 0
    %p115 = por %p113, %p114
    %p116 = scmp.ne.s32.totalorder %s108, %s110
    %p117 = scmp.eq.s32.totalorder %s16, 1
    %p118 = por %p116, %p117
    %p119 = scmp.ne.s32.totalorder %s110, %s111
    %p120 = scmp.eq.s32.totalorder %s16, 0
    %p121 = por %p119, %p120
    %p122 = scmp.ne.s32.totalorder %s110, %s111
    %p123 = scmp.eq.s32.totalorder %s17, 1
    %p124 = por %p122, %p123
    %p126 = scmp.ne.s32.totalorder %s111, %s125
    %p127 = scmp.eq.s32.totalorder %s17, 0
    %p128 = por %p126, %p127
    %s129 = ssub.s32 %s11, %s18
    %p130 = scmp.eq.s32.totalorder %s129, 0
    %s132 = sadd.s32 %s131, 1
    %s133 = scalar_select %p130, %s131, %s132
    %p136 = pneg %p130
    %p137 = scmp.eq.s32.totalorder %s11, 1
    %p138 = por %p136, %p137
    %p139 = scmp.ne.s32.totalorder %s131, %s134
    %p140 = scmp.eq.s32.totalorder %s11, 0
    %p141 = por %p139, %p140
    %p142 = scmp.ne.s32.totalorder %s131, %s134
    %p143 = scmp.eq.s32.totalorder %s16, 1
    %p144 = por %p142, %p143
    %p145 = scmp.ne.s32.totalorder %s134, %s135
    %p146 = scmp.eq.s32.totalorder %s16, 0
    %p147 = por %p145, %p146
    %p148 = scmp.ne.s32.totalorder %s134, %s135
    %p149 = scmp.eq.s32.totalorder %s17, 1
    %p150 = por %p148, %p149
    %p152 = scmp.ne.s32.totalorder %s135, %s151
    %p153 = scmp.eq.s32.totalorder %s17, 0
    %p154 = por %p152, %p153
    %p155 = scmp.le.s32.totalorder 1, %s11
    %p156 = scmp.lt.s32.totalorder %s11, 3
    %p157 = pnand %p155, %p156
    %p158 = pneg %p157
    // Predicated region
    $region9: #{combined_model_forward.14} parent=5 // pred_check
      _
    $region10: #{combined_model_forward.14} parent=5 // pred_check_branch
      %160 = sbr.rel (%p157) target = $region12
    $region11: #{combined_model_forward.14} parent=5 // pred_region
      %s161 = ssub.s32 %s11, 1
      // Predicated region
      $region13: #{combined_model_forward.14} parent=11 // pred_check
        %p162 = pneg %p58
      $region14: #{combined_model_forward.14} parent=11 // pred_check_branch
        %164 = sbr.rel (%p162) target = $region16
      $region15: #{combined_model_forward.14} parent=11 // pred_region
        _
      $region16: #{combined_model_forward.14} parent=11 // pred_fallthru
        _
      // Predicated region
      $region17: #{combined_model_forward.14} parent=11 // pred_check
        %p165 = pneg %p79
      $region18: #{combined_model_forward.14} parent=11 // pred_check_branch
        %167 = sbr.rel (%p165) target = $region20
      $region19: #{combined_model_forward.14} parent=11 // pred_region
        _
      $region20: #{combined_model_forward.14} parent=11 // pred_fallthru
        _
      // Predicated region
      $region21: #{combined_model_forward.14} parent=11 // pred_check
        %p168 = pneg %p100
      $region22: #{combined_model_forward.14} parent=11 // pred_check_branch
        %170 = sbr.rel (%p168) target = $region24
      $region23: #{combined_model_forward.14} parent=11 // pred_region
        _
      $region24: #{combined_model_forward.14} parent=11 // pred_fallthru
        _
      // Predicated region
      $region25: #{combined_model_forward.14} parent=11 // pred_check
        %p171 = pneg %p121
      $region26: #{combined_model_forward.14} parent=11 // pred_check_branch
        %173 = sbr.rel (%p171) target = $region28
      $region27: #{combined_model_forward.14} parent=11 // pred_region
        _
      $region28: #{combined_model_forward.14} parent=11 // pred_fallthru
        _
    $region12: #{combined_model_forward.14} parent=5 // pred_fallthru
      _
    %p174 = scmp.lt.s32.totalorder %s11, 2
    // Predicated region
    $region29: #{combined_model_forward.14} parent=5 // pred_check
      %p175 = pneg %p174
    $region30: #{combined_model_forward.14} parent=5 // pred_check_branch
      %177 = sbr.rel (%p175) target = $region32
    $region31: #{combined_model_forward.14} parent=5 // pred_region
      // Predicated region
      $region33: #{combined_model_forward.14} parent=31 // pred_check
        %p178 = pneg %p31
      $region34: #{combined_model_forward.14} parent=31 // pred_check_branch
        %180 = sbr.rel (%p178) target = $region36
      $region35: #{combined_model_forward.14} parent=31 // pred_region
        %p181 = scmp.lt.s32.totalorder %s11, 1
        %s182 = scalar_select %p181, %s11, 1
        %s183 = smul.addr %s182, 2
        %s184 = smul.addr %s183, 4
        %s185 = scalar_lea.vmem %s0, %s184
      $region36: #{combined_model_forward.14} parent=31 // pred_fallthru
        _
    $region32: #{combined_model_forward.14} parent=5 // pred_fallthru
      _
    %p186 = scmp.le.s32.totalorder 1, %s11
    %p187 = scmp.lt.s32.totalorder %s11, 3
    %p188 = pnand %p186, %p187
    %p189 = pneg %p188
    // Predicated region
    $region37: #{combined_model_forward.14} parent=5 // pred_check
      _
    $region38: #{combined_model_forward.14} parent=5 // pred_check_branch
      %191 = sbr.rel (%p188) target = $region40
    $region39: #{combined_model_forward.14} parent=5 // pred_region
      %s192 = ssub.s32 %s11, 1
      %p193 = scmp.lt.s32.totalorder %s16, 1
      %s194 = scalar_select %p193, %s16, 1
      %s195 = smul.addr %s194, 2
      %s196 = smul.addr %s195, 4
      %s197 = scalar_lea.vmem %s0, %s196
      %p198 = pneg %p37
      %p199 = pneg %p34
      %p200 = pneg %p58
      %p201 = pneg %p55
      %p202 = pneg %p79
      %p203 = pneg %p76
      %p204 = pneg %p100
      %p205 = pneg %p97
      %p206 = pneg %p121
      %p207 = pneg %p118
      %p208 = pneg %p147
      %p209 = pneg %p144
      %p210 = scmp.lt.s32.totalorder %s16, 1
      %s211 = scalar_select %p210, %s16, 1
      %s212 = smul.addr %s211, 2
      %s213 = smul.addr %s212, 4
      %s214 = scalar_lea.vmem %s5, %s213
      %p215 = scmp.lt.s32.totalorder %s16, 1
      %s216 = scalar_select %p215, %s16, 1
      %s217 = smul.addr %s216, 2
      %s218 = smul.addr %s217, 4
      %s219 = scalar_lea.vmem %s0, %s218
      %p220 = scmp.lt.s32.totalorder %s16, 1
      %s221 = scalar_select %p220, %s16, 1
      %s222 = smul.addr %s221, 2
      %s223 = smul.addr %s222, 4
      %s224 = scalar_lea.vmem %s5, %s223
      %v226 = vld [vmem:[%s219] sm:$0xf]
      %v227 = vld [vmem:[%s219 + $0x4] sm:$0xf]
      %v228 = vunpack.c.l.bf16 %v226
      %v229 = vunpack.c.l.bf16 %v227
      %vm230 = vcmask 261120
      %v231 = vsel %vm230, %v228, 0.0
      %232 = vadd.xlane.f32.xlu0 %v231
      %v233 = vpop.xlane.xlu0 %232
      %v234 = vsel %vm230, %v229, 0.0
      %235 = vadd.xlane.f32.xlu0 %v234
      %v236 = vpop.xlane.xlu0 %235
      %v237 = vrcp.pop 32.0
      %v238 = vmul.f32 %v233, %v237
      %v239 = vmul.f32 %v236, %v237
      %v240 = vsub.f32 %v228, %v238
      %v241 = vsub.f32 %v229, %v239
      %v242 = vmul.f32 %v240, %v240
      %v243 = vmul.f32 %v241, %v241
      %v244 = vsel %vm230, %v242, 0.0
      %245 = vadd.xlane.f32.xlu0 %v244
      %v246 = vpop.xlane.xlu0 %245
      %v247 = vsel %vm230, %v243, 0.0
      %248 = vadd.xlane.f32.xlu0 %v247
      %v249 = vpop.xlane.xlu0 %248
      %v250 = vmul.f32 %v246, %v237
      %v251 = vmul.f32 %v249, %v237
      %v252 = vadd.f32 %v250, 1e-05
      %v253 = vadd.f32 %v251, 1e-05
      %v254 = vrsqrt.pop %v252
      %v255 = vrsqrt.pop %v253
      %v256 = vmul.f32 %v240, %v254
      %v257 = vmul.f32 %v241, %v255
      %v258 = vpack.c.bf16 %v257, %v256
      %v259 = vld [vmem:[%s1] sm:$0xf]
      %v260 = vld [vmem:[%s1 + $0x4] sm:$0xf]
      %v261 = vld [vmem:[%s1 + $0x8] sm:$0xf]
      %v262 = vld [vmem:[%s1 + $0xc] sm:$0xf]
      %v263 = vld [vmem:[%s2] sm:$0x1]
      %v265 = vlaneseq
      %v266 = vshrl.u32 %v265, 7
      %v267 = vsub.s32 0, %v266
      %v268 = vrot.slane %v263, %v267
      %v274 = vunpack.c.l.b16 %v259
      %v275 = vunpack.c.l.b16 %v260
      %v276 = vunpack.c.l.b16 %v261
      %v277 = vunpack.c.l.b16 %v262
      %v278 = vpack.c.b16 %v275, %v274
      %v279 = vpack.c.b16 %v277, %v276
      %v283 = vsel %vm230, %v258, 0
      %285 = vmatprep.subr.bf16.mxu0 0
      %286 = vmatpush1.bf16.msra.mxu0 0
      %287 = vmatprep.subr.bf16.mxu0 0
      %288 = vmatpush1.bf16.msra.mxu0 0
      %289 = vmatprep.subr.bf16.mxu0 0
      %290 = vmatpush1.bf16.msra.mxu0 0
      %291 = vmatprep.subr.bf16.mxu0 0
      %292 = vmatpush1.bf16.msra.mxu0 0
      %293 = vmatprep.subr.bf16.mxu0 0
      %294 = vmatpush1.bf16.msra.mxu0 0
      %295 = vmatprep.subr.bf16.mxu0 0
      %296 = vmatpush1.bf16.msra.mxu0 0
      %297 = vmatprep.subr.bf16.mxu0 0
      %298 = vmatpush1.bf16.msra.mxu0 %v279
      %299 = vmatprep.subr.bf16.mxu0 0
      %300 = vmatpush1.bf16.msra.mxu0 %v278
      %301 = vmatprep.subr.bf16.mxu0 0
      %302 = vmatpush2.bf16.msra.mxu0 0
      %303 = vmatprep.subr.bf16.mxu0 0
      %304 = vmatpush2.bf16.msra.mxu0 0
      %305 = vmatprep.subr.bf16.mxu0 0
      %306 = vmatpush2.bf16.msra.mxu0 0
      %307 = vmatprep.subr.bf16.mxu0 0
      %308 = vmatpush2.bf16.msra.mxu0 0
      %309 = vmatprep.subr.bf16.mxu0 0
      %310 = vmatpush2.bf16.msra.mxu0 0
      %311 = vmatprep.subr.bf16.mxu0 0
      %312 = vmatpush2.bf16.msra.mxu0 0
      %313 = vmatprep.subr.bf16.mxu0 0
      %314 = vmatpush2.bf16.msra.mxu0 0
      %315 = vmatprep.subr.bf16.mxu0 0
      %316 = vmatpush2.bf16.msra.mxu0 0
      %317 = vmatprep.mubr.bf16.mxu0 0
      %318 = vmatmul.mubr.bf16.gmra.mxu0 %v283
      %v319 = vpop.f32.mrf.mxu0
      %v320 = vadd.f32 %v268, %v319
      %v321 = vpop.f32.mrf.mxu0
      %v322 = vpop.f32.mrf.mxu0
      %v323 = vadd.f32 %v268, %v322
      %v324 = vpop.f32.mrf.mxu0
      %325 = vdwg.mxu0
      %v326 = vpack.c.bf16 %v323, %v320
      %328 = vrot.lane.b32.xlu0 %v326, 96
      %v329 = vpop.permute.xlu0 %328
      %vm330 = vcmask 64512
      %v332 = vsel %vm330, %v326, 0
      %v335 = vsel %vm330, %v329, 0
      %337 = vmatprep.subr.bf16.mxu0 0
      %338 = vmatpush1.bf16.xpose.msra.mxu0 0
      %339 = vmatprep.subr.bf16.mxu0 0
      %340 = vmatpush1.bf16.xpose.msra.mxu0 0
      %341 = vmatprep.subr.bf16.mxu0 0
      %342 = vmatpush1.bf16.xpose.msra.mxu0 0
      %343 = vmatprep.subr.bf16.mxu0 0
      %344 = vmatpush1.bf16.xpose.msra.mxu0 0
      %345 = vmatprep.subr.bf16.mxu0 0
      %346 = vmatpush1.bf16.xpose.msra.mxu0 0
      %347 = vmatprep.subr.bf16.mxu0 0
      %348 = vmatpush1.bf16.xpose.msra.mxu0 0
      %349 = vmatprep.subr.bf16.mxu0 0
      %350 = vmatpush1.bf16.xpose.msra.mxu0 0
      %351 = vmatprep.subr.bf16.mxu0 0
      %352 = vmatpush1.bf16.xpose.msra.mxu0 %v335
      %353 = vmatprep.subr.bf16.mxu0 0
      %354 = vmatpush2.bf16.xpose.msra.mxu0 0
      %355 = vmatprep.subr.bf16.mxu0 0
      %356 = vmatpush2.bf16.xpose.msra.mxu0 0
      %357 = vmatprep.subr.bf16.mxu0 0
      %358 = vmatpush2.bf16.xpose.msra.mxu0 0
      %359 = vmatprep.subr.bf16.mxu0 0
      %360 = vmatpush2.bf16.xpose.msra.mxu0 0
      %361 = vmatprep.subr.bf16.mxu0 0
      %362 = vmatpush2.bf16.xpose.msra.mxu0 0
      %363 = vmatprep.subr.bf16.mxu0 0
      %364 = vmatpush2.bf16.xpose.msra.mxu0 0
      %365 = vmatprep.subr.bf16.mxu0 0
      %366 = vmatpush2.bf16.xpose.msra.mxu0 0
      %367 = vmatprep.subr.bf16.mxu0 0
      %368 = vmatpush2.bf16.xpose.msra.mxu0 0
      %369 = vmatprep.mubr.bf16.mxu0 0
      %370 = vmatmul.mubr.bf16.gmra.mxu0 %v332
      %v371 = vpop.f32.mrf.mxu0
      %v372 = vadd.f32 0.0, %v371
      %v373 = vpop.f32.mrf.mxu0
      %v374 = vpop.f32.mrf.mxu0
      %v375 = vadd.f32 0.0, %v374
      %v376 = vpop.f32.mrf.mxu0
      %377 = vdwg.mxu0
      %v378 = vmul.f32 %v372, 0.35355338
      %v379 = vmul.f32 %v375, 0.35355338
      %vm380 = vcmask 130048
      %v381 = vsel %vm380, %v378, -inf
      %382 = vmax.xlane.f32.xlu0 %v381
      %v383 = vpop.xlane.xlu0 %382
      %v384 = vsel %vm380, %v379, -inf
      %385 = vmax.xlane.f32.xlu0 %v384
      %v386 = vpop.xlane.xlu0 %385
      %v387 = vsub.f32 %v378, %v383
      %v388 = vsub.f32 %v379, %v386
      %v389 = vmul.f32 %v387, 1.442695
      %v390 = vpow.pop %v389
      %v391 = vmul.f32 %v388, 1.442695
      %v392 = vpow.pop %v391
      %v393 = vsel %vm380, %v390, 0.0
      %394 = vadd.xlane.f32.xlu0 %v393
      %v395 = vpop.xlane.xlu0 %394
      %v396 = vsel %vm380, %v392, 0.0
      %397 = vadd.xlane.f32.xlu0 %v396
      %v398 = vpop.xlane.xlu0 %397
      %v399 = vrcp.pop %v395
      %v400 = vrcp.pop %v398
      %v401 = vmul.f32 %v390, %v399
      %v402 = vmul.f32 %v392, %v400
      %v403 = vpack.c.bf16 %v402, %v401
      %404 = vrot.lane.b32.xlu0 %v326, 64
      %v405 = vpop.permute.xlu0 %404
      %v408 = vsel %vm380, %v403, 0
      %410 = vmatprep.subr.bf16.mxu0 0
      %411 = vmatpush1.bf16.msra.mxu0 0
      %412 = vmatprep.subr.bf16.mxu0 0
      %413 = vmatpush1.bf16.msra.mxu0 0
      %414 = vmatprep.subr.bf16.mxu0 0
      %415 = vmatpush1.bf16.msra.mxu0 0
      %416 = vmatprep.subr.bf16.mxu0 0
      %417 = vmatpush1.bf16.msra.mxu0 0
      %418 = vmatprep.subr.bf16.mxu0 0
      %419 = vmatpush1.bf16.msra.mxu0 0
      %420 = vmatprep.subr.bf16.mxu0 0
      %421 = vmatpush1.bf16.msra.mxu0 0
      %422 = vmatprep.subr.bf16.mxu0 0
      %423 = vmatpush1.bf16.msra.mxu0 0
      %424 = vmatprep.subr.bf16.mxu0 0
      %425 = vmatpush1.bf16.msra.mxu0 %v405
      %426 = vmatprep.subr.bf16.mxu0 0
      %427 = vmatpush2.bf16.msra.mxu0 0
      %428 = vmatprep.subr.bf16.mxu0 0
      %429 = vmatpush2.bf16.msra.mxu0 0
      %430 = vmatprep.subr.bf16.mxu0 0
      %431 = vmatpush2.bf16.msra.mxu0 0
      %432 = vmatprep.subr.bf16.mxu0 0
      %433 = vmatpush2.bf16.msra.mxu0 0
      %434 = vmatprep.subr.bf16.mxu0 0
      %435 = vmatpush2.bf16.msra.mxu0 0
      %436 = vmatprep.subr.bf16.mxu0 0
      %437 = vmatpush2.bf16.msra.mxu0 0
      %438 = vmatprep.subr.bf16.mxu0 0
      %439 = vmatpush2.bf16.msra.mxu0 0
      %440 = vmatprep.subr.bf16.mxu0 0
      %441 = vmatpush2.bf16.msra.mxu0 0
      %442 = vmatprep.mubr.bf16.mxu0 0
      %443 = vmatmul.mubr.bf16.gmra.mxu0 %v408
      %v444 = vpop.f32.mrf.mxu0
      %v445 = vadd.f32 0.0, %v444
      %v446 = vpop.f32.mrf.mxu0
      %v447 = vpop.f32.mrf.mxu0
      %v448 = vadd.f32 0.0, %v447
      %v449 = vpop.f32.mrf.mxu0
      %450 = vdwg.mxu0
      %451 = vrot.lane.b32.xlu0 %v326, 120
      %v452 = vpop.permute.xlu0 %451
      %453 = vrot.lane.b32.xlu0 %v326, 88
      %v454 = vpop.permute.xlu0 %453
      %v456 = vsel %vm330, %v452, 0
      %v459 = vsel %vm330, %v454, 0
      %461 = vmatprep.subr.bf16.mxu0 0
      %462 = vmatpush1.bf16.xpose.msra.mxu0 0
      %463 = vmatprep.subr.bf16.mxu0 0
      %464 = vmatpush1.bf16.xpose.msra.mxu0 0
      %465 = vmatprep.subr.bf16.mxu0 0
      %466 = vmatpush1.bf16.xpose.msra.mxu0 0
      %467 = vmatprep.subr.bf16.mxu0 0
      %468 = vmatpush1.bf16.xpose.msra.mxu0 0
      %469 = vmatprep.subr.bf16.mxu0 0
      %470 = vmatpush1.bf16.xpose.msra.mxu0 0
      %471 = vmatprep.subr.bf16.mxu0 0
      %472 = vmatpush1.bf16.xpose.msra.mxu0 0
      %473 = vmatprep.subr.bf16.mxu0 0
      %474 = vmatpush1.bf16.xpose.msra.mxu0 0
      %475 = vmatprep.subr.bf16.mxu0 0
      %476 = vmatpush1.bf16.xpose.msra.mxu0 %v459
      %477 = vmatprep.subr.bf16.mxu0 0
      %478 = vmatpush2.bf16.xpose.msra.mxu0 0
      %479 = vmatprep.subr.bf16.mxu0 0
      %480 = vmatpush2.bf16.xpose.msra.mxu0 0
      %481 = vmatprep.subr.bf16.mxu0 0
      %482 = vmatpush2.bf16.xpose.msra.mxu0 0
      %483 = vmatprep.subr.bf16.mxu0 0
      %484 = vmatpush2.bf16.xpose.msra.mxu0 0
      %485 = vmatprep.subr.bf16.mxu0 0
      %486 = vmatpush2.bf16.xpose.msra.mxu0 0
      %487 = vmatprep.subr.bf16.mxu0 0
      %488 = vmatpush2.bf16.xpose.msra.mxu0 0
      %489 = vmatprep.subr.bf16.mxu0 0
      %490 = vmatpush2.bf16.xpose.msra.mxu0 0
      %491 = vmatprep.subr.bf16.mxu0 0
      %492 = vmatpush2.bf16.xpose.msra.mxu0 0
      %493 = vmatprep.mubr.bf16.mxu0 0
      %494 = vmatmul.mubr.bf16.gmra.mxu0 %v456
      %v495 = vpop.f32.mrf.mxu0
      %v496 = vadd.f32 0.0, %v495
      %v497 = vpop.f32.mrf.mxu0
      %v498 = vpop.f32.mrf.mxu0
      %v499 = vadd.f32 0.0, %v498
      %v500 = vpop.f32.mrf.mxu0
      %501 = vdwg.mxu0
      %v502 = vmul.f32 %v496, 0.35355338
      %v503 = vmul.f32 %v499, 0.35355338
      %v504 = vsel %vm380, %v502, -inf
      %505 = vmax.xlane.f32.xlu0 %v504
      %v506 = vpop.xlane.xlu0 %505
      %v507 = vsel %vm380, %v503, -inf
      %508 = vmax.xlane.f32.xlu0 %v507
      %v509 = vpop.xlane.xlu0 %508
      %v510 = vsub.f32 %v502, %v506
      %v511 = vsub.f32 %v503, %v509
      %v512 = vmul.f32 %v510, 1.442695
      %v513 = vpow.pop %v512
      %v514 = vmul.f32 %v511, 1.442695
      %v515 = vpow.pop %v514
      %v516 = vsel %vm380, %v513, 0.0
      %517 = vadd.xlane.f32.xlu0 %v516
      %v518 = vpop.xlane.xlu0 %517
      %v519 = vsel %vm380, %v515, 0.0
      %520 = vadd.xlane.f32.xlu0 %v519
      %v521 = vpop.xlane.xlu0 %520
      %v522 = vrcp.pop %v518
      %v523 = vrcp.pop %v521
      %v524 = vmul.f32 %v513, %v522
      %v525 = vmul.f32 %v515, %v523
      %v526 = vpack.c.bf16 %v525, %v524
      %527 = vrot.lane.b32.xlu0 %v326, 56
      %v528 = vpop.permute.xlu0 %527
      %v531 = vsel %vm380, %v526, 0
      %533 = vmatprep.subr.bf16.mxu0 0
      %534 = vmatpush1.bf16.msra.mxu0 0
      %535 = vmatprep.subr.bf16.mxu0 0
      %536 = vmatpush1.bf16.msra.mxu0 0
      %537 = vmatprep.subr.bf16.mxu0 0
      %538 = vmatpush1.bf16.msra.mxu0 0
      %539 = vmatprep.subr.bf16.mxu0 0
      %540 = vmatpush1.bf16.msra.mxu0 0
      %541 = vmatprep.subr.bf16.mxu0 0
      %542 = vmatpush1.bf16.msra.mxu0 0
      %543 = vmatprep.subr.bf16.mxu0 0
      %544 = vmatpush1.bf16.msra.mxu0 0
      %545 = vmatprep.subr.bf16.mxu0 0
      %546 = vmatpush1.bf16.msra.mxu0 0
      %547 = vmatprep.subr.bf16.mxu0 0
      %548 = vmatpush1.bf16.msra.mxu0 %v528
      %549 = vmatprep.subr.bf16.mxu0 0
      %550 = vmatpush2.bf16.msra.mxu0 0
      %551 = vmatprep.subr.bf16.mxu0 0
      %552 = vmatpush2.bf16.msra.mxu0 0
      %553 = vmatprep.subr.bf16.mxu0 0
      %554 = vmatpush2.bf16.msra.mxu0 0
      %555 = vmatprep.subr.bf16.mxu0 0
      %556 = vmatpush2.bf16.msra.mxu0 0
      %557 = vmatprep.subr.bf16.mxu0 0
      %558 = vmatpush2.bf16.msra.mxu0 0
      %559 = vmatprep.subr.bf16.mxu0 0
      %560 = vmatpush2.bf16.msra.mxu0 0
      %561 = vmatprep.subr.bf16.mxu0 0
      %562 = vmatpush2.bf16.msra.mxu0 0
      %563 = vmatprep.subr.bf16.mxu0 0
      %564 = vmatpush2.bf16.msra.mxu0 0
      %565 = vmatprep.mubr.bf16.mxu0 0
      %566 = vmatmul.mubr.bf16.gmra.mxu0 %v531
      %v567 = vpop.f32.mrf.mxu0
      %v568 = vadd.f32 0.0, %v567
      %v569 = vpop.f32.mrf.mxu0
      %v570 = vpop.f32.mrf.mxu0
      %v571 = vadd.f32 0.0, %v570
      %v572 = vpop.f32.mrf.mxu0
      %573 = vdwg.mxu0
      %574 = vrot.lane.b32.xlu0 %v326, 112
      %v575 = vpop.permute.xlu0 %574
      %576 = vrot.lane.b32.xlu0 %v326, 80
      %v577 = vpop.permute.xlu0 %576
      %v579 = vsel %vm330, %v575, 0
      %v582 = vsel %vm330, %v577, 0
      %584 = vmatprep.subr.bf16.mxu0 0
      %585 = vmatpush1.bf16.xpose.msra.mxu0 0
      %586 = vmatprep.subr.bf16.mxu0 0
      %587 = vmatpush1.bf16.xpose.msra.mxu0 0
      %588 = vmatprep.subr.bf16.mxu0 0
      %589 = vmatpush1.bf16.xpose.msra.mxu0 0
      %590 = vmatprep.subr.bf16.mxu0 0
      %591 = vmatpush1.bf16.xpose.msra.mxu0 0
      %592 = vmatprep.subr.bf16.mxu0 0
      %593 = vmatpush1.bf16.xpose.msra.mxu0 0
      %594 = vmatprep.subr.bf16.mxu0 0
      %595 = vmatpush1.bf16.xpose.msra.mxu0 0
      %596 = vmatprep.subr.bf16.mxu0 0
      %597 = vmatpush1.bf16.xpose.msra.mxu0 0
      %598 = vmatprep.subr.bf16.mxu0 0
      %599 = vmatpush1.bf16.xpose.msra.mxu0 %v582
      %600 = vmatprep.subr.bf16.mxu0 0
      %601 = vmatpush2.bf16.xpose.msra.mxu0 0
      %602 = vmatprep.subr.bf16.mxu0 0
      %603 = vmatpush2.bf16.xpose.msra.mxu0 0
      %604 = vmatprep.subr.bf16.mxu0 0
      %605 = vmatpush2.bf16.xpose.msra.mxu0 0
      %606 = vmatprep.subr.bf16.mxu0 0
      %607 = vmatpush2.bf16.xpose.msra.mxu0 0
      %608 = vmatprep.subr.bf16.mxu0 0
      %609 = vmatpush2.bf16.xpose.msra.mxu0 0
      %610 = vmatprep.subr.bf16.mxu0 0
      %611 = vmatpush2.bf16.xpose.msra.mxu0 0
      %612 = vmatprep.subr.bf16.mxu0 0
      %613 = vmatpush2.bf16.xpose.msra.mxu0 0
      %614 = vmatprep.subr.bf16.mxu0 0
      %615 = vmatpush2.bf16.xpose.msra.mxu0 0
      %616 = vmatprep.mubr.bf16.mxu0 0
      %617 = vmatmul.mubr.bf16.gmra.mxu0 %v579
      %v618 = vpop.f32.mrf.mxu0
      %v619 = vadd.f32 0.0, %v618
      %v620 = vpop.f32.mrf.mxu0
      %v621 = vpop.f32.mrf.mxu0
      %v622 = vadd.f32 0.0, %v621
      %v623 = vpop.f32.mrf.mxu0
      %624 = vdwg.mxu0
      %v625 = vmul.f32 %v619, 0.35355338
      %v626 = vmul.f32 %v622, 0.35355338
      %v627 = vsel %vm380, %v625, -inf
      %628 = vmax.xlane.f32.xlu0 %v627
      %v629 = vpop.xlane.xlu0 %628
      %v630 = vsel %vm380, %v626, -inf
      %631 = vmax.xlane.f32.xlu0 %v630
      %v632 = vpop.xlane.xlu0 %631
      %v633 = vsub.f32 %v625, %v629
      %v634 = vsub.f32 %v626, %v632
      %v635 = vmul.f32 %v633, 1.442695
      %v636 = vpow.pop %v635
      %v637 = vmul.f32 %v634, 1.442695
      %v638 = vpow.pop %v637
      %v639 = vsel %vm380, %v636, 0.0
      %640 = vadd.xlane.f32.xlu0 %v639
      %v641 = vpop.xlane.xlu0 %640
      %v642 = vsel %vm380, %v638, 0.0
      %643 = vadd.xlane.f32.xlu0 %v642
      %v644 = vpop.xlane.xlu0 %643
      %v645 = vrcp.pop %v641
      %v646 = vrcp.pop %v644
      %v647 = vmul.f32 %v636, %v645
      %v648 = vmul.f32 %v638, %v646
      %v649 = vpack.c.bf16 %v648, %v647
      %650 = vrot.lane.b32.xlu0 %v326, 48
      %v651 = vpop.permute.xlu0 %650
      %v654 = vsel %vm380, %v649, 0
      %656 = vmatprep.subr.bf16.mxu0 0
      %657 = vmatpush1.bf16.msra.mxu0 0
      %658 = vmatprep.subr.bf16.mxu0 0
      %659 = vmatpush1.bf16.msra.mxu0 0
      %660 = vmatprep.subr.bf16.mxu0 0
      %661 = vmatpush1.bf16.msra.mxu0 0
      %662 = vmatprep.subr.bf16.mxu0 0
      %663 = vmatpush1.bf16.msra.mxu0 0
      %664 = vmatprep.subr.bf16.mxu0 0
      %665 = vmatpush1.bf16.msra.mxu0 0
      %666 = vmatprep.subr.bf16.mxu0 0
      %667 = vmatpush1.bf16.msra.mxu0 0
      %668 = vmatprep.subr.bf16.mxu0 0
      %669 = vmatpush1.bf16.msra.mxu0 0
      %670 = vmatprep.subr.bf16.mxu0 0
      %671 = vmatpush1.bf16.msra.mxu0 %v651
      %672 = vmatprep.subr.bf16.mxu0 0
      %673 = vmatpush2.bf16.msra.mxu0 0
      %674 = vmatprep.subr.bf16.mxu0 0
      %675 = vmatpush2.bf16.msra.mxu0 0
      %676 = vmatprep.subr.bf16.mxu0 0
      %677 = vmatpush2.bf16.msra.mxu0 0
      %678 = vmatprep.subr.bf16.mxu0 0
      %679 = vmatpush2.bf16.msra.mxu0 0
      %680 = vmatprep.subr.bf16.mxu0 0
      %681 = vmatpush2.bf16.msra.mxu0 0
      %682 = vmatprep.subr.bf16.mxu0 0
      %683 = vmatpush2.bf16.msra.mxu0 0
      %684 = vmatprep.subr.bf16.mxu0 0
      %685 = vmatpush2.bf16.msra.mxu0 0
      %686 = vmatprep.subr.bf16.mxu0 0
      %687 = vmatpush2.bf16.msra.mxu0 0
      %688 = vmatprep.mubr.bf16.mxu0 0
      %689 = vmatmul.mubr.bf16.gmra.mxu0 %v654
      %v690 = vpop.f32.mrf.mxu0
      %v691 = vadd.f32 0.0, %v690
      %v692 = vpop.f32.mrf.mxu0
      %v693 = vpop.f32.mrf.mxu0
      %v694 = vadd.f32 0.0, %v693
      %v695 = vpop.f32.mrf.mxu0
      %696 = vdwg.mxu0
      %697 = vrot.lane.b32.xlu0 %v326, 104
      %v698 = vpop.permute.xlu0 %697
      %699 = vrot.lane.b32.xlu0 %v326, 72
      %v700 = vpop.permute.xlu0 %699
      %v702 = vsel %vm330, %v698, 0
      %v705 = vsel %vm330, %v700, 0
      %707 = vmatprep.subr.bf16.mxu0 0
      %708 = vmatpush1.bf16.xpose.msra.mxu0 0
      %709 = vmatprep.subr.bf16.mxu0 0
      %710 = vmatpush1.bf16.xpose.msra.mxu0 0
      %711 = vmatprep.subr.bf16.mxu0 0
      %712 = vmatpush1.bf16.xpose.msra.mxu0 0
      %713 = vmatprep.subr.bf16.mxu0 0
      %714 = vmatpush1.bf16.xpose.msra.mxu0 0
      %715 = vmatprep.subr.bf16.mxu0 0
      %716 = vmatpush1.bf16.xpose.msra.mxu0 0
      %717 = vmatprep.subr.bf16.mxu0 0
      %718 = vmatpush1.bf16.xpose.msra.mxu0 0
      %719 = vmatprep.subr.bf16.mxu0 0
      %720 = vmatpush1.bf16.xpose.msra.mxu0 0
      %721 = vmatprep.subr.bf16.mxu0 0
      %722 = vmatpush1.bf16.xpose.msra.mxu0 %v705
      %723 = vmatprep.subr.bf16.mxu0 0
      %724 = vmatpush2.bf16.xpose.msra.mxu0 0
      %725 = vmatprep.subr.bf16.mxu0 0
      %726 = vmatpush2.bf16.xpose.msra.mxu0 0
      %727 = vmatprep.subr.bf16.mxu0 0
      %728 = vmatpush2.bf16.xpose.msra.mxu0 0
      %729 = vmatprep.subr.bf16.mxu0 0
      %730 = vmatpush2.bf16.xpose.msra.mxu0 0
      %731 = vmatprep.subr.bf16.mxu0 0
      %732 = vmatpush2.bf16.xpose.msra.mxu0 0
      %733 = vmatprep.subr.bf16.mxu0 0
      %734 = vmatpush2.bf16.xpose.msra.mxu0 0
      %735 = vmatprep.subr.bf16.mxu0 0
      %736 = vmatpush2.bf16.xpose.msra.mxu0 0
      %737 = vmatprep.subr.bf16.mxu0 0
      %738 = vmatpush2.bf16.xpose.msra.mxu0 0
      %739 = vmatprep.mubr.bf16.mxu0 0
      %740 = vmatmul.mubr.bf16.gmra.mxu0 %v702
      %v741 = vpop.f32.mrf.mxu0
      %v742 = vadd.f32 0.0, %v741
      %v743 = vpop.f32.mrf.mxu0
      %v744 = vpop.f32.mrf.mxu0
      %v745 = vadd.f32 0.0, %v744
      %v746 = vpop.f32.mrf.mxu0
      %747 = vdwg.mxu0
      %v748 = vmul.f32 %v742, 0.35355338
      %v749 = vmul.f32 %v745, 0.35355338
      %v750 = vsel %vm380, %v748, -inf
      %751 = vmax.xlane.f32.xlu0 %v750
      %v752 = vpop.xlane.xlu0 %751
      %v753 = vsel %vm380, %v749, -inf
      %754 = vmax.xlane.f32.xlu0 %v753
      %v755 = vpop.xlane.xlu0 %754
      %v756 = vsub.f32 %v748, %v752
      %v757 = vsub.f32 %v749, %v755
      %v758 = vmul.f32 %v756, 1.442695
      %v759 = vpow.pop %v758
      %v760 = vmul.f32 %v757, 1.442695
      %v761 = vpow.pop %v760
      %v762 = vsel %vm380, %v759, 0.0
      %763 = vadd.xlane.f32.xlu0 %v762
      %v764 = vpop.xlane.xlu0 %763
      %v765 = vsel %vm380, %v761, 0.0
      %766 = vadd.xlane.f32.xlu0 %v765
      %v767 = vpop.xlane.xlu0 %766
      %v768 = vrcp.pop %v764
      %v769 = vrcp.pop %v767
      %v770 = vmul.f32 %v759, %v768
      %v771 = vmul.f32 %v761, %v769
      %v772 = vpack.c.bf16 %v771, %v770
      %773 = vrot.lane.b32.xlu0 %v326, 40
      %v774 = vpop.permute.xlu0 %773
      %v777 = vsel %vm380, %v772, 0
      %779 = vmatprep.subr.bf16.mxu0 0
      %780 = vmatpush1.bf16.msra.mxu0 0
      %781 = vmatprep.subr.bf16.mxu0 0
      %782 = vmatpush1.bf16.msra.mxu0 0
      %783 = vmatprep.subr.bf16.mxu0 0
      %784 = vmatpush1.bf16.msra.mxu0 0
      %785 = vmatprep.subr.bf16.mxu0 0
      %786 = vmatpush1.bf16.msra.mxu0 0
      %787 = vmatprep.subr.bf16.mxu0 0
      %788 = vmatpush1.bf16.msra.mxu0 0
      %789 = vmatprep.subr.bf16.mxu0 0
      %790 = vmatpush1.bf16.msra.mxu0 0
      %791 = vmatprep.subr.bf16.mxu0 0
      %792 = vmatpush1.bf16.msra.mxu0 0
      %793 = vmatprep.subr.bf16.mxu0 0
      %794 = vmatpush1.bf16.msra.mxu0 %v774
      %795 = vmatprep.subr.bf16.mxu0 0
      %796 = vmatpush2.bf16.msra.mxu0 0
      %797 = vmatprep.subr.bf16.mxu0 0
      %798 = vmatpush2.bf16.msra.mxu0 0
      %799 = vmatprep.subr.bf16.mxu0 0
      %800 = vmatpush2.bf16.msra.mxu0 0
      %801 = vmatprep.subr.bf16.mxu0 0
      %802 = vmatpush2.bf16.msra.mxu0 0
      %803 = vmatprep.subr.bf16.mxu0 0
      %804 = vmatpush2.bf16.msra.mxu0 0
      %805 = vmatprep.subr.bf16.mxu0 0
      %806 = vmatpush2.bf16.msra.mxu0 0
      %807 = vmatprep.subr.bf16.mxu0 0
      %808 = vmatpush2.bf16.msra.mxu0 0
      %809 = vmatprep.subr.bf16.mxu0 0
      %810 = vmatpush2.bf16.msra.mxu0 0
      %811 = vmatprep.mubr.bf16.mxu0 0
      %812 = vmatmul.mubr.bf16.gmra.mxu0 %v777
      %v813 = vpop.f32.mrf.mxu0
      %v814 = vadd.f32 0.0, %v813
      %v815 = vpop.f32.mrf.mxu0
      %v816 = vpop.f32.mrf.mxu0
      %v817 = vadd.f32 0.0, %v816
      %v818 = vpop.f32.mrf.mxu0
      %819 = vdwg.mxu0
      %822 = vrot.lane.b32.xlu0 %v568, 8
      %v823 = vpop.permute.xlu0 %822
      %824 = vrot.lane.b32.xlu0 %v571, 8
      %v825 = vpop.permute.xlu0 %824
      %830 = vrot.lane.b32.xlu0 %v691, 16
      %v831 = vpop.permute.xlu0 %830
      %832 = vrot.lane.b32.xlu0 %v694, 16
      %v833 = vpop.permute.xlu0 %832
      %838 = vrot.lane.b32.xlu0 %v814, 24
      %v839 = vpop.permute.xlu0 %838
      %840 = vrot.lane.b32.xlu0 %v817, 24
      %v841 = vpop.permute.xlu0 %840
      %v844 = vsel %vm330, %v445, %v823
      %v845 = vsel %vm330, %v448, %v825
      %v846 = vsel %vm380, %v844, %v831
      %v847 = vsel %vm380, %v845, %v833
      %vm848 = vcmask 195584
      %v849 = vsel %vm848, %v846, %v839
      %v850 = vsel %vm848, %v847, %v841
      %v851 = vpack.c.bf16 %v850, %v849
      %v852 = vld [vmem:[%s3] sm:$0xf]
      %v853 = vld [vmem:[%s3 + $0x4] sm:$0xf]
      %v854 = vld [vmem:[%s3 + $0x8] sm:$0xf]
      %v855 = vld [vmem:[%s3 + $0xc] sm:$0xf]
      %v856 = vld [vmem:[%s4] sm:$0x1]
      %v858 = vlaneseq
      %v859 = vshrl.u32 %v858, 7
      %v860 = vsub.s32 0, %v859
      %v861 = vrot.slane %v856, %v860
      %v867 = vunpack.c.l.b16 %v852
      %v868 = vunpack.c.l.b16 %v853
      %v869 = vunpack.c.l.b16 %v854
      %v870 = vunpack.c.l.b16 %v855
      %v871 = vpack.c.b16 %v868, %v867
      %v872 = vpack.c.b16 %v870, %v869
      %v876 = vsel %vm230, %v851, 0
      %878 = vmatprep.subr.bf16.mxu0 0
      %879 = vmatpush1.bf16.msra.mxu0 0
      %880 = vmatprep.subr.bf16.mxu0 0
      %881 = vmatpush1.bf16.msra.mxu0 0
      %882 = vmatprep.subr.bf16.mxu0 0
      %883 = vmatpush1.bf16.msra.mxu0 0
      %884 = vmatprep.subr.bf16.mxu0 0
      %885 = vmatpush1.bf16.msra.mxu0 0
      %886 = vmatprep.subr.bf16.mxu0 0
      %887 = vmatpush1.bf16.msra.mxu0 0
      %888 = vmatprep.subr.bf16.mxu0 0
      %889 = vmatpush1.bf16.msra.mxu0 0
      %890 = vmatprep.subr.bf16.mxu0 0
      %891 = vmatpush1.bf16.msra.mxu0 %v872
      %892 = vmatprep.subr.bf16.mxu0 0
      %893 = vmatpush1.bf16.msra.mxu0 %v871
      %894 = vmatprep.subr.bf16.mxu0 0
      %895 = vmatpush2.bf16.msra.mxu0 0
      %896 = vmatprep.subr.bf16.mxu0 0
      %897 = vmatpush2.bf16.msra.mxu0 0
      %898 = vmatprep.subr.bf16.mxu0 0
      %899 = vmatpush2.bf16.msra.mxu0 0
      %900 = vmatprep.subr.bf16.mxu0 0
      %901 = vmatpush2.bf16.msra.mxu0 0
      %902 = vmatprep.subr.bf16.mxu0 0
      %903 = vmatpush2.bf16.msra.mxu0 0
      %904 = vmatprep.subr.bf16.mxu0 0
      %905 = vmatpush2.bf16.msra.mxu0 0
      %906 = vmatprep.subr.bf16.mxu0 0
      %907 = vmatpush2.bf16.msra.mxu0 0
      %908 = vmatprep.subr.bf16.mxu0 0
      %909 = vmatpush2.bf16.msra.mxu0 0
      %910 = vmatprep.mubr.bf16.mxu0 0
      %911 = vmatmul.mubr.bf16.gmra.mxu0 %v876
      %v912 = vpop.f32.mrf.mxu0
      %v913 = vadd.f32 %v861, %v912
      %v914 = vpop.f32.mrf.mxu0
      %v915 = vpop.f32.mrf.mxu0
      %v916 = vadd.f32 %v861, %v915
      %v917 = vpop.f32.mrf.mxu0
      %918 = vdwg.mxu0
      %v919 = vadd.f32 %v913, %v228
      %v920 = vadd.f32 %v916, %v229
      %v921 = vpack.c.bf16 %v920, %v919
      %v923 = vunpack.c.l.b16 %v921
      %v924 = vunpack.c.h.b16 %v921
      %v925 = vpack.c.b16 %v923, %v923
      %v926 = vpack.c.b16 %v924, %v924
      %vm929 = vcmask 257024
      %930 = vst.msk [vmem:[%s224] sm:$0xf] %vm929, %v925
      %931 = vst.msk [vmem:[%s224 + $0x4] sm:$0xf] %vm929, %v926
      %p932 = scmp.lt.s32.totalorder %s16, 1
      %s933 = scalar_select %p932, %s16, 1
      %s934 = smul.addr %s933, 2
      %s935 = smul.addr %s934, 4
      %s936 = scalar_lea.vmem %s5, %s935
      // Predicated region
      $region41: #{combined_model_forward.14} parent=39 // pred_check
        %p937 = pneg %p144
      $region42: #{combined_model_forward.14} parent=39 // pred_check_branch
        %939 = sbr.rel (%p937) target = $region44
      $region43: #{combined_model_forward.14} parent=39 // pred_region
        _
      $region44: #{combined_model_forward.14} parent=39 // pred_fallthru
        _
    $region40: #{combined_model_forward.14} parent=5 // pred_fallthru
      _
    %p940 = scmp.le.s32.totalorder 2, %s11
    // Predicated region
    $region45: #{combined_model_forward.14} parent=5 // pred_check
      %p941 = pneg %p940
    $region46: #{combined_model_forward.14} parent=5 // pred_check_branch
      %943 = sbr.rel (%p941) target = $region48
    $region47: #{combined_model_forward.14} parent=5 // pred_region
      %s944 = ssub.s32 %s11, 2
      // Predicated region
      $region49: #{combined_model_forward.14} parent=47 // pred_check
        %p945 = pneg %p150
      $region50: #{combined_model_forward.14} parent=47 // pred_check_branch
        %947 = sbr.rel (%p945) target = $region52
      $region51: #{combined_model_forward.14} parent=47 // pred_region
        %p948 = scmp.lt.s32.totalorder %s17, 1
        %s949 = scalar_select %p948, %s17, 1
        %s950 = smul.addr %s949, 2
        %s951 = smul.addr %s950, 4
        %s952 = scalar_lea.vmem %s5, %s951
      $region52: #{combined_model_forward.14} parent=47 // pred_fallthru
        _
    $region48: #{combined_model_forward.14} parent=5 // pred_fallthru
      _
  $region6: #{combined_model_forward.14} parent=0 // loop_footer
    %s15 = sadd.s32 1, %s11
  $region7: #{combined_model_forward.14} parent=0 // loop_footer_branch
    %10 = sbr.rel target = $region3
  $region8: #{combined_model_forward.14} parent=0 // loop_exit
    _

</llo_original>
